<compile_context>
chip_gen: v6e
topology: v6e:2x2x1
jax: 0.10.0
libtpu: 0.0.40
codegen_flags: <defaults>
</compile_context>

<pallas_src>
import math
from functools import partial

import jax
import jax.numpy as jnp
from jax.experimental import pallas as pl
from jax.experimental.pallas import tpu as pltpu


_NEG_INF = -1e30                      # finite "minus infinity": exp() -> exactly 0


def _vmem_limit_bytes():
    """Generation-aware scoped-VMEM budget."""
    cap = 64 * 1024 * 1024
    try:
        info = pltpu.get_tpu_info()
        cap = int(getattr(info, "vmem_capacity_bytes", cap))
    except Exception:
        pass
    if cap >= 128 * 1024 * 1024:      # v5e / v6e: 128 MiB physical VMEM
        return 100 * 1024 * 1024
    return 48 * 1024 * 1024           # v7x: 64 MiB physical VMEM


# ---------------------------------------------------------------- helpers
def _layernorm(x, scale, shift, eps=1e-5):
    mean = jnp.mean(x, axis=-1, keepdims=True)
    var = jnp.mean(jnp.square(x - mean), axis=-1, keepdims=True)  # unbiased=False
    return scale * ((x - mean) * jax.lax.rsqrt(var + eps)) + shift


def _gelu(x):
    c = jnp.sqrt(jnp.asarray(2.0 / jnp.pi, dtype=x.dtype))
    return 0.5 * x * (1.0 + jnp.tanh(c * (x + 0.044715 * x ** 3)))


# ---------------------------------------------------------------- kernels
def gpt_blocks_kernel(x_ref, wqkv_ref, wo_ref, bo_ref,
                      g1_ref, s1_ref, g2_ref, s2_ref,
                      w1_ref, b1_ref, w2_ref, b2_ref,
                      out_ref, mask_ref, *, num_heads):
    """One transformer layer per grid step; grid = (n_layers,).

    The full (B, T, E) residual stream lives in the resident output block; all
    matmuls run on the flattened (B*T, E) activations so each layer's weights
    are read from HBM exactly once.
    """
    layer = pl.program_id(0)
    B, T, E = out_ref.shape
    H = num_heads
    d = E // H
    scale = 1.0 / math.sqrt(d)
    mm = wqkv_ref.dtype                              # bf16 MXU inputs

    # Initialize residual stream (from aliased embedding input) and the
    # additive causal mask exactly once.
    @pl.when(layer == 0)
    def _():
        out_ref[...] = x_ref[...]
        row = jax.lax.broadcasted_iota(jnp.int32, (T, T), 0)
        col = jax.lax.broadcasted_iota(jnp.int32, (T, T), 1)
        mask_ref[...] = jnp.where(col > row, _NEG_INF, 0.0).astype(jnp.float32)

    x = out_ref[...].reshape(B * T, E)               # (B*T, E) f32 residual

    # ---- attention sub-block (pre-norm + residual) ----
    h = _layernorm(x, g1_ref[0], s1_ref[0])
    qkv = jnp.dot(h.astype(mm), wqkv_ref[0],
                  preferred_element_type=jnp.float32)            # (B*T, 3E)
    q = qkv[:, :E] * scale        # fold 1/sqrt(head_dim) into q
    k = qkv[:, E:2 * E]
    v = qkv[:, 2 * E:]

    def to_heads(t):
        # (B*T, E) -> (B*H, T, d): single relayout, then free leading-dim merge.
        return t.reshape(B, T, H, d).transpose(0, 2, 1, 3).reshape(B * H, T, d)

    qh = to_heads(q).astype(mm)
    kh = to_heads(k).astype(mm)
    vh = to_heads(v).astype(mm)

    # TODO(synk): for GPT-2-scale T, tile KV with an online softmax (flash
    # style) so scores are (B*H, T, tK) rather than (B*H, T, T).
    scores = jnp.einsum('nqd,nkd->nqk', qh, kh,
                        preferred_element_type=jnp.float32)      # (B*H, T, T) f32
    scores = scores + mask_ref[...][None, :, :]                  # additive causal mask
    scores = scores - jnp.max(scores, axis=-1, keepdims=True)
    p = jnp.exp(scores)
    p = p * pl.reciprocal(jnp.sum(p, axis=-1, keepdims=True), approx=True)
    ctx = jnp.einsum('nqk,nkd->nqd', p.astype(mm), vh,
                     preferred_element_type=jnp.float32)         # (B*H, T, d)
    ctx = ctx.reshape(B, H, T, d).transpose(0, 2, 1, 3).reshape(B * T, E)

    attn = jnp.dot(ctx.astype(mm), wo_ref[0],
                   preferred_element_type=jnp.float32) + bo_ref[0]
    # TODO(synk): dropout (drop_rate=0.0 here -> identity / eval mode).
    x = x + attn

    # ---- feed-forward sub-block (pre-norm + residual) ----
    # TODO(synk): at GPT-2 scale, tile the MLP over the 4E hidden dim (extra
    # grid axis with accumulation) so w1/w2 are never fully VMEM-resident.
    h2 = _layernorm(x, g2_ref[0], s2_ref[0])
    hid = _gelu(jnp.dot(h2.astype(mm), w1_ref[0],
                        preferred_element_type=jnp.float32) + b1_ref[0])
    ff = jnp.dot(hid.astype(mm), w2_ref[0],
                 preferred_element_type=jnp.float32) + b2_ref[0]
    out_ref[...] = (x + ff).reshape(B, T, E).astype(out_ref.dtype)


def final_head_kernel(x_ref, gf_ref, sf_ref, wout_ref, logits_ref, h_ref):
    """Final LayerNorm + vocab-tiled LM head; grid = (vocab_tiles,).

    The normalized, bf16-cast activations are computed once (tile 0) into a
    VMEM scratch and reused for every vocab tile; each (E, tV) head tile is
    fetched once and reused across the whole batch.
    """
    j = pl.program_id(0)
    B, T, E = x_ref.shape
    tV = logits_ref.shape[-1]

    @pl.when(j == 0)
    def _():
        xf = x_ref[...].reshape(B * T, E)
        h_ref[...] = _layernorm(xf, gf_ref[...], sf_ref[...]).astype(h_ref.dtype)

    logits = jnp.dot(h_ref[...], wout_ref[...],
                     preferred_element_type=jnp.float32)         # (B*T, tV)
    logits_ref[...] = logits.reshape(B, T, tV).astype(logits_ref.dtype)


# ---------------------------------------------------------------- wrappers
def _pick_vocab_tile(V):
    for t in (2048, 1024, 512, 256, 128):
        if V % t == 0:
            return t
    return V                    # fall back to full (still lane-padded) vocab


def run_transformer_blocks(x, stacked, cfg):
    B, T, E = x.shape
    L = cfg['n_layers']
    names = ('wqkv', 'wo', 'bo', 'g1', 's1', 'g2', 's2', 'w1', 'b1', 'w2', 'b2')
    weights = tuple(stacked[n] for n in names)

    def w_spec(arr):
        blk = (1,) + arr.shape[1:]
        zeros = (0,) * (arr.ndim - 1)
        return pl.BlockSpec(blk, lambda l, z=zeros: (l,) + z)

    in_specs = [pl.BlockSpec((B, T, E), lambda l: (0, 0, 0))] + \
               [w_spec(w) for w in weights]
    return pl.pallas_call(
        partial(gpt_blocks_kernel, num_heads=cfg['n_heads']),
        out_shape=jax.ShapeDtypeStruct((B, T, E), jnp.float32),
        grid=(L,),
        in_specs=in_specs,
        # Same output block across the layer axis -> VMEM-resident residual.
        out_specs=pl.BlockSpec((B, T, E), lambda l: (0, 0, 0)),
        scratch_shapes=[pltpu.VMEM((T, T), jnp.float32)],        # additive causal mask
        input_output_aliases={0: 0},                             # x aliased to residual out
        compiler_params=pltpu.CompilerParams(
            dimension_semantics=("arbitrary",),
            vmem_limit_bytes=_vmem_limit_bytes()),
    )(x, *weights)


def run_final_head(x, head, cfg):
    B, T, E = x.shape
    V = cfg['vocab_size']
    tV = _pick_vocab_tile(V)
    nV = V // tV
    return pl.pallas_call(
        final_head_kernel,
        out_shape=jax.ShapeDtypeStruct((B, T, V), jnp.float32),
        grid=(nV,),
        in_specs=[
            pl.BlockSpec((B, T, E), lambda j: (0, 0, 0)),
            pl.BlockSpec((1, E), lambda j: (0, 0)),
            pl.BlockSpec((1, E), lambda j: (0, 0)),
            pl.BlockSpec((E, tV), lambda j: (0, j)),
        ],
        out_specs=pl.BlockSpec((B, T, tV), lambda j: (0, 0, j)),
        scratch_shapes=[pltpu.VMEM((B * T, E), head['out_head'].dtype)],
        compiler_params=pltpu.CompilerParams(
            dimension_semantics=("arbitrary",),
            vmem_limit_bytes=_vmem_limit_bytes()),
    )(x, head['gf'], head['sf'], head['out_head'])


def gpt_forward(params, in_idx, cfg):
    B, T = in_idx.shape
    tok = jnp.take(params['tok_emb'], in_idx, axis=0)      # (B, T, E) - glue gather
    pos = params['pos_emb'][:T]                             # (T, E)
    x = (tok + pos[None, :, :]).astype(jnp.float32)
    # drop_emb with drop_rate=0.0 -> identity
    x = run_transformer_blocks(x, params['stacked'], cfg)
    return run_final_head(x, params['head'], cfg)


# ---------------------------------------------------------------- params
def init_params(key, cfg):
    """Torch-equivalent f32 parameters (Linear weights stored transposed)."""
    E, V, C = cfg['emb_dim'], cfg['vocab_size'], cfg['context_length']
    H4 = 4 * E
    std = 0.02
    keys = jax.random.split(key, 3 + cfg['n_layers'])
    params = {
        'tok_emb': std * jax.random.normal(keys[0], (V, E), jnp.float32),
        'pos_emb': std * jax.random.normal(keys[1], (C, E), jnp.float32),
        'out_head': std * jax.random.normal(keys[2], (E, V), jnp.float32),
        'gf': jnp.ones((1, E), jnp.float32),
        'sf': jnp.zeros((1, E), jnp.float32),
        'blocks': [],
    }
    for l in range(cfg['n_layers']):
        bk = jax.random.split(keys[3 + l], 6)
        params['blocks'].append({
            'wq': std * jax.random.normal(bk[0], (E, E), jnp.float32),
            'wk': std * jax.random.normal(bk[1], (E, E), jnp.float32),
            'wv': std * jax.random.normal(bk[2], (E, E), jnp.float32),
            'wo': std * jax.random.normal(bk[3], (E, E), jnp.float32),
            'bo': jnp.zeros((1, E), jnp.float32),
            'g1': jnp.ones((1, E), jnp.float32),
            's1': jnp.zeros((1, E), jnp.float32),
            'g2': jnp.ones((1, E), jnp.float32),
            's2': jnp.zeros((1, E), jnp.float32),
            'w1': std * jax.random.normal(bk[4], (E, H4), jnp.float32),
            'b1': jnp.zeros((1, H4), jnp.float32),
            'w2': std * jax.random.normal(bk[5], (H4, E), jnp.float32),
            'b2': jnp.zeros((1, E), jnp.float32),
        })
    return params


def prepare_params(raw, matmul_dtype=jnp.bfloat16):
    """Stack per-layer weights along a leading layer axis, fuse QKV, cast
    matmul weights to bf16 (biases / norm params stay f32)."""
    blocks = raw['blocks']
    stacked = {
        'wqkv': jnp.stack([jnp.concatenate([b['wq'], b['wk'], b['wv']], axis=-1)
                           for b in blocks]).astype(matmul_dtype),
        'wo': jnp.stack([b['wo'] for b in blocks]).astype(matmul_dtype),
        'bo': jnp.stack([b['bo'] for b in blocks]),
        'g1': jnp.stack([b['g1'] for b in blocks]),
        's1': jnp.stack([b['s1'] for b in blocks]),
        'g2': jnp.stack([b['g2'] for b in blocks]),
        's2': jnp.stack([b['s2'] for b in blocks]),
        'w1': jnp.stack([b['w1'] for b in blocks]).astype(matmul_dtype),
        'b1': jnp.stack([b['b1'] for b in blocks]),
        'w2': jnp.stack([b['w2'] for b in blocks]).astype(matmul_dtype),
        'b2': jnp.stack([b['b2'] for b in blocks]),
    }
    head = {'gf': raw['gf'], 'sf': raw['sf'],
            'out_head': raw['out_head'].astype(matmul_dtype)}
    return {'tok_emb': raw['tok_emb'], 'pos_emb': raw['pos_emb'],
            'stacked': stacked, 'head': head}


# ---------------------------------------------------------------- main
if __name__ == "__main__":
    # NOTE: this is a toy config for the correctness harness; real benchmarks
    # should use E / head_dim multiples of 128 and B*T >= 256 to fill the MXU.
    cfg = dict(vocab_size=256, context_length=16, emb_dim=32,
               n_heads=4, n_layers=2, drop_rate=0.0, qkv_bias=False)
    key = jax.random.PRNGKey(0)
    pkey, ikey = jax.random.split(key)
    params = prepare_params(init_params(pkey, cfg))

    batch, seq = 2, 8
    in_idx = jax.random.randint(ikey, (batch, seq), 0, cfg['vocab_size'],
                                dtype=jnp.int32)

    fwd = jax.jit(lambda p, idx: gpt_forward(p, idx, cfg))
    logits = fwd(params, in_idx)
    logits = jax.block_until_ready(logits)
    assert logits.shape == (batch, seq, cfg['vocab_size'])
    assert bool(jnp.all(jnp.isfinite(logits)))
    print("KERNEL_OK")
</pallas_src>

<mosaic_0001>
module attributes {stable_mosaic.version = 11 : i64} {
  func.func @final_head_kernel(%arg0: i32, %arg1: memref<2x8x32xf32, #tpu.memory_space<vmem>>, %arg2: memref<1x32xf32, #tpu.memory_space<vmem>>, %arg3: memref<1x32xf32, #tpu.memory_space<vmem>>, %arg4: memref<32x256xbf16, #tpu.memory_space<vmem>>, %arg5: memref<2x8x256xf32, #tpu.memory_space<vmem>>, %arg6: memref<16x32xbf16, #tpu.memory_space<vmem>>) attributes {dimension_semantics = [#tpu.dimension_semantics<arbitrary>], iteration_bounds = array<i64: 1>, scalar_prefetch = 0 : i64, scratch_operands = 1 : i64, tpu.core_type = #tpu.core_type<tc>, window_params = [{pipeline_mode = #tpu.pipeline_mode<synchronous>, transform_indices = @transform_0, window_bounds = array<i64: 2, 8, 32>}, {pipeline_mode = #tpu.pipeline_mode<synchronous>, transform_indices = @transform_1, window_bounds = array<i64: 1, 32>}, {pipeline_mode = #tpu.pipeline_mode<synchronous>, transform_indices = @transform_2, window_bounds = array<i64: 1, 32>}, {transform_indices = @transform_3, window_bounds = array<i64: 32, 256>}, {transform_indices = @transform_4, window_bounds = array<i64: 2, 8, 256>}]} {
    %c0_i32 = arith.constant 0 : i32
    %0 = arith.cmpi eq, %arg0, %c0_i32 : i32
    %1 = arith.extui %0 : i1 to i32
    %c0_i32_0 = arith.constant 0 : i32
    %2 = arith.cmpi ne, %1, %c0_i32_0 : i32
    scf.if %2 {
      %c0_7 = arith.constant 0 : index
      %c0_8 = arith.constant 0 : index
      %c0_9 = arith.constant 0 : index
      %8 = vector.load %arg1[%c0_7, %c0_8, %c0_9] : memref<2x8x32xf32, #tpu.memory_space<vmem>>, vector<2x8x32xf32>
      %9 = vector.shape_cast %8 : vector<2x8x32xf32> to vector<16x32xf32>
      %c0_10 = arith.constant 0 : index
      %c0_11 = arith.constant 0 : index
      %10 = vector.load %arg2[%c0_10, %c0_11] : memref<1x32xf32, #tpu.memory_space<vmem>>, vector<1x32xf32>
      %c0_12 = arith.constant 0 : index
      %c0_13 = arith.constant 0 : index
      %11 = vector.load %arg3[%c0_12, %c0_13] : memref<1x32xf32, #tpu.memory_space<vmem>>, vector<1x32xf32>
      %cst_14 = arith.constant dense<0.000000e+00> : vector<16xf32>
      %12 = vector.multi_reduction <add>, %9, %cst_14 [1] : vector<16x32xf32> to vector<16xf32>
      %13 = vector.shape_cast %12 : vector<16xf32> to vector<16x1xf32>
      %cst_15 = arith.constant 3.200000e+01 : f32
      %14 = vector.broadcast %cst_15 : f32 to vector<16x1xf32>
      %15 = arith.divf %13, %14 : vector<16x1xf32>
      %16 = vector.broadcast %15 : vector<16x1xf32> to vector<16x32xf32>
      %17 = arith.subf %9, %16 : vector<16x32xf32>
      %18 = arith.mulf %17, %17 : vector<16x32xf32>
      %cst_16 = arith.constant dense<0.000000e+00> : vector<16xf32>
      %19 = vector.multi_reduction <add>, %18, %cst_16 [1] : vector<16x32xf32> to vector<16xf32>
      %20 = vector.shape_cast %19 : vector<16xf32> to vector<16x1xf32>
      %cst_17 = arith.constant 3.200000e+01 : f32
      %21 = vector.broadcast %cst_17 : f32 to vector<16x1xf32>
      %22 = arith.divf %20, %21 : vector<16x1xf32>
      %23 = vector.broadcast %15 : vector<16x1xf32> to vector<16x32xf32>
      %24 = arith.subf %9, %23 : vector<16x32xf32>
      %cst_18 = arith.constant 9.99999974E-6 : f32
      %25 = vector.broadcast %cst_18 : f32 to vector<16x1xf32>
      %26 = arith.addf %22, %25 : vector<16x1xf32>
      %27 = math.rsqrt %26 : vector<16x1xf32>
      %28 = vector.broadcast %27 : vector<16x1xf32> to vector<16x32xf32>
      %29 = arith.mulf %24, %28 : vector<16x32xf32>
      %30 = vector.broadcast %10 : vector<1x32xf32> to vector<16x32xf32>
      %31 = arith.mulf %30, %29 : vector<16x32xf32>
      %32 = vector.broadcast %11 : vector<1x32xf32> to vector<16x32xf32>
      %33 = arith.addf %31, %32 : vector<16x32xf32>
      %34 = arith.truncf %33 : vector<16x32xf32> to vector<16x32xbf16>
      %c0_19 = arith.constant 0 : index
      %c0_20 = arith.constant 0 : index
      %35 = vector.load %arg6[%c0_19, %c0_20] : memref<16x32xbf16, #tpu.memory_space<vmem>>, vector<16x32xbf16>
      tpu.vector_store %arg6[%c0_19, %c0_20], %34 {strides = array<i32>} : memref<16x32xbf16, #tpu.memory_space<vmem>>, vector<16x32xbf16>,
    } else {
    }
    %c0 = arith.constant 0 : index
    %c0_1 = arith.constant 0 : index
    %3 = vector.load %arg6[%c0, %c0_1] : memref<16x32xbf16, #tpu.memory_space<vmem>>, vector<16x32xbf16>
    %c0_2 = arith.constant 0 : index
    %c0_3 = arith.constant 0 : index
    %4 = vector.load %arg4[%c0_2, %c0_3] : memref<32x256xbf16, #tpu.memory_space<vmem>>, vector<32x256xbf16>
    %cst = arith.constant dense<0.000000e+00> : vector<16x256xf32>
    %5 = tpu.matmul %3, %4, %cst {dimension_numbers = #tpu.dot_dimension_numbers<[1], [0], [0], [1], [0, 0, 1, 1], [], []>} : vector<16x32xbf16>, vector<32x256xbf16>, vector<16x256xf32> -> vector<16x256xf32>
    %6 = vector.shape_cast %5 : vector<16x256xf32> to vector<2x8x256xf32>
    %c0_4 = arith.constant 0 : index
    %c0_5 = arith.constant 0 : index
    %c0_6 = arith.constant 0 : index
    %7 = vector.load %arg5[%c0_4, %c0_5, %c0_6] : memref<2x8x256xf32, #tpu.memory_space<vmem>>, vector<2x8x256xf32>
    tpu.vector_store %arg5[%c0_4, %c0_5, %c0_6], %6 {strides = array<i32>} : memref<2x8x256xf32, #tpu.memory_space<vmem>>, vector<2x8x256xf32>,
    return
  }
  func.func @transform_0(%arg0: i32) -> (i32, i32, i32) {
    %c0_i32 = arith.constant 0 : i32
    %c0_i32_0 = arith.constant 0 : i32
    %c0_i32_1 = arith.constant 0 : i32
    %c0_i32_2 = arith.constant 0 : i32
    return %c0_i32, %c0_i32_0, %c0_i32_1 : i32, i32, i32
  }
  func.func @transform_1(%arg0: i32) -> (i32, i32) {
    %c0_i32 = arith.constant 0 : i32
    %c0_i32_0 = arith.constant 0 : i32
    %c0_i32_1 = arith.constant 0 : i32
    return %c0_i32, %c0_i32_0 : i32, i32
  }
  func.func @transform_2(%arg0: i32) -> (i32, i32) {
    %c0_i32 = arith.constant 0 : i32
    %c0_i32_0 = arith.constant 0 : i32
    %c0_i32_1 = arith.constant 0 : i32
    return %c0_i32, %c0_i32_0 : i32, i32
  }
  func.func @transform_3(%arg0: i32) -> (i32, i32) {
    %c0_i32 = arith.constant 0 : i32
    %c0_i32_0 = arith.constant 0 : i32
    return %c0_i32, %arg0 : i32, i32
  }
  func.func @transform_4(%arg0: i32) -> (i32, i32, i32) {
    %c0_i32 = arith.constant 0 : i32
    %c0_i32_0 = arith.constant 0 : i32
    %c0_i32_1 = arith.constant 0 : i32
    return %c0_i32, %c0_i32_0, %arg0 : i32, i32, i32
  }
}

module attributes {stable_mosaic.version = 11 : i64} {
  func.func @gpt_blocks_kernel(%arg0: i32, %arg1: memref<2x8x32xf32, #tpu.memory_space<vmem>>, %arg2: memref<1x32x96xbf16, #tpu.memory_space<vmem>>, %arg3: memref<1x32x32xbf16, #tpu.memory_space<vmem>>, %arg4: memref<1x1x32xf32, #tpu.memory_space<vmem>>, %arg5: memref<1x1x32xf32, #tpu.memory_space<vmem>>, %arg6: memref<1x1x32xf32, #tpu.memory_space<vmem>>, %arg7: memref<1x1x32xf32, #tpu.memory_space<vmem>>, %arg8: memref<1x1x32xf32, #tpu.memory_space<vmem>>, %arg9: memref<1x32x128xbf16, #tpu.memory_space<vmem>>, %arg10: memref<1x1x128xf32, #tpu.memory_space<vmem>>, %arg11: memref<1x128x32xbf16, #tpu.memory_space<vmem>>, %arg12: memref<1x1x32xf32, #tpu.memory_space<vmem>>, %arg13: memref<2x8x32xf32, #tpu.memory_space<vmem>>, %arg14: memref<8x8xf32, #tpu.memory_space<vmem>>) attributes {dimension_semantics = [#tpu.dimension_semantics<arbitrary>], iteration_bounds = array<i64: 2>, scalar_prefetch = 0 : i64, scratch_operands = 1 : i64, tpu.core_type = #tpu.core_type<tc>, window_params = [{pipeline_mode = #tpu.pipeline_mode<synchronous>, transform_indices = @transform_0, window_bounds = array<i64: 2, 8, 32>}, {transform_indices = @transform_1, window_bounds = array<i64: 1, 32, 96>}, {transform_indices = @transform_2, window_bounds = array<i64: 1, 32, 32>}, {transform_indices = @transform_3, window_bounds = array<i64: 1, 1, 32>}, {transform_indices = @transform_4, window_bounds = array<i64: 1, 1, 32>}, {transform_indices = @transform_5, window_bounds = array<i64: 1, 1, 32>}, {transform_indices = @transform_6, window_bounds = array<i64: 1, 1, 32>}, {transform_indices = @transform_7, window_bounds = array<i64: 1, 1, 32>}, {transform_indices = @transform_8, window_bounds = array<i64: 1, 32, 128>}, {transform_indices = @transform_9, window_bounds = array<i64: 1, 1, 128>}, {transform_indices = @transform_10, window_bounds = array<i64: 1, 128, 32>}, {transform_indices = @transform_11, window_bounds = array<i64: 1, 1, 32>}, {pipeline_mode = #tpu.pipeline_mode<synchronous>, transform_indices = @transform_12, window_bounds = array<i64: 2, 8, 32>}]} {
    %c0_i32 = arith.constant 0 : i32
    %0 = arith.cmpi eq, %arg0, %c0_i32 : i32
    %1 = arith.extui %0 : i1 to i32
    %c0_i32_0 = arith.constant 0 : i32
    %2 = arith.cmpi ne, %1, %c0_i32_0 : i32
    scf.if %2 {
      %c0_63 = arith.constant 0 : index
      %c0_64 = arith.constant 0 : index
      %c0_65 = arith.constant 0 : index
      %140 = vector.load %arg1[%c0_63, %c0_64, %c0_65] : memref<2x8x32xf32, #tpu.memory_space<vmem>>, vector<2x8x32xf32>
      %c0_66 = arith.constant 0 : index
      %c0_67 = arith.constant 0 : index
      %c0_68 = arith.constant 0 : index
      %141 = vector.load %arg13[%c0_66, %c0_67, %c0_68] : memref<2x8x32xf32, #tpu.memory_space<vmem>>, vector<2x8x32xf32>
      tpu.vector_store %arg13[%c0_66, %c0_67, %c0_68], %140 {strides = array<i32>} : memref<2x8x32xf32, #tpu.memory_space<vmem>>, vector<2x8x32xf32>,
      %142 = tpu.iota {dimensions = array<i32: 0>} : vector<8x8xi32>
      %143 = tpu.iota {dimensions = array<i32: 1>} : vector<8x8xi32>
      %144 = arith.cmpi sgt, %143, %142 : vector<8x8xi32>
      %cst_69 = arith.constant -1.000000e+30 : f32
      %cst_70 = arith.constant 0.000000e+00 : f32
      %145 = vector.broadcast %cst_69 : f32 to vector<8x8xf32>
      %146 = vector.broadcast %cst_70 : f32 to vector<8x8xf32>
      %147 = arith.select %144, %145, %146 : vector<8x8xi1>, vector<8x8xf32>
      %c0_71 = arith.constant 0 : index
      %c0_72 = arith.constant 0 : index
      %148 = vector.load %arg14[%c0_71, %c0_72] : memref<8x8xf32, #tpu.memory_space<vmem>>, vector<8x8xf32>
      tpu.vector_store %arg14[%c0_71, %c0_72], %147 {strides = array<i32>} : memref<8x8xf32, #tpu.memory_space<vmem>>, vector<8x8xf32>,
    } else {
    }
    %c0 = arith.constant 0 : index
    %c0_1 = arith.constant 0 : index
    %c0_2 = arith.constant 0 : index
    %3 = vector.load %arg13[%c0, %c0_1, %c0_2] : memref<2x8x32xf32, #tpu.memory_space<vmem>>, vector<2x8x32xf32>
    %4 = vector.shape_cast %3 : vector<2x8x32xf32> to vector<16x32xf32>
    %c0_3 = arith.constant 0 : index
    %c0_4 = arith.constant 0 : index
    %c0_5 = arith.constant 0 : index
    %5 = vector.load %arg5[%c0_3, %c0_4, %c0_5] : memref<1x1x32xf32, #tpu.memory_space<vmem>>, vector<1x1x32xf32>
    %6 = vector.shape_cast %5 : vector<1x1x32xf32> to vector<1x32xf32>
    %c0_6 = arith.constant 0 : index
    %c0_7 = arith.constant 0 : index
    %c0_8 = arith.constant 0 : index
    %7 = vector.load %arg6[%c0_6, %c0_7, %c0_8] : memref<1x1x32xf32, #tpu.memory_space<vmem>>, vector<1x1x32xf32>
    %8 = vector.shape_cast %7 : vector<1x1x32xf32> to vector<1x32xf32>
    %cst = arith.constant dense<0.000000e+00> : vector<16xf32>
    %9 = vector.multi_reduction <add>, %4, %cst [1] : vector<16x32xf32> to vector<16xf32>
    %10 = vector.shape_cast %9 : vector<16xf32> to vector<16x1xf32>
    %cst_9 = arith.constant 3.200000e+01 : f32
    %11 = vector.broadcast %cst_9 : f32 to vector<16x1xf32>
    %12 = arith.divf %10, %11 : vector<16x1xf32>
    %13 = vector.broadcast %12 : vector<16x1xf32> to vector<16x32xf32>
    %14 = arith.subf %4, %13 : vector<16x32xf32>
    %15 = arith.mulf %14, %14 : vector<16x32xf32>
    %cst_10 = arith.constant dense<0.000000e+00> : vector<16xf32>
    %16 = vector.multi_reduction <add>, %15, %cst_10 [1] : vector<16x32xf32> to vector<16xf32>
    %17 = vector.shape_cast %16 : vector<16xf32> to vector<16x1xf32>
    %cst_11 = arith.constant 3.200000e+01 : f32
    %18 = vector.broadcast %cst_11 : f32 to vector<16x1xf32>
    %19 = arith.divf %17, %18 : vector<16x1xf32>
    %20 = vector.broadcast %12 : vector<16x1xf32> to vector<16x32xf32>
    %21 = arith.subf %4, %20 : vector<16x32xf32>
    %cst_12 = arith.constant 9.99999974E-6 : f32
    %22 = vector.broadcast %cst_12 : f32 to vector<16x1xf32>
    %23 = arith.addf %19, %22 : vector<16x1xf32>
    %24 = math.rsqrt %23 : vector<16x1xf32>
    %25 = vector.broadcast %24 : vector<16x1xf32> to vector<16x32xf32>
    %26 = arith.mulf %21, %25 : vector<16x32xf32>
    %27 = vector.broadcast %6 : vector<1x32xf32> to vector<16x32xf32>
    %28 = arith.mulf %27, %26 : vector<16x32xf32>
    %29 = vector.broadcast %8 : vector<1x32xf32> to vector<16x32xf32>
    %30 = arith.addf %28, %29 : vector<16x32xf32>
    %31 = arith.truncf %30 : vector<16x32xf32> to vector<16x32xbf16>
    %c0_13 = arith.constant 0 : index
    %c0_14 = arith.constant 0 : index
    %c0_15 = arith.constant 0 : index
    %32 = vector.load %arg2[%c0_13, %c0_14, %c0_15] : memref<1x32x96xbf16, #tpu.memory_space<vmem>>, vector<1x32x96xbf16>
    %33 = vector.shape_cast %32 : vector<1x32x96xbf16> to vector<32x96xbf16>
    %cst_16 = arith.constant dense<0.000000e+00> : vector<16x96xf32>
    %34 = tpu.matmul %31, %33, %cst_16 {dimension_numbers = #tpu.dot_dimension_numbers<[1], [0], [0], [1], [0, 0, 1, 1], [], []>} : vector<16x32xbf16>, vector<32x96xbf16>, vector<16x96xf32> -> vector<16x96xf32>
    %35 = vector.extract_strided_slice %34 {offsets = [0, 0], sizes = [16, 32], strides = [1, 1]} : vector<16x96xf32> to vector<16x32xf32>
    %cst_17 = arith.constant 0.353553385 : f32
    %36 = vector.broadcast %cst_17 : f32 to vector<16x32xf32>
    %37 = arith.mulf %35, %36 : vector<16x32xf32>
    %38 = vector.extract_strided_slice %34 {offsets = [0, 32], sizes = [16, 32], strides = [1, 1]} : vector<16x96xf32> to vector<16x32xf32>
    %39 = vector.extract_strided_slice %34 {offsets = [0, 64], sizes = [16, 32], strides = [1, 1]} : vector<16x96xf32> to vector<16x32xf32>
    %40 = vector.shape_cast %37 : vector<16x32xf32> to vector<2x8x4x8xf32>
    %41 = tpu.transpose %40, [0, 2, 1, 3] : vector<2x8x4x8xf32> -> vector<2x4x8x8xf32>
    %42 = vector.shape_cast %41 : vector<2x4x8x8xf32> to vector<8x8x8xf32>
    %43 = arith.truncf %42 : vector<8x8x8xf32> to vector<8x8x8xbf16>
    %44 = vector.shape_cast %38 : vector<16x32xf32> to vector<2x8x4x8xf32>
    %45 = tpu.transpose %44, [0, 2, 1, 3] : vector<2x8x4x8xf32> -> vector<2x4x8x8xf32>
    %46 = vector.shape_cast %45 : vector<2x4x8x8xf32> to vector<8x8x8xf32>
    %47 = arith.truncf %46 : vector<8x8x8xf32> to vector<8x8x8xbf16>
    %48 = vector.shape_cast %39 : vector<16x32xf32> to vector<2x8x4x8xf32>
    %49 = tpu.transpose %48, [0, 2, 1, 3] : vector<2x8x4x8xf32> -> vector<2x4x8x8xf32>
    %50 = vector.shape_cast %49 : vector<2x4x8x8xf32> to vector<8x8x8xf32>
    %51 = arith.truncf %50 : vector<8x8x8xf32> to vector<8x8x8xbf16>
    "tpu.trace_start"() <{level = 10 : i32, message = "nqd,nkd->nqk"}> : () -> ()
    %cst_18 = arith.constant dense<0.000000e+00> : vector<8x8x8xf32>
    %52 = tpu.matmul %43, %47, %cst_18 {dimension_numbers = #tpu.dot_dimension_numbers<[2], [2], [1], [1], [0, 0, 0, 1, 1, 1], [0], [0]>} : vector<8x8x8xbf16>, vector<8x8x8xbf16>, vector<8x8x8xf32> -> vector<8x8x8xf32>
    "tpu.trace_stop"() : () -> ()
    %c0_19 = arith.constant 0 : index
    %c0_20 = arith.constant 0 : index
    %53 = vector.load %arg14[%c0_19, %c0_20] : memref<8x8xf32, #tpu.memory_space<vmem>>, vector<8x8xf32>
    %54 = vector.shape_cast %53 : vector<8x8xf32> to vector<1x8x8xf32>
    %55 = vector.broadcast %54 : vector<1x8x8xf32> to vector<8x8x8xf32>
    %56 = arith.addf %52, %55 : vector<8x8x8xf32>
    %cst_21 = arith.constant dense<0xFF800000> : vector<8x8xf32>
    %57 = vector.multi_reduction <maximumf>, %56, %cst_21 [2] : vector<8x8x8xf32> to vector<8x8xf32>
    %58 = vector.shape_cast %57 : vector<8x8xf32> to vector<8x8x1xf32>
    %59 = vector.broadcast %58 : vector<8x8x1xf32> to vector<8x8x8xf32>
    %60 = arith.subf %56, %59 : vector<8x8x8xf32>
    %61 = math.exp %60 : vector<8x8x8xf32>
    %cst_22 = arith.constant dense<0.000000e+00> : vector<8x8xf32>
    %62 = vector.multi_reduction <add>, %61, %cst_22 [2] : vector<8x8x8xf32> to vector<8x8xf32>
    %63 = vector.shape_cast %62 : vector<8x8xf32> to vector<8x8x1xf32>
    %64 = tpu.reciprocal %63 {approx = true} : vector<8x8x1xf32> -> vector<8x8x1xf32>
    %65 = vector.broadcast %64 : vector<8x8x1xf32> to vector<8x8x8xf32>
    %66 = arith.mulf %61, %65 : vector<8x8x8xf32>
    %67 = arith.truncf %66 : vector<8x8x8xf32> to vector<8x8x8xbf16>
    "tpu.trace_start"() <{level = 10 : i32, message = "nqk,nkd->nqd"}> : () -> ()
    %cst_23 = arith.constant dense<0.000000e+00> : vector<8x8x8xf32>
    %68 = tpu.matmul %67, %51, %cst_23 {dimension_numbers = #tpu.dot_dimension_numbers<[2], [1], [1], [2], [0, 0, 0, 1, 1, 2], [0], [0]>} : vector<8x8x8xbf16>, vector<8x8x8xbf16>, vector<8x8x8xf32> -> vector<8x8x8xf32>
    "tpu.trace_stop"() : () -> ()
    %69 = vector.shape_cast %68 : vector<8x8x8xf32> to vector<2x4x8x8xf32>
    %70 = tpu.transpose %69, [0, 2, 1, 3] : vector<2x4x8x8xf32> -> vector<2x8x4x8xf32>
    %71 = vector.shape_cast %70 : vector<2x8x4x8xf32> to vector<16x32xf32>
    %72 = arith.truncf %71 : vector<16x32xf32> to vector<16x32xbf16>
    %c0_24 = arith.constant 0 : index
    %c0_25 = arith.constant 0 : index
    %c0_26 = arith.constant 0 : index
    %73 = vector.load %arg3[%c0_24, %c0_25, %c0_26] : memref<1x32x32xbf16, #tpu.memory_space<vmem>>, vector<1x32x32xbf16>
    %74 = vector.shape_cast %73 : vector<1x32x32xbf16> to vector<32x32xbf16>
    %cst_27 = arith.constant dense<0.000000e+00> : vector<16x32xf32>
    %75 = tpu.matmul %72, %74, %cst_27 {dimension_numbers = #tpu.dot_dimension_numbers<[1], [0], [0], [1], [0, 0, 1, 1], [], []>} : vector<16x32xbf16>, vector<32x32xbf16>, vector<16x32xf32> -> vector<16x32xf32>
    %c0_28 = arith.constant 0 : index
    %c0_29 = arith.constant 0 : index
    %c0_30 = arith.constant 0 : index
    %76 = vector.load %arg4[%c0_28, %c0_29, %c0_30] : memref<1x1x32xf32, #tpu.memory_space<vmem>>, vector<1x1x32xf32>
    %77 = vector.shape_cast %76 : vector<1x1x32xf32> to vector<1x32xf32>
    %78 = vector.broadcast %77 : vector<1x32xf32> to vector<16x32xf32>
    %79 = arith.addf %75, %78 : vector<16x32xf32>
    %80 = arith.addf %4, %79 : vector<16x32xf32>
    %c0_31 = arith.constant 0 : index
    %c0_32 = arith.constant 0 : index
    %c0_33 = arith.constant 0 : index
    %81 = vector.load %arg7[%c0_31, %c0_32, %c0_33] : memref<1x1x32xf32, #tpu.memory_space<vmem>>, vector<1x1x32xf32>
    %82 = vector.shape_cast %81 : vector<1x1x32xf32> to vector<1x32xf32>
    %c0_34 = arith.constant 0 : index
    %c0_35 = arith.constant 0 : index
    %c0_36 = arith.constant 0 : index
    %83 = vector.load %arg8[%c0_34, %c0_35, %c0_36] : memref<1x1x32xf32, #tpu.memory_space<vmem>>, vector<1x1x32xf32>
    %84 = vector.shape_cast %83 : vector<1x1x32xf32> to vector<1x32xf32>
    %cst_37 = arith.constant dense<0.000000e+00> : vector<16xf32>
    %85 = vector.multi_reduction <add>, %80, %cst_37 [1] : vector<16x32xf32> to vector<16xf32>
    %86 = vector.shape_cast %85 : vector<16xf32> to vector<16x1xf32>
    %cst_38 = arith.constant 3.200000e+01 : f32
    %87 = vector.broadcast %cst_38 : f32 to vector<16x1xf32>
    %88 = arith.divf %86, %87 : vector<16x1xf32>
    %89 = vector.broadcast %88 : vector<16x1xf32> to vector<16x32xf32>
    %90 = arith.subf %80, %89 : vector<16x32xf32>
    %91 = arith.mulf %90, %90 : vector<16x32xf32>
    %cst_39 = arith.constant dense<0.000000e+00> : vector<16xf32>
    %92 = vector.multi_reduction <add>, %91, %cst_39 [1] : vector<16x32xf32> to vector<16xf32>
    %93 = vector.shape_cast %92 : vector<16xf32> to vector<16x1xf32>
    %cst_40 = arith.constant 3.200000e+01 : f32
    %94 = vector.broadcast %cst_40 : f32 to vector<16x1xf32>
    %95 = arith.divf %93, %94 : vector<16x1xf32>
    %96 = vector.broadcast %88 : vector<16x1xf32> to vector<16x32xf32>
    %97 = arith.subf %80, %96 : vector<16x32xf32>
    %cst_41 = arith.constant 9.99999974E-6 : f32
    %98 = vector.broadcast %cst_41 : f32 to vector<16x1xf32>
    %99 = arith.addf %95, %98 : vector<16x1xf32>
    %100 = math.rsqrt %99 : vector<16x1xf32>
    %101 = vector.broadcast %100 : vector<16x1xf32> to vector<16x32xf32>
    %102 = arith.mulf %97, %101 : vector<16x32xf32>
    %103 = vector.broadcast %82 : vector<1x32xf32> to vector<16x32xf32>
    %104 = arith.mulf %103, %102 : vector<16x32xf32>
    %105 = vector.broadcast %84 : vector<1x32xf32> to vector<16x32xf32>
    %106 = arith.addf %104, %105 : vector<16x32xf32>
    %107 = arith.truncf %106 : vector<16x32xf32> to vector<16x32xbf16>
    %c0_42 = arith.constant 0 : index
    %c0_43 = arith.constant 0 : index
    %c0_44 = arith.constant 0 : index
    %108 = vector.load %arg9[%c0_42, %c0_43, %c0_44] : memref<1x32x128xbf16, #tpu.memory_space<vmem>>, vector<1x32x128xbf16>
    %109 = vector.shape_cast %108 : vector<1x32x128xbf16> to vector<32x128xbf16>
    %cst_45 = arith.constant dense<0.000000e+00> : vector<16x128xf32>
    %110 = tpu.matmul %107, %109, %cst_45 {dimension_numbers = #tpu.dot_dimension_numbers<[1], [0], [0], [1], [0, 0, 1, 1], [], []>} : vector<16x32xbf16>, vector<32x128xbf16>, vector<16x128xf32> -> vector<16x128xf32>
    %c0_46 = arith.constant 0 : index
    %c0_47 = arith.constant 0 : index
    %c0_48 = arith.constant 0 : index
    %111 = vector.load %arg10[%c0_46, %c0_47, %c0_48] : memref<1x1x128xf32, #tpu.memory_space<vmem>>, vector<1x1x128xf32>
    %112 = vector.shape_cast %111 : vector<1x1x128xf32> to vector<1x128xf32>
    %113 = vector.broadcast %112 : vector<1x128xf32> to vector<16x128xf32>
    %114 = arith.addf %110, %113 : vector<16x128xf32>
    %cst_49 = arith.constant 0.636619746 : f32
    %115 = math.sqrt %cst_49 : f32
    %cst_50 = arith.constant 5.000000e-01 : f32
    %116 = vector.broadcast %cst_50 : f32 to vector<16x128xf32>
    %117 = arith.mulf %116, %114 : vector<16x128xf32>
    %118 = arith.mulf %114, %114 : vector<16x128xf32>
    %119 = arith.mulf %114, %118 : vector<16x128xf32>
    %cst_51 = arith.constant 4.471500e-02 : f32
    %120 = vector.broadcast %cst_51 : f32 to vector<16x128xf32>
    %121 = arith.mulf %120, %119 : vector<16x128xf32>
    %122 = arith.addf %114, %121 : vector<16x128xf32>
    %123 = vector.broadcast %115 : f32 to vector<16x128xf32>
    %124 = arith.mulf %123, %122 : vector<16x128xf32>
    %125 = math.tanh %124 : vector<16x128xf32>
    %cst_52 = arith.constant 1.000000e+00 : f32
    %126 = vector.broadcast %cst_52 : f32 to vector<16x128xf32>
    %127 = arith.addf %126, %125 : vector<16x128xf32>
    %128 = arith.mulf %117, %127 : vector<16x128xf32>
    %129 = arith.truncf %128 : vector<16x128xf32> to vector<16x128xbf16>
    %c0_53 = arith.constant 0 : index
    %c0_54 = arith.constant 0 : index
    %c0_55 = arith.constant 0 : index
    %130 = vector.load %arg11[%c0_53, %c0_54, %c0_55] : memref<1x128x32xbf16, #tpu.memory_space<vmem>>, vector<1x128x32xbf16>
    %131 = vector.shape_cast %130 : vector<1x128x32xbf16> to vector<128x32xbf16>
    %cst_56 = arith.constant dense<0.000000e+00> : vector<16x32xf32>
    %132 = tpu.matmul %129, %131, %cst_56 {dimension_numbers = #tpu.dot_dimension_numbers<[1], [0], [0], [1], [0, 0, 1, 1], [], []>} : vector<16x128xbf16>, vector<128x32xbf16>, vector<16x32xf32> -> vector<16x32xf32>
    %c0_57 = arith.constant 0 : index
    %c0_58 = arith.constant 0 : index
    %c0_59 = arith.constant 0 : index
    %133 = vector.load %arg12[%c0_57, %c0_58, %c0_59] : memref<1x1x32xf32, #tpu.memory_space<vmem>>, vector<1x1x32xf32>
    %134 = vector.shape_cast %133 : vector<1x1x32xf32> to vector<1x32xf32>
    %135 = vector.broadcast %134 : vector<1x32xf32> to vector<16x32xf32>
    %136 = arith.addf %132, %135 : vector<16x32xf32>
    %137 = arith.addf %80, %136 : vector<16x32xf32>
    %138 = vector.shape_cast %137 : vector<16x32xf32> to vector<2x8x32xf32>
    %c0_60 = arith.constant 0 : index
    %c0_61 = arith.constant 0 : index
    %c0_62 = arith.constant 0 : index
    %139 = vector.load %arg13[%c0_60, %c0_61, %c0_62] : memref<2x8x32xf32, #tpu.memory_space<vmem>>, vector<2x8x32xf32>
    tpu.vector_store %arg13[%c0_60, %c0_61, %c0_62], %138 {strides = array<i32>} : memref<2x8x32xf32, #tpu.memory_space<vmem>>, vector<2x8x32xf32>,
    return
  }
  func.func @transform_0(%arg0: i32) -> (i32, i32, i32) {
    %c0_i32 = arith.constant 0 : i32
    %c0_i32_0 = arith.constant 0 : i32
    %c0_i32_1 = arith.constant 0 : i32
    %c0_i32_2 = arith.constant 0 : i32
    return %c0_i32, %c0_i32_0, %c0_i32_1 : i32, i32, i32
  }
  func.func @transform_1(%arg0: i32) -> (i32, i32, i32) {
    %c0_i32 = arith.constant 0 : i32
    %c0_i32_0 = arith.constant 0 : i32
    %c0_i32_1 = arith.constant 0 : i32
    return %arg0, %c0_i32, %c0_i32_0 : i32, i32, i32
  }
  func.func @transform_2(%arg0: i32) -> (i32, i32, i32) {
    %c0_i32 = arith.constant 0 : i32
    %c0_i32_0 = arith.constant 0 : i32
    %c0_i32_1 = arith.constant 0 : i32
    return %arg0, %c0_i32, %c0_i32_0 : i32, i32, i32
  }
  func.func @transform_3(%arg0: i32) -> (i32, i32, i32) {
    %c0_i32 = arith.constant 0 : i32
    %c0_i32_0 = arith.constant 0 : i32
    %c0_i32_1 = arith.constant 0 : i32
    return %arg0, %c0_i32, %c0_i32_0 : i32, i32, i32
  }
  func.func @transform_4(%arg0: i32) -> (i32, i32, i32) {
    %c0_i32 = arith.constant 0 : i32
    %c0_i32_0 = arith.constant 0 : i32
    %c0_i32_1 = arith.constant 0 : i32
    return %arg0, %c0_i32, %c0_i32_0 : i32, i32, i32
  }
  func.func @transform_5(%arg0: i32) -> (i32, i32, i32) {
    %c0_i32 = arith.constant 0 : i32
    %c0_i32_0 = arith.constant 0 : i32
    %c0_i32_1 = arith.constant 0 : i32
    return %arg0, %c0_i32, %c0_i32_0 : i32, i32, i32
  }
  func.func @transform_6(%arg0: i32) -> (i32, i32, i32) {
    %c0_i32 = arith.constant 0 : i32
    %c0_i32_0 = arith.constant 0 : i32
    %c0_i32_1 = arith.constant 0 : i32
    return %arg0, %c0_i32, %c0_i32_0 : i32, i32, i32
  }
  func.func @transform_7(%arg0: i32) -> (i32, i32, i32) {
    %c0_i32 = arith.constant 0 : i32
    %c0_i32_0 = arith.constant 0 : i32
    %c0_i32_1 = arith.constant 0 : i32
    return %arg0, %c0_i32, %c0_i32_0 : i32, i32, i32
  }
  func.func @transform_8(%arg0: i32) -> (i32, i32, i32) {
    %c0_i32 = arith.constant 0 : i32
    %c0_i32_0 = arith.constant 0 : i32
    %c0_i32_1 = arith.constant 0 : i32
    return %arg0, %c0_i32, %c0_i32_0 : i32, i32, i32
  }
  func.func @transform_9(%arg0: i32) -> (i32, i32, i32) {
    %c0_i32 = arith.constant 0 : i32
    %c0_i32_0 = arith.constant 0 : i32
    %c0_i32_1 = arith.constant 0 : i32
    return %arg0, %c0_i32, %c0_i32_0 : i32, i32, i32
  }
  func.func @transform_10(%arg0: i32) -> (i32, i32, i32) {
    %c0_i32 = arith.constant 0 : i32
    %c0_i32_0 = arith.constant 0 : i32
    %c0_i32_1 = arith.constant 0 : i32
    return %arg0, %c0_i32, %c0_i32_0 : i32, i32, i32
  }
  func.func @transform_11(%arg0: i32) -> (i32, i32, i32) {
    %c0_i32 = arith.constant 0 : i32
    %c0_i32_0 = arith.constant 0 : i32
    %c0_i32_1 = arith.constant 0 : i32
    return %arg0, %c0_i32, %c0_i32_0 : i32, i32, i32
  }
  func.func @transform_12(%arg0: i32) -> (i32, i32, i32) {
    %c0_i32 = arith.constant 0 : i32
    %c0_i32_0 = arith.constant 0 : i32
    %c0_i32_1 = arith.constant 0 : i32
    %c0_i32_2 = arith.constant 0 : i32
    return %c0_i32, %c0_i32_0, %c0_i32_1 : i32, i32, i32
  }
}

</mosaic_0001>

<llo_original>
// kernel: _lambda_.3
$region0: #{_lambda_.3}
  #allocation0 [shape = 'u32[]', space=smem, size = 0x4, offset = 0x4, fixed_abs, tag = 'smem constant byte address 0x4 - core index']
  #allocation1 [shape = 'u32[144,128]{1,0:T(1,128)}', space=vmem, size = 0x12000, scoped, tag = 'internal scratch']
  #allocation2 [shape = 'bf16[16,32]{1,0:T(8,128)(2,1)}', space=vmem, size = 0x1000, scoped, tag = 'scratch operand']
  %s0 = inlined_call_operand.vmem [shape: f32[2,8,32], index: 0, kind: input, shape index: {}]
  %s1 = inlined_call_operand.vmem [shape: f32[1,32], index: 1, kind: input, shape index: {}]
  %s2 = inlined_call_operand.vmem [shape: f32[1,32], index: 2, kind: input, shape index: {}]
  %s3 = inlined_call_operand.vmem [shape: bf16[32,256], index: 3, kind: input, shape index: {}]
  %s4 = inlined_call_operand.hbm [shape: f32[2,8,256], index: 4, kind: output, shape index: {}]
  %s5 = sld [smem:[#allocation0]]
  $region30: #{_lambda_.3} parent=0
    _
  %s7 = ssub.s32 1, %s5
  %s8 = scalar_select 0, %s7, %s5
  $region1: #{_lambda_.3} parent=0
    #allocation3 [shape = 'u8[16384]{0}', space=vmem, size = 0x4000, scoped, tag = 'output window, operand 0, single buffered']
    #allocation4 [shape = 's32[1]{0}', space=sflag, size = 0x4, scoped, tag = 'scoped memory for _lambda_.3']
    %9 = vsyncpa [#allocation4], 0
    // Predicated region
    $region2: #{_lambda_.3} parent=1 // pred_check
      _
    $region3: #{_lambda_.3} parent=1 // pred_check_branch
      %11 = sbr.rel (0) target = $region5
    $region4: #{_lambda_.3} parent=1 // pred_region
      _
    $region5: #{_lambda_.3} parent=1 // pred_fallthru
      _
    // Predicated region
    $region6: #{_lambda_.3} parent=1 // pred_check
      _
    $region7: #{_lambda_.3} parent=1 // pred_check_branch
      %13 = sbr.rel (0) target = $region9
    $region8: #{_lambda_.3} parent=1 // pred_region
      _
    $region9: #{_lambda_.3} parent=1 // pred_fallthru
      _
    // Predicated region
    $region10: #{_lambda_.3} parent=1 // pred_check
      _
    $region11: #{_lambda_.3} parent=1 // pred_check_branch
      %15 = sbr.rel (0) target = $region13
    $region12: #{_lambda_.3} parent=1 // pred_region
      _
    $region13: #{_lambda_.3} parent=1 // pred_fallthru
      _
    // Predicated region
    $region14: #{_lambda_.3} parent=1 // pred_check
      _
    $region15: #{_lambda_.3} parent=1 // pred_check_branch
      %17 = sbr.rel (0) target = $region17
    $region16: #{_lambda_.3} parent=1 // pred_region
      _
    $region17: #{_lambda_.3} parent=1 // pred_fallthru
      _
    %p19 = scmp.eq.s32.totalorder 0, 0
    // Predicated region
    $region18: #{_lambda_.3} parent=1 // pred_check
      %p20 = pneg %p19
    $region19: #{_lambda_.3} parent=1 // pred_check_branch
      %22 = sbr.rel (%p20) target = $region21
    $region20: #{_lambda_.3} parent=1 // pred_region
      %v23 = vld [vmem:[%s0] sm:$0xff]
      %v24 = vld [vmem:[%s0 + $0x8] sm:$0xff]
      %v25 = vld [vmem:[%s1] sm:$0x1]
      %v26 = vld [vmem:[%s2] sm:$0x1]
      %vm27 = vcmask 261120
      %v28 = vsel %vm27, %v23, 0.0
      %29 = vadd.xlane.f32.xlu0 %v28
      %v30 = vpop.xlane.xlu0 %29
      %v31 = vsel %vm27, %v24, 0.0
      %32 = vadd.xlane.f32.xlu0 %v31
      %v33 = vpop.xlane.xlu0 %32
      %v34 = vrcp.pop 32.0
      %v35 = vmul.f32 %v30, %v34
      %v36 = vmul.f32 %v33, %v34
      %v37 = vsub.f32 %v23, %v35
      %v38 = vsub.f32 %v24, %v36
      %v39 = vmul.f32 %v37, %v37
      %v40 = vmul.f32 %v38, %v38
      %v41 = vsel %vm27, %v39, 0.0
      %42 = vadd.xlane.f32.xlu0 %v41
      %v43 = vpop.xlane.xlu0 %42
      %v44 = vsel %vm27, %v40, 0.0
      %45 = vadd.xlane.f32.xlu0 %v44
      %v46 = vpop.xlane.xlu0 %45
      %v47 = vmul.f32 %v43, %v34
      %v48 = vmul.f32 %v46, %v34
      %v49 = vadd.f32 %v47, 1e-05
      %v50 = vadd.f32 %v48, 1e-05
      %v51 = vrsqrt.pop %v49
      %v52 = vrsqrt.pop %v50
      %v53 = vmul.f32 %v37, %v51
      %v54 = vmul.f32 %v38, %v52
      %v56 = vlaneseq
      %v57 = vshrl.u32 %v56, 7
      %v58 = vsub.s32 0, %v57
      %v59 = vrot.slane %v25, %v58
      %v61 = vmul.f32 %v59, %v53
      %v62 = vmul.f32 %v59, %v54
      %v64 = vlaneseq
      %v65 = vshrl.u32 %v64, 7
      %v66 = vsub.s32 0, %v65
      %v67 = vrot.slane %v26, %v66
      %v69 = vadd.f32 %v61, %v67
      %v70 = vadd.f32 %v62, %v67
      %v71 = vpack.c.bf16 %v70, %v69
      %v73 = vunpack.c.l.b16 %v71
      %v74 = vunpack.c.h.b16 %v71
      %v75 = vpack.c.b16 %v73, %v73
      %v76 = vpack.c.b16 %v74, %v74
      %vm79 = vcmask 257024
      %80 = vst.msk [vmem:[#allocation2] sm:$0xf] %vm79, %v75
      %81 = vst.msk [vmem:[#allocation2 + $0x4] sm:$0xf] %vm79, %v76
    $region21: #{_lambda_.3} parent=1 // pred_fallthru
      _
    %v82 = vld [vmem:[#allocation2] sm:$0xf]
    %v83 = vld [vmem:[#allocation2 + $0x4] sm:$0xf]
    %v84 = vld [vmem:[%s3] sm:$0xff]
    %v85 = vld [vmem:[%s3 + $0x8] sm:$0xff]
    %v86 = vld [vmem:[%s3 + $0x10] sm:$0xff]
    %v87 = vld [vmem:[%s3 + $0x18] sm:$0xff]
    %v90 = vunpack.c.l.b16 %v82
    %v91 = vunpack.c.l.b16 %v83
    %v92 = vpack.c.b16 %v91, %v90
    %v97 = vunpack.c.l.b16 %v84
    %v98 = vunpack.c.h.b16 %v84
    %v99 = vunpack.c.l.b16 %v85
    %v100 = vunpack.c.h.b16 %v85
    %v101 = vunpack.c.l.b16 %v86
    %v102 = vunpack.c.h.b16 %v86
    %v103 = vunpack.c.l.b16 %v87
    %v104 = vunpack.c.h.b16 %v87
    %v105 = vpack.c.b16 %v99, %v97
    %v106 = vpack.c.b16 %v100, %v98
    %v107 = vpack.c.b16 %v103, %v101
    %v108 = vpack.c.b16 %v104, %v102
    %vm113 = vcmask 261120
    %v115 = vsel %vm113, %v92, 0
    %117 = vmatprep.subr.bf16.mxu0 0
    %118 = vmatpush1.bf16.msra.mxu0 0
    %119 = vmatprep.subr.bf16.mxu0 0
    %120 = vmatpush1.bf16.msra.mxu0 0
    %121 = vmatprep.subr.bf16.mxu0 0
    %122 = vmatpush1.bf16.msra.mxu0 0
    %123 = vmatprep.subr.bf16.mxu0 0
    %124 = vmatpush1.bf16.msra.mxu0 0
    %125 = vmatprep.subr.bf16.mxu0 0
    %126 = vmatpush1.bf16.msra.mxu0 0
    %127 = vmatprep.subr.bf16.mxu0 0
    %128 = vmatpush1.bf16.msra.mxu0 0
    %129 = vmatprep.subr.bf16.mxu0 %v108
    %130 = vmatpush1.bf16.msra.mxu0 %v107
    %131 = vmatprep.subr.bf16.mxu0 %v106
    %132 = vmatpush1.bf16.msra.mxu0 %v105
    %133 = vmatprep.subr.bf16.mxu0 0
    %134 = vmatpush2.bf16.msra.mxu0 0
    %135 = vmatprep.subr.bf16.mxu0 0
    %136 = vmatpush2.bf16.msra.mxu0 0
    %137 = vmatprep.subr.bf16.mxu0 0
    %138 = vmatpush2.bf16.msra.mxu0 0
    %139 = vmatprep.subr.bf16.mxu0 0
    %140 = vmatpush2.bf16.msra.mxu0 0
    %141 = vmatprep.subr.bf16.mxu0 0
    %142 = vmatpush2.bf16.msra.mxu0 0
    %143 = vmatprep.subr.bf16.mxu0 0
    %144 = vmatpush2.bf16.msra.mxu0 0
    %145 = vmatprep.subr.bf16.mxu0 0
    %146 = vmatpush2.bf16.msra.mxu0 0
    %147 = vmatprep.subr.bf16.mxu0 0
    %148 = vmatpush2.bf16.msra.mxu0 0
    %149 = vmatprep.mubr.bf16.mxu0 0
    %150 = vmatmul.mubr.bf16.gmra.mxu0 %v115
    %v151 = vpop.f32.mrf.mxu0
    %v152 = vadd.f32 0.0, %v151
    %v153 = vpop.f32.mrf.mxu0
    %v154 = vadd.f32 0.0, %v153
    %v155 = vpop.f32.mrf.mxu0
    %v156 = vadd.f32 0.0, %v155
    %v157 = vpop.f32.mrf.mxu0
    %v158 = vadd.f32 0.0, %v157
    %159 = vdwg.mxu0
    %160 = vst [vmem:[#allocation3] sm:$0xff] %v152
    %161 = vst [vmem:[#allocation3 + $0x8] sm:$0xff] %v154
    %162 = vst [vmem:[#allocation3 + $0x10] sm:$0xff] %v156
    %163 = vst [vmem:[#allocation3 + $0x18] sm:$0xff] %v158
    // Predicated region
    $region22: #{_lambda_.3} parent=1 // pred_check
      _
    $region23: #{_lambda_.3} parent=1 // pred_check_branch
      %165 = sbr.rel (0) target = $region25
    $region24: #{_lambda_.3} parent=1 // pred_region
      %s167 = ssub.s32 512, 512
      %168 = vsyncadd [#allocation4], %s167
      %s169 = sshll.u32 [#allocation3], 4
      %s170 = int_to_ptr.vmem [resolvable:$true] %s169
      %175 = dma.vmem_to_hbm [thread:$0]  %s170, 512, %s4, [#allocation4], 256, 256, 16
    $region25: #{_lambda_.3} parent=1 // pred_fallthru
      _
    // Predicated region
    $region26: #{_lambda_.3} parent=1 // pred_check
      _
    $region27: #{_lambda_.3} parent=1 // pred_check_branch
      %177 = sbr.rel (0) target = $region29
    $region28: #{_lambda_.3} parent=1 // pred_region
      %178 = dma.done [#allocation4], 512
    $region29: #{_lambda_.3} parent=1 // pred_fallthru
      _
    %179 = vsyncpa [#allocation4], 1

// kernel: _lambda_.2
$region0: #{_lambda_.2}
  #allocation0 [shape = 'u32[]', space=smem, size = 0x4, offset = 0x4, fixed_abs, tag = 'smem constant byte address 0x4 - core index']
  #allocation1 [shape = 'u32[144,128]{1,0:T(1,128)}', space=vmem, size = 0x12000, scoped, tag = 'internal scratch']
  #allocation2 [shape = 'f32[8,8]{1,0:T(8,128)}', space=vmem, size = 0x1000, scoped, tag = 'scratch operand']
  %s0 = inlined_call_operand.vmem [shape: f32[2,8,32], index: 0, kind: input, shape index: {}, may-alias: {0,12}]
  %s1 = inlined_call_operand.vmem [shape: bf16[2,32,96], index: 1, kind: input, shape index: {}]
  %s2 = inlined_call_operand.vmem [shape: bf16[2,32,32], index: 2, kind: input, shape index: {}]
  %s3 = inlined_call_operand.vmem [shape: f32[2,1,32], index: 3, kind: input, shape index: {}]
  %s4 = inlined_call_operand.vmem [shape: f32[2,1,32], index: 4, kind: input, shape index: {}]
  %s5 = inlined_call_operand.vmem [shape: f32[2,1,32], index: 5, kind: input, shape index: {}]
  %s6 = inlined_call_operand.vmem [shape: f32[2,1,32], index: 6, kind: input, shape index: {}]
  %s7 = inlined_call_operand.vmem [shape: f32[2,1,32], index: 7, kind: input, shape index: {}]
  %s8 = inlined_call_operand.vmem [shape: bf16[2,32,128], index: 8, kind: input, shape index: {}]
  %s9 = inlined_call_operand.vmem [shape: f32[2,1,128], index: 9, kind: input, shape index: {}]
  %s10 = inlined_call_operand.vmem [shape: bf16[2,128,32], index: 10, kind: input, shape index: {}]
  %s11 = inlined_call_operand.vmem [shape: f32[2,1,32], index: 11, kind: input, shape index: {}]
  %s12 = inlined_call_operand.vmem [shape: f32[2,8,32], index: 12, kind: output, shape index: {}, may-alias: {0,12}]
  %s13 = sld [smem:[#allocation0]]
  $region85: #{_lambda_.2} parent=0
    _
  %s15 = ssub.s32 1, %s13
  %s16 = scalar_select 0, %s15, %s13
  loop: start=0, step=1, limit=4
  $region2: #{_lambda_.2} parent=0 // loop_pre_header
    _
  $region3: #{_lambda_.2} parent=0 // loop_header
    %s18 = sphi 0, %s22
    %p19 = scmp.ge.s32.totalorder %s18, 4
    %s26 = sphi 0, %s26
    %s28 = sphi 0, %s26
    %s29 = sphi 0, %s28
    %s43 = sphi 0, %s29
    %s49 = sphi 0, %s51
    %s52 = sphi 0, %s49
    %s53 = sphi 0, %s52
    %s69 = sphi 0, %s53
    %s75 = sphi 0, %s77
    %s78 = sphi 0, %s75
    %s79 = sphi 0, %s78
    %s95 = sphi 0, %s79
    %s101 = sphi 0, %s103
    %s104 = sphi 0, %s101
    %s105 = sphi 0, %s104
    %s121 = sphi 0, %s105
    %s127 = sphi 0, %s129
    %s130 = sphi 0, %s127
    %s131 = sphi 0, %s130
    %s147 = sphi 0, %s131
    %s153 = sphi 0, %s155
    %s156 = sphi 0, %s153
    %s157 = sphi 0, %s156
    %s173 = sphi 0, %s157
    %s179 = sphi 0, %s181
    %s182 = sphi 0, %s179
    %s183 = sphi 0, %s182
    %s199 = sphi 0, %s183
    %s205 = sphi 0, %s207
    %s208 = sphi 0, %s205
    %s209 = sphi 0, %s208
    %s225 = sphi 0, %s209
    %s231 = sphi 0, %s233
    %s234 = sphi 0, %s231
    %s235 = sphi 0, %s234
    %s251 = sphi 0, %s235
    %s257 = sphi 0, %s259
    %s260 = sphi 0, %s257
    %s261 = sphi 0, %s260
    %s277 = sphi 0, %s261
    %s283 = sphi 0, %s285
    %s286 = sphi 0, %s283
    %s287 = sphi 0, %s286
    %s303 = sphi 0, %s287
    %s309 = sphi 0, %s311
    %s312 = sphi 0, %s309
    %s313 = sphi 0, %s312
    %s329 = sphi 0, %s313
    %s333 = sphi 0, %s333
    %s335 = sphi 0, %s333
    %s336 = sphi 0, %s335
    %s350 = sphi 0, %s336
  $region4: #{_lambda_.2} parent=0 // loop_header_branch
    %21 = sbr.rel (%p19) target = $region8
  $region5: #{_lambda_.2} parent=0 // loop_body
    %s23 = ssub.s32 %s18, 1
    %s24 = ssub.s32 %s18, 2
    %s25 = sadd.s32 %s18, 1
    %s27 = sadd.s32 %s26, 1
    %p30 = scmp.eq.s32.totalorder %s18, 1
    %p31 = scmp.ne.s32.totalorder %s26, %s28
    %p32 = scmp.eq.s32.totalorder %s18, 0
    %p33 = por %p31, %p32
    %p34 = scmp.ne.s32.totalorder %s26, %s28
    %p35 = scmp.eq.s32.totalorder %s23, 1
    %p36 = por %p34, %p35
    %p37 = scmp.ne.s32.totalorder %s28, %s29
    %p38 = scmp.eq.s32.totalorder %s23, 0
    %p39 = por %p37, %p38
    %p40 = scmp.ne.s32.totalorder %s28, %s29
    %p41 = scmp.eq.s32.totalorder %s24, 1
    %p42 = por %p40, %p41
    %p44 = scmp.ne.s32.totalorder %s29, %s43
    %p45 = scmp.eq.s32.totalorder %s24, 0
    %p46 = por %p44, %p45
    %s47 = ssub.s32 %s18, %s25
    %p48 = scmp.eq.s32.totalorder %s47, 0
    %s50 = sadd.s32 %s49, 1
    %s51 = scalar_select %p48, %s49, %s50
    %p54 = pneg %p48
    %p55 = scmp.eq.s32.totalorder %s18, 1
    %p56 = por %p54, %p55
    %p57 = scmp.ne.s32.totalorder %s49, %s52
    %p58 = scmp.eq.s32.totalorder %s18, 0
    %p59 = por %p57, %p58
    %p60 = scmp.ne.s32.totalorder %s49, %s52
    %p61 = scmp.eq.s32.totalorder %s23, 1
    %p62 = por %p60, %p61
    %p63 = scmp.ne.s32.totalorder %s52, %s53
    %p64 = scmp.eq.s32.totalorder %s23, 0
    %p65 = por %p63, %p64
    %p66 = scmp.ne.s32.totalorder %s52, %s53
    %p67 = scmp.eq.s32.totalorder %s24, 1
    %p68 = por %p66, %p67
    %p70 = scmp.ne.s32.totalorder %s53, %s69
    %p71 = scmp.eq.s32.totalorder %s24, 0
    %p72 = por %p70, %p71
    %s73 = ssub.s32 %s18, %s25
    %p74 = scmp.eq.s32.totalorder %s73, 0
    %s76 = sadd.s32 %s75, 1
    %s77 = scalar_select %p74, %s75, %s76
    %p80 = pneg %p74
    %p81 = scmp.eq.s32.totalorder %s18, 1
    %p82 = por %p80, %p81
    %p83 = scmp.ne.s32.totalorder %s75, %s78
    %p84 = scmp.eq.s32.totalorder %s18, 0
    %p85 = por %p83, %p84
    %p86 = scmp.ne.s32.totalorder %s75, %s78
    %p87 = scmp.eq.s32.totalorder %s23, 1
    %p88 = por %p86, %p87
    %p89 = scmp.ne.s32.totalorder %s78, %s79
    %p90 = scmp.eq.s32.totalorder %s23, 0
    %p91 = por %p89, %p90
    %p92 = scmp.ne.s32.totalorder %s78, %s79
    %p93 = scmp.eq.s32.totalorder %s24, 1
    %p94 = por %p92, %p93
    %p96 = scmp.ne.s32.totalorder %s79, %s95
    %p97 = scmp.eq.s32.totalorder %s24, 0
    %p98 = por %p96, %p97
    %s99 = ssub.s32 %s18, %s25
    %p100 = scmp.eq.s32.totalorder %s99, 0
    %s102 = sadd.s32 %s101, 1
    %s103 = scalar_select %p100, %s101, %s102
    %p106 = pneg %p100
    %p107 = scmp.eq.s32.totalorder %s18, 1
    %p108 = por %p106, %p107
    %p109 = scmp.ne.s32.totalorder %s101, %s104
    %p110 = scmp.eq.s32.totalorder %s18, 0
    %p111 = por %p109, %p110
    %p112 = scmp.ne.s32.totalorder %s101, %s104
    %p113 = scmp.eq.s32.totalorder %s23, 1
    %p114 = por %p112, %p113
    %p115 = scmp.ne.s32.totalorder %s104, %s105
    %p116 = scmp.eq.s32.totalorder %s23, 0
    %p117 = por %p115, %p116
    %p118 = scmp.ne.s32.totalorder %s104, %s105
    %p119 = scmp.eq.s32.totalorder %s24, 1
    %p120 = por %p118, %p119
    %p122 = scmp.ne.s32.totalorder %s105, %s121
    %p123 = scmp.eq.s32.totalorder %s24, 0
    %p124 = por %p122, %p123
    %s125 = ssub.s32 %s18, %s25
    %p126 = scmp.eq.s32.totalorder %s125, 0
    %s128 = sadd.s32 %s127, 1
    %s129 = scalar_select %p126, %s127, %s128
    %p132 = pneg %p126
    %p133 = scmp.eq.s32.totalorder %s18, 1
    %p134 = por %p132, %p133
    %p135 = scmp.ne.s32.totalorder %s127, %s130
    %p136 = scmp.eq.s32.totalorder %s18, 0
    %p137 = por %p135, %p136
    %p138 = scmp.ne.s32.totalorder %s127, %s130
    %p139 = scmp.eq.s32.totalorder %s23, 1
    %p140 = por %p138, %p139
    %p141 = scmp.ne.s32.totalorder %s130, %s131
    %p142 = scmp.eq.s32.totalorder %s23, 0
    %p143 = por %p141, %p142
    %p144 = scmp.ne.s32.totalorder %s130, %s131
    %p145 = scmp.eq.s32.totalorder %s24, 1
    %p146 = por %p144, %p145
    %p148 = scmp.ne.s32.totalorder %s131, %s147
    %p149 = scmp.eq.s32.totalorder %s24, 0
    %p150 = por %p148, %p149
    %s151 = ssub.s32 %s18, %s25
    %p152 = scmp.eq.s32.totalorder %s151, 0
    %s154 = sadd.s32 %s153, 1
    %s155 = scalar_select %p152, %s153, %s154
    %p158 = pneg %p152
    %p159 = scmp.eq.s32.totalorder %s18, 1
    %p160 = por %p158, %p159
    %p161 = scmp.ne.s32.totalorder %s153, %s156
    %p162 = scmp.eq.s32.totalorder %s18, 0
    %p163 = por %p161, %p162
    %p164 = scmp.ne.s32.totalorder %s153, %s156
    %p165 = scmp.eq.s32.totalorder %s23, 1
    %p166 = por %p164, %p165
    %p167 = scmp.ne.s32.totalorder %s156, %s157
    %p168 = scmp.eq.s32.totalorder %s23, 0
    %p169 = por %p167, %p168
    %p170 = scmp.ne.s32.totalorder %s156, %s157
    %p171 = scmp.eq.s32.totalorder %s24, 1
    %p172 = por %p170, %p171
    %p174 = scmp.ne.s32.totalorder %s157, %s173
    %p175 = scmp.eq.s32.totalorder %s24, 0
    %p176 = por %p174, %p175
    %s177 = ssub.s32 %s18, %s25
    %p178 = scmp.eq.s32.totalorder %s177, 0
    %s180 = sadd.s32 %s179, 1
    %s181 = scalar_select %p178, %s179, %s180
    %p184 = pneg %p178
    %p185 = scmp.eq.s32.totalorder %s18, 1
    %p186 = por %p184, %p185
    %p187 = scmp.ne.s32.totalorder %s179, %s182
    %p188 = scmp.eq.s32.totalorder %s18, 0
    %p189 = por %p187, %p188
    %p190 = scmp.ne.s32.totalorder %s179, %s182
    %p191 = scmp.eq.s32.totalorder %s23, 1
    %p192 = por %p190, %p191
    %p193 = scmp.ne.s32.totalorder %s182, %s183
    %p194 = scmp.eq.s32.totalorder %s23, 0
    %p195 = por %p193, %p194
    %p196 = scmp.ne.s32.totalorder %s182, %s183
    %p197 = scmp.eq.s32.totalorder %s24, 1
    %p198 = por %p196, %p197
    %p200 = scmp.ne.s32.totalorder %s183, %s199
    %p201 = scmp.eq.s32.totalorder %s24, 0
    %p202 = por %p200, %p201
    %s203 = ssub.s32 %s18, %s25
    %p204 = scmp.eq.s32.totalorder %s203, 0
    %s206 = sadd.s32 %s205, 1
    %s207 = scalar_select %p204, %s205, %s206
    %p210 = pneg %p204
    %p211 = scmp.eq.s32.totalorder %s18, 1
    %p212 = por %p210, %p211
    %p213 = scmp.ne.s32.totalorder %s205, %s208
    %p214 = scmp.eq.s32.totalorder %s18, 0
    %p215 = por %p213, %p214
    %p216 = scmp.ne.s32.totalorder %s205, %s208
    %p217 = scmp.eq.s32.totalorder %s23, 1
    %p218 = por %p216, %p217
    %p219 = scmp.ne.s32.totalorder %s208, %s209
    %p220 = scmp.eq.s32.totalorder %s23, 0
    %p221 = por %p219, %p220
    %p222 = scmp.ne.s32.totalorder %s208, %s209
    %p223 = scmp.eq.s32.totalorder %s24, 1
    %p224 = por %p222, %p223
    %p226 = scmp.ne.s32.totalorder %s209, %s225
    %p227 = scmp.eq.s32.totalorder %s24, 0
    %p228 = por %p226, %p227
    %s229 = ssub.s32 %s18, %s25
    %p230 = scmp.eq.s32.totalorder %s229, 0
    %s232 = sadd.s32 %s231, 1
    %s233 = scalar_select %p230, %s231, %s232
    %p236 = pneg %p230
    %p237 = scmp.eq.s32.totalorder %s18, 1
    %p238 = por %p236, %p237
    %p239 = scmp.ne.s32.totalorder %s231, %s234
    %p240 = scmp.eq.s32.totalorder %s18, 0
    %p241 = por %p239, %p240
    %p242 = scmp.ne.s32.totalorder %s231, %s234
    %p243 = scmp.eq.s32.totalorder %s23, 1
    %p244 = por %p242, %p243
    %p245 = scmp.ne.s32.totalorder %s234, %s235
    %p246 = scmp.eq.s32.totalorder %s23, 0
    %p247 = por %p245, %p246
    %p248 = scmp.ne.s32.totalorder %s234, %s235
    %p249 = scmp.eq.s32.totalorder %s24, 1
    %p250 = por %p248, %p249
    %p252 = scmp.ne.s32.totalorder %s235, %s251
    %p253 = scmp.eq.s32.totalorder %s24, 0
    %p254 = por %p252, %p253
    %s255 = ssub.s32 %s18, %s25
    %p256 = scmp.eq.s32.totalorder %s255, 0
    %s258 = sadd.s32 %s257, 1
    %s259 = scalar_select %p256, %s257, %s258
    %p262 = pneg %p256
    %p263 = scmp.eq.s32.totalorder %s18, 1
    %p264 = por %p262, %p263
    %p265 = scmp.ne.s32.totalorder %s257, %s260
    %p266 = scmp.eq.s32.totalorder %s18, 0
    %p267 = por %p265, %p266
    %p268 = scmp.ne.s32.totalorder %s257, %s260
    %p269 = scmp.eq.s32.totalorder %s23, 1
    %p270 = por %p268, %p269
    %p271 = scmp.ne.s32.totalorder %s260, %s261
    %p272 = scmp.eq.s32.totalorder %s23, 0
    %p273 = por %p271, %p272
    %p274 = scmp.ne.s32.totalorder %s260, %s261
    %p275 = scmp.eq.s32.totalorder %s24, 1
    %p276 = por %p274, %p275
    %p278 = scmp.ne.s32.totalorder %s261, %s277
    %p279 = scmp.eq.s32.totalorder %s24, 0
    %p280 = por %p278, %p279
    %s281 = ssub.s32 %s18, %s25
    %p282 = scmp.eq.s32.totalorder %s281, 0
    %s284 = sadd.s32 %s283, 1
    %s285 = scalar_select %p282, %s283, %s284
    %p288 = pneg %p282
    %p289 = scmp.eq.s32.totalorder %s18, 1
    %p290 = por %p288, %p289
    %p291 = scmp.ne.s32.totalorder %s283, %s286
    %p292 = scmp.eq.s32.totalorder %s18, 0
    %p293 = por %p291, %p292
    %p294 = scmp.ne.s32.totalorder %s283, %s286
    %p295 = scmp.eq.s32.totalorder %s23, 1
    %p296 = por %p294, %p295
    %p297 = scmp.ne.s32.totalorder %s286, %s287
    %p298 = scmp.eq.s32.totalorder %s23, 0
    %p299 = por %p297, %p298
    %p300 = scmp.ne.s32.totalorder %s286, %s287
    %p301 = scmp.eq.s32.totalorder %s24, 1
    %p302 = por %p300, %p301
    %p304 = scmp.ne.s32.totalorder %s287, %s303
    %p305 = scmp.eq.s32.totalorder %s24, 0
    %p306 = por %p304, %p305
    %s307 = ssub.s32 %s18, %s25
    %p308 = scmp.eq.s32.totalorder %s307, 0
    %s310 = sadd.s32 %s309, 1
    %s311 = scalar_select %p308, %s309, %s310
    %p314 = pneg %p308
    %p315 = scmp.eq.s32.totalorder %s18, 1
    %p316 = por %p314, %p315
    %p317 = scmp.ne.s32.totalorder %s309, %s312
    %p318 = scmp.eq.s32.totalorder %s18, 0
    %p319 = por %p317, %p318
    %p320 = scmp.ne.s32.totalorder %s309, %s312
    %p321 = scmp.eq.s32.totalorder %s23, 1
    %p322 = por %p320, %p321
    %p323 = scmp.ne.s32.totalorder %s312, %s313
    %p324 = scmp.eq.s32.totalorder %s23, 0
    %p325 = por %p323, %p324
    %p326 = scmp.ne.s32.totalorder %s312, %s313
    %p327 = scmp.eq.s32.totalorder %s24, 1
    %p328 = por %p326, %p327
    %p330 = scmp.ne.s32.totalorder %s313, %s329
    %p331 = scmp.eq.s32.totalorder %s24, 0
    %p332 = por %p330, %p331
    %s334 = sadd.s32 %s333, 1
    %p337 = scmp.eq.s32.totalorder %s18, 1
    %p338 = scmp.ne.s32.totalorder %s333, %s335
    %p339 = scmp.eq.s32.totalorder %s18, 0
    %p340 = por %p338, %p339
    %p341 = scmp.ne.s32.totalorder %s333, %s335
    %p342 = scmp.eq.s32.totalorder %s23, 1
    %p343 = por %p341, %p342
    %p344 = scmp.ne.s32.totalorder %s335, %s336
    %p345 = scmp.eq.s32.totalorder %s23, 0
    %p346 = por %p344, %p345
    %p347 = scmp.ne.s32.totalorder %s335, %s336
    %p348 = scmp.eq.s32.totalorder %s24, 1
    %p349 = por %p347, %p348
    %p351 = scmp.ne.s32.totalorder %s336, %s350
    %p352 = scmp.eq.s32.totalorder %s24, 0
    %p353 = por %p351, %p352
    %p354 = scmp.le.s32.totalorder 1, %s18
    %p355 = scmp.lt.s32.totalorder %s18, 3
    %p356 = pnand %p354, %p355
    %p357 = pneg %p356
    // Predicated region
    $region9: #{_lambda_.2} parent=5 // pred_check
      _
    $region10: #{_lambda_.2} parent=5 // pred_check_branch
      %359 = sbr.rel (%p356) target = $region12
    $region11: #{_lambda_.2} parent=5 // pred_region
      %s360 = ssub.s32 %s18, 1
      // Predicated region
      $region13: #{_lambda_.2} parent=11 // pred_check
        %p361 = pneg %p39
      $region14: #{_lambda_.2} parent=11 // pred_check_branch
        %363 = sbr.rel (%p361) target = $region16
      $region15: #{_lambda_.2} parent=11 // pred_region
        _
      $region16: #{_lambda_.2} parent=11 // pred_fallthru
        _
    $region12: #{_lambda_.2} parent=5 // pred_fallthru
      _
    %p364 = scmp.lt.s32.totalorder %s18, 2
    // Predicated region
    $region17: #{_lambda_.2} parent=5 // pred_check
      %p365 = pneg %p364
    $region18: #{_lambda_.2} parent=5 // pred_check_branch
      %367 = sbr.rel (%p365) target = $region20
    $region19: #{_lambda_.2} parent=5 // pred_region
      // Predicated region
      $region21: #{_lambda_.2} parent=19 // pred_check
        %p368 = pneg %p59
      $region22: #{_lambda_.2} parent=19 // pred_check_branch
        %370 = sbr.rel (%p368) target = $region24
      $region23: #{_lambda_.2} parent=19 // pred_region
        %p371 = scmp.lt.s32.totalorder %s18, 1
        %s372 = scalar_select %p371, %s18, 1
        %s373 = smul.addr %s372, 4
        %s374 = smul.addr %s373, 4
        %s375 = scalar_lea.vmem %s1, %s374
      $region24: #{_lambda_.2} parent=19 // pred_fallthru
        _
      // Predicated region
      $region25: #{_lambda_.2} parent=19 // pred_check
        %p376 = pneg %p85
      $region26: #{_lambda_.2} parent=19 // pred_check_branch
        %378 = sbr.rel (%p376) target = $region28
      $region27: #{_lambda_.2} parent=19 // pred_region
        %p379 = scmp.lt.s32.totalorder %s18, 1
        %s380 = scalar_select %p379, %s18, 1
        %s381 = smul.addr %s380, 4
        %s382 = smul.addr %s381, 4
        %s383 = scalar_lea.vmem %s2, %s382
      $region28: #{_lambda_.2} parent=19 // pred_fallthru
        _
      // Predicated region
      $region29: #{_lambda_.2} parent=19 // pred_check
        %p384 = pneg %p111
      $region30: #{_lambda_.2} parent=19 // pred_check_branch
        %386 = sbr.rel (%p384) target = $region32
      $region31: #{_lambda_.2} parent=19 // pred_region
        %p387 = scmp.lt.s32.totalorder %s18, 1
        %s388 = scalar_select %p387, %s18, 1
        %s389 = scalar_lea.vmem %s3, %s388
      $region32: #{_lambda_.2} parent=19 // pred_fallthru
        _
      // Predicated region
      $region33: #{_lambda_.2} parent=19 // pred_check
        %p390 = pneg %p137
      $region34: #{_lambda_.2} parent=19 // pred_check_branch
        %392 = sbr.rel (%p390) target = $region36
      $region35: #{_lambda_.2} parent=19 // pred_region
        %p393 = scmp.lt.s32.totalorder %s18, 1
        %s394 = scalar_select %p393, %s18, 1
        %s395 = scalar_lea.vmem %s4, %s394
      $region36: #{_lambda_.2} parent=19 // pred_fallthru
        _
      // Predicated region
      $region37: #{_lambda_.2} parent=19 // pred_check
        %p396 = pneg %p163
      $region38: #{_lambda_.2} parent=19 // pred_check_branch
        %398 = sbr.rel (%p396) target = $region40
      $region39: #{_lambda_.2} parent=19 // pred_region
        %p399 = scmp.lt.s32.totalorder %s18, 1
        %s400 = scalar_select %p399, %s18, 1
        %s401 = scalar_lea.vmem %s5, %s400
      $region40: #{_lambda_.2} parent=19 // pred_fallthru
        _
      // Predicated region
      $region41: #{_lambda_.2} parent=19 // pred_check
        %p402 = pneg %p189
      $region42: #{_lambda_.2} parent=19 // pred_check_branch
        %404 = sbr.rel (%p402) target = $region44
      $region43: #{_lambda_.2} parent=19 // pred_region
        %p405 = scmp.lt.s32.totalorder %s18, 1
        %s406 = scalar_select %p405, %s18, 1
        %s407 = scalar_lea.vmem %s6, %s406
      $region44: #{_lambda_.2} parent=19 // pred_fallthru
        _
      // Predicated region
      $region45: #{_lambda_.2} parent=19 // pred_check
        %p408 = pneg %p215
      $region46: #{_lambda_.2} parent=19 // pred_check_branch
        %410 = sbr.rel (%p408) target = $region48
      $region47: #{_lambda_.2} parent=19 // pred_region
        %p411 = scmp.lt.s32.totalorder %s18, 1
        %s412 = scalar_select %p411, %s18, 1
        %s413 = scalar_lea.vmem %s7, %s412
      $region48: #{_lambda_.2} parent=19 // pred_fallthru
        _
      // Predicated region
      $region49: #{_lambda_.2} parent=19 // pred_check
        %p414 = pneg %p241
      $region50: #{_lambda_.2} parent=19 // pred_check_branch
        %416 = sbr.rel (%p414) target = $region52
      $region51: #{_lambda_.2} parent=19 // pred_region
        %p417 = scmp.lt.s32.totalorder %s18, 1
        %s418 = scalar_select %p417, %s18, 1
        %s419 = smul.addr %s418, 4
        %s420 = smul.addr %s419, 4
        %s421 = scalar_lea.vmem %s8, %s420
      $region52: #{_lambda_.2} parent=19 // pred_fallthru
        _
      // Predicated region
      $region53: #{_lambda_.2} parent=19 // pred_check
        %p422 = pneg %p267
      $region54: #{_lambda_.2} parent=19 // pred_check_branch
        %424 = sbr.rel (%p422) target = $region56
      $region55: #{_lambda_.2} parent=19 // pred_region
        %p425 = scmp.lt.s32.totalorder %s18, 1
        %s426 = scalar_select %p425, %s18, 1
        %s427 = scalar_lea.vmem %s9, %s426
      $region56: #{_lambda_.2} parent=19 // pred_fallthru
        _
      // Predicated region
      $region57: #{_lambda_.2} parent=19 // pred_check
        %p428 = pneg %p293
      $region58: #{_lambda_.2} parent=19 // pred_check_branch
        %430 = sbr.rel (%p428) target = $region60
      $region59: #{_lambda_.2} parent=19 // pred_region
        %p431 = scmp.lt.s32.totalorder %s18, 1
        %s432 = scalar_select %p431, %s18, 1
        %s433 = smul.addr %s432, 16
        %s434 = smul.addr %s433, 4
        %s435 = scalar_lea.vmem %s10, %s434
      $region60: #{_lambda_.2} parent=19 // pred_fallthru
        _
      // Predicated region
      $region61: #{_lambda_.2} parent=19 // pred_check
        %p436 = pneg %p319
      $region62: #{_lambda_.2} parent=19 // pred_check_branch
        %438 = sbr.rel (%p436) target = $region64
      $region63: #{_lambda_.2} parent=19 // pred_region
        %p439 = scmp.lt.s32.totalorder %s18, 1
        %s440 = scalar_select %p439, %s18, 1
        %s441 = scalar_lea.vmem %s11, %s440
      $region64: #{_lambda_.2} parent=19 // pred_fallthru
        _
    $region20: #{_lambda_.2} parent=5 // pred_fallthru
      _
    %p442 = scmp.le.s32.totalorder 1, %s18
    %p443 = scmp.lt.s32.totalorder %s18, 3
    %p444 = pnand %p442, %p443
    %p445 = pneg %p444
    // Predicated region
    $region65: #{_lambda_.2} parent=5 // pred_check
      _
    $region66: #{_lambda_.2} parent=5 // pred_check_branch
      %447 = sbr.rel (%p444) target = $region68
    $region67: #{_lambda_.2} parent=5 // pred_region
      %s448 = ssub.s32 %s18, 1
      %p449 = pneg %p39
      %p450 = pneg %p36
      %p451 = scmp.lt.s32.totalorder %s23, 1
      %s452 = scalar_select %p451, %s23, 1
      %s453 = smul.addr %s452, 4
      %s454 = smul.addr %s453, 4
      %s455 = scalar_lea.vmem %s1, %s454
      %p456 = pneg %p65
      %p457 = pneg %p62
      %p458 = scmp.lt.s32.totalorder %s23, 1
      %s459 = scalar_select %p458, %s23, 1
      %s460 = smul.addr %s459, 4
      %s461 = smul.addr %s460, 4
      %s462 = scalar_lea.vmem %s2, %s461
      %p463 = pneg %p91
      %p464 = pneg %p88
      %p465 = scmp.lt.s32.totalorder %s23, 1
      %s466 = scalar_select %p465, %s23, 1
      %s467 = scalar_lea.vmem %s3, %s466
      %p468 = pneg %p117
      %p469 = pneg %p114
      %p470 = scmp.lt.s32.totalorder %s23, 1
      %s471 = scalar_select %p470, %s23, 1
      %s472 = scalar_lea.vmem %s4, %s471
      %p473 = pneg %p143
      %p474 = pneg %p140
      %p475 = scmp.lt.s32.totalorder %s23, 1
      %s476 = scalar_select %p475, %s23, 1
      %s477 = scalar_lea.vmem %s5, %s476
      %p478 = pneg %p169
      %p479 = pneg %p166
      %p480 = scmp.lt.s32.totalorder %s23, 1
      %s481 = scalar_select %p480, %s23, 1
      %s482 = scalar_lea.vmem %s6, %s481
      %p483 = pneg %p195
      %p484 = pneg %p192
      %p485 = scmp.lt.s32.totalorder %s23, 1
      %s486 = scalar_select %p485, %s23, 1
      %s487 = scalar_lea.vmem %s7, %s486
      %p488 = pneg %p221
      %p489 = pneg %p218
      %p490 = scmp.lt.s32.totalorder %s23, 1
      %s491 = scalar_select %p490, %s23, 1
      %s492 = smul.addr %s491, 4
      %s493 = smul.addr %s492, 4
      %s494 = scalar_lea.vmem %s8, %s493
      %p495 = pneg %p247
      %p496 = pneg %p244
      %p497 = scmp.lt.s32.totalorder %s23, 1
      %s498 = scalar_select %p497, %s23, 1
      %s499 = scalar_lea.vmem %s9, %s498
      %p500 = pneg %p273
      %p501 = pneg %p270
      %p502 = scmp.lt.s32.totalorder %s23, 1
      %s503 = scalar_select %p502, %s23, 1
      %s504 = smul.addr %s503, 16
      %s505 = smul.addr %s504, 4
      %s506 = scalar_lea.vmem %s10, %s505
      %p507 = pneg %p299
      %p508 = pneg %p296
      %p509 = scmp.lt.s32.totalorder %s23, 1
      %s510 = scalar_select %p509, %s23, 1
      %s511 = scalar_lea.vmem %s11, %s510
      %p512 = pneg %p325
      %p513 = pneg %p322
      %p514 = pneg %p346
      %p515 = pneg %p343
      %p516 = scmp.lt.s32.totalorder %s23, 1
      %s517 = scalar_select %p516, %s23, 1
      %s518 = smul.addr %s517, 4
      %s519 = smul.addr %s518, 4
      %s520 = scalar_lea.vmem %s1, %s519
      %p521 = scmp.lt.s32.totalorder %s23, 1
      %s522 = scalar_select %p521, %s23, 1
      %s523 = smul.addr %s522, 4
      %s524 = smul.addr %s523, 4
      %s525 = scalar_lea.vmem %s2, %s524
      %p526 = scmp.lt.s32.totalorder %s23, 1
      %s527 = scalar_select %p526, %s23, 1
      %s528 = scalar_lea.vmem %s3, %s527
      %p529 = scmp.lt.s32.totalorder %s23, 1
      %s530 = scalar_select %p529, %s23, 1
      %s531 = scalar_lea.vmem %s4, %s530
      %p532 = scmp.lt.s32.totalorder %s23, 1
      %s533 = scalar_select %p532, %s23, 1
      %s534 = scalar_lea.vmem %s5, %s533
      %p535 = scmp.lt.s32.totalorder %s23, 1
      %s536 = scalar_select %p535, %s23, 1
      %s537 = scalar_lea.vmem %s6, %s536
      %p538 = scmp.lt.s32.totalorder %s23, 1
      %s539 = scalar_select %p538, %s23, 1
      %s540 = scalar_lea.vmem %s7, %s539
      %p541 = scmp.lt.s32.totalorder %s23, 1
      %s542 = scalar_select %p541, %s23, 1
      %s543 = smul.addr %s542, 4
      %s544 = smul.addr %s543, 4
      %s545 = scalar_lea.vmem %s8, %s544
      %p546 = scmp.lt.s32.totalorder %s23, 1
      %s547 = scalar_select %p546, %s23, 1
      %s548 = scalar_lea.vmem %s9, %s547
      %p549 = scmp.lt.s32.totalorder %s23, 1
      %s550 = scalar_select %p549, %s23, 1
      %s551 = smul.addr %s550, 16
      %s552 = smul.addr %s551, 4
      %s553 = scalar_lea.vmem %s10, %s552
      %p554 = scmp.lt.s32.totalorder %s23, 1
      %s555 = scalar_select %p554, %s23, 1
      %s556 = scalar_lea.vmem %s11, %s555
      %p558 = scmp.eq.s32.totalorder %s23, 0
      // Predicated region
      $region69: #{_lambda_.2} parent=67 // pred_check
        %p559 = pneg %p558
      $region70: #{_lambda_.2} parent=67 // pred_check_branch
        %561 = sbr.rel (%p559) target = $region72
      $region71: #{_lambda_.2} parent=67 // pred_region
        %v562 = vld [vmem:[%s0] sm:$0xff]
        %v563 = vld [vmem:[%s0 + $0x8] sm:$0xff]
        %vm564 = vcmask 261120
        %565 = vst.msk [vmem:[%s12] sm:$0xff] %vm564, %v562
        %566 = vst.msk [vmem:[%s12 + $0x8] sm:$0xff] %vm564, %v563
        %v567 = vlaneseq
        %v568 = vshrl.u32 %v567, 7
        %v569 = vlaneseq
        %v570 = vand.u32 %v569, 127
        %vm571 = vcmp.gt.s32.totalorder %v570, %v568
        %v572 = vsel %vm571, -1e+30, 0.0
        %vm573 = vcmask 64512
        %574 = vst.msk [vmem:[#allocation2] sm:$0xff] %vm573, %v572
      $region72: #{_lambda_.2} parent=67 // pred_fallthru
        _
      %v575 = vld [vmem:[%s12] sm:$0xff]
      %v576 = vld [vmem:[%s12 + $0x8] sm:$0xff]
      %v577 = vld [vmem:[%s531] sm:$0x1]
      %v578 = vld [vmem:[%s534] sm:$0x1]
      %vm579 = vcmask 261120
      %v580 = vsel %vm579, %v575, 0.0
      %581 = vadd.xlane.f32.xlu0 %v580
      %v582 = vpop.xlane.xlu0 %581
      %v583 = vsel %vm579, %v576, 0.0
      %584 = vadd.xlane.f32.xlu0 %v583
      %v585 = vpop.xlane.xlu0 %584
      %v586 = vrcp.pop 32.0
      %v587 = vmul.f32 %v582, %v586
      %v588 = vmul.f32 %v585, %v586
      %v589 = vsub.f32 %v575, %v587
      %v590 = vsub.f32 %v576, %v588
      %v591 = vmul.f32 %v589, %v589
      %v592 = vmul.f32 %v590, %v590
      %v593 = vsel %vm579, %v591, 0.0
      %594 = vadd.xlane.f32.xlu0 %v593
      %v595 = vpop.xlane.xlu0 %594
      %v596 = vsel %vm579, %v592, 0.0
      %597 = vadd.xlane.f32.xlu0 %v596
      %v598 = vpop.xlane.xlu0 %597
      %v599 = vmul.f32 %v595, %v586
      %v600 = vmul.f32 %v598, %v586
      %v601 = vadd.f32 %v599, 1e-05
      %v602 = vadd.f32 %v600, 1e-05
      %v603 = vrsqrt.pop %v601
      %v604 = vrsqrt.pop %v602
      %v605 = vmul.f32 %v589, %v603
      %v606 = vmul.f32 %v590, %v604
      %v608 = vlaneseq
      %v609 = vshrl.u32 %v608, 7
      %v610 = vsub.s32 0, %v609
      %v611 = vrot.slane %v577, %v610
      %v613 = vmul.f32 %v611, %v605
      %v614 = vmul.f32 %v611, %v606
      %v616 = vlaneseq
      %v617 = vshrl.u32 %v616, 7
      %v618 = vsub.s32 0, %v617
      %v619 = vrot.slane %v578, %v618
      %v621 = vadd.f32 %v613, %v619
      %v622 = vadd.f32 %v614, %v619
      %v623 = vpack.c.bf16 %v622, %v621
      %v624 = vld [vmem:[%s520] sm:$0xf]
      %v625 = vld [vmem:[%s520 + $0x4] sm:$0xf]
      %v626 = vld [vmem:[%s520 + $0x8] sm:$0xf]
      %v627 = vld [vmem:[%s520 + $0xc] sm:$0xf]
      %v632 = vunpack.c.l.b16 %v624
      %v633 = vunpack.c.l.b16 %v625
      %v634 = vunpack.c.l.b16 %v626
      %v635 = vunpack.c.l.b16 %v627
      %v636 = vpack.c.b16 %v633, %v632
      %v637 = vpack.c.b16 %v635, %v634
      %v641 = vsel %vm579, %v623, 0
      %643 = vmatprep.subr.bf16.mxu0 0
      %644 = vmatpush1.bf16.msra.mxu0 0
      %645 = vmatprep.subr.bf16.mxu0 0
      %646 = vmatpush1.bf16.msra.mxu0 0
      %647 = vmatprep.subr.bf16.mxu0 0
      %648 = vmatpush1.bf16.msra.mxu0 0
      %649 = vmatprep.subr.bf16.mxu0 0
      %650 = vmatpush1.bf16.msra.mxu0 0
      %651 = vmatprep.subr.bf16.mxu0 0
      %652 = vmatpush1.bf16.msra.mxu0 0
      %653 = vmatprep.subr.bf16.mxu0 0
      %654 = vmatpush1.bf16.msra.mxu0 0
      %655 = vmatprep.subr.bf16.mxu0 0
      %656 = vmatpush1.bf16.msra.mxu0 %v637
      %657 = vmatprep.subr.bf16.mxu0 0
      %658 = vmatpush1.bf16.msra.mxu0 %v636
      %659 = vmatprep.subr.bf16.mxu0 0
      %660 = vmatpush2.bf16.msra.mxu0 0
      %661 = vmatprep.subr.bf16.mxu0 0
      %662 = vmatpush2.bf16.msra.mxu0 0
      %663 = vmatprep.subr.bf16.mxu0 0
      %664 = vmatpush2.bf16.msra.mxu0 0
      %665 = vmatprep.subr.bf16.mxu0 0
      %666 = vmatpush2.bf16.msra.mxu0 0
      %667 = vmatprep.subr.bf16.mxu0 0
      %668 = vmatpush2.bf16.msra.mxu0 0
      %669 = vmatprep.subr.bf16.mxu0 0
      %670 = vmatpush2.bf16.msra.mxu0 0
      %671 = vmatprep.subr.bf16.mxu0 0
      %672 = vmatpush2.bf16.msra.mxu0 0
      %673 = vmatprep.subr.bf16.mxu0 0
      %674 = vmatpush2.bf16.msra.mxu0 0
      %675 = vmatprep.mubr.bf16.mxu0 0
      %676 = vmatmul.mubr.bf16.gmra.mxu0 %v641
      %v677 = vpop.f32.mrf.mxu0
      %v678 = vadd.f32 0.0, %v677
      %v679 = vpop.f32.mrf.mxu0
      %v680 = vpop.f32.mrf.mxu0
      %v681 = vadd.f32 0.0, %v680
      %v682 = vpop.f32.mrf.mxu0
      %683 = vdwg.mxu0
      %v684 = vmul.f32 %v678, 0.35355338
      %v685 = vmul.f32 %v681, 0.35355338
      %688 = vrot.lane.b32.xlu0 %v684, 120
      %v689 = vpop.permute.xlu0 %688
      %690 = vrot.lane.b32.xlu0 %v685, 120
      %v691 = vpop.permute.xlu0 %690
      %694 = vrot.lane.b32.xlu0 %v684, 112
      %v695 = vpop.permute.xlu0 %694
      %696 = vrot.lane.b32.xlu0 %v685, 112
      %v697 = vpop.permute.xlu0 %696
      %700 = vrot.lane.b32.xlu0 %v684, 104
      %v701 = vpop.permute.xlu0 %700
      %702 = vrot.lane.b32.xlu0 %v685, 104
      %v703 = vpop.permute.xlu0 %702
      %v706 = vcombine.low %v684, %v695
      %v707 = vcombine.high %v684, %v695
      %v709 = vunpack.c.l.s4 1983009808
      %v710 = vunpack.c.0.s8 %v709
      %v711 = vlaneseq
      %v712 = vshrl.u32 %v711, 7
      %v713 = vsub.s32 %v710, %v712
      %v714 = vrot.slane %v706, %v713
      %v716 = vunpack.c.l.s4 1983009808
      %v717 = vunpack.c.0.s8 %v716
      %v718 = vlaneseq
      %v719 = vshrl.u32 %v718, 7
      %v720 = vsub.s32 %v717, %v719
      %v721 = vrot.slane %v707, %v720
      %v722 = vcombine.low %v689, %v701
      %v723 = vcombine.high %v689, %v701
      %v725 = vunpack.c.l.s4 1983009808
      %v726 = vunpack.c.0.s8 %v725
      %v727 = vlaneseq
      %v728 = vshrl.u32 %v727, 7
      %v729 = vsub.s32 %v726, %v728
      %v730 = vrot.slane %v722, %v729
      %v732 = vunpack.c.l.s4 1983009808
      %v733 = vunpack.c.0.s8 %v732
      %v734 = vlaneseq
      %v735 = vshrl.u32 %v734, 7
      %v736 = vsub.s32 %v733, %v735
      %v737 = vrot.slane %v723, %v736
      %v738 = vcombine.low %v714, %v730
      %v739 = vcombine.high %v714, %v730
      %v741 = vunpack.c.l.s4 1934713408
      %v742 = vunpack.c.0.s8 %v741
      %v743 = vlaneseq
      %v744 = vshrl.u32 %v743, 7
      %v745 = vsub.s32 %v742, %v744
      %v746 = vrot.slane %v738, %v745
      %v748 = vunpack.c.l.s4 1934713408
      %v749 = vunpack.c.0.s8 %v748
      %v750 = vlaneseq
      %v751 = vshrl.u32 %v750, 7
      %v752 = vsub.s32 %v749, %v751
      %v753 = vrot.slane %v739, %v752
      %v754 = vcombine.low %v721, %v737
      %v755 = vcombine.high %v721, %v737
      %v757 = vunpack.c.l.s4 1934713408
      %v758 = vunpack.c.0.s8 %v757
      %v759 = vlaneseq
      %v760 = vshrl.u32 %v759, 7
      %v761 = vsub.s32 %v758, %v760
      %v762 = vrot.slane %v754, %v761
      %v764 = vunpack.c.l.s4 1934713408
      %v765 = vunpack.c.0.s8 %v764
      %v766 = vlaneseq
      %v767 = vshrl.u32 %v766, 7
      %v768 = vsub.s32 %v765, %v767
      %v769 = vrot.slane %v755, %v768
      %v770 = vcombine.high %v746, 0.0
      %v771 = vcombine.high %v753, 0.0
      %v772 = vcombine.high %v762, 0.0
      %v773 = vcombine.high %v769, 0.0
      %v774 = vcombine.low %v685, %v697
      %v775 = vcombine.high %v685, %v697
      %v777 = vunpack.c.l.s4 1983009808
      %v778 = vunpack.c.0.s8 %v777
      %v779 = vlaneseq
      %v780 = vshrl.u32 %v779, 7
      %v781 = vsub.s32 %v778, %v780
      %v782 = vrot.slane %v774, %v781
      %v784 = vunpack.c.l.s4 1983009808
      %v785 = vunpack.c.0.s8 %v784
      %v786 = vlaneseq
      %v787 = vshrl.u32 %v786, 7
      %v788 = vsub.s32 %v785, %v787
      %v789 = vrot.slane %v775, %v788
      %v790 = vcombine.low %v691, %v703
      %v791 = vcombine.high %v691, %v703
      %v793 = vunpack.c.l.s4 1983009808
      %v794 = vunpack.c.0.s8 %v793
      %v795 = vlaneseq
      %v796 = vshrl.u32 %v795, 7
      %v797 = vsub.s32 %v794, %v796
      %v798 = vrot.slane %v790, %v797
      %v800 = vunpack.c.l.s4 1983009808
      %v801 = vunpack.c.0.s8 %v800
      %v802 = vlaneseq
      %v803 = vshrl.u32 %v802, 7
      %v804 = vsub.s32 %v801, %v803
      %v805 = vrot.slane %v791, %v804
      %v806 = vcombine.low %v782, %v798
      %v807 = vcombine.high %v782, %v798
      %v809 = vunpack.c.l.s4 1934713408
      %v810 = vunpack.c.0.s8 %v809
      %v811 = vlaneseq
      %v812 = vshrl.u32 %v811, 7
      %v813 = vsub.s32 %v810, %v812
      %v814 = vrot.slane %v806, %v813
      %v816 = vunpack.c.l.s4 1934713408
      %v817 = vunpack.c.0.s8 %v816
      %v818 = vlaneseq
      %v819 = vshrl.u32 %v818, 7
      %v820 = vsub.s32 %v817, %v819
      %v821 = vrot.slane %v807, %v820
      %v822 = vcombine.low %v789, %v805
      %v823 = vcombine.high %v789, %v805
      %v825 = vunpack.c.l.s4 1934713408
      %v826 = vunpack.c.0.s8 %v825
      %v827 = vlaneseq
      %v828 = vshrl.u32 %v827, 7
      %v829 = vsub.s32 %v826, %v828
      %v830 = vrot.slane %v822, %v829
      %v832 = vunpack.c.l.s4 1934713408
      %v833 = vunpack.c.0.s8 %v832
      %v834 = vlaneseq
      %v835 = vshrl.u32 %v834, 7
      %v836 = vsub.s32 %v833, %v835
      %v837 = vrot.slane %v823, %v836
      %v838 = vcombine.high %v814, 0.0
      %v839 = vcombine.high %v821, 0.0
      %v840 = vcombine.high %v830, 0.0
      %v841 = vcombine.high %v837, 0.0
      %v842 = vcombine.low %v746, %v753
      %v844 = vunpack.c.l.s4 1983009808
      %v845 = vunpack.c.0.s8 %v844
      %v846 = vlaneseq
      %v847 = vshrl.u32 %v846, 7
      %v848 = vsub.s32 %v845, %v847
      %v849 = vrot.slane %v842, %v848
      %v850 = vcombine.low %v770, %v771
      %v852 = vunpack.c.l.s4 1983009808
      %v853 = vunpack.c.0.s8 %v852
      %v854 = vlaneseq
      %v855 = vshrl.u32 %v854, 7
      %v856 = vsub.s32 %v853, %v855
      %v857 = vrot.slane %v850, %v856
      %v858 = vcombine.low %v762, %v769
      %v860 = vunpack.c.l.s4 1983009808
      %v861 = vunpack.c.0.s8 %v860
      %v862 = vlaneseq
      %v863 = vshrl.u32 %v862, 7
      %v864 = vsub.s32 %v861, %v863
      %v865 = vrot.slane %v858, %v864
      %v866 = vcombine.low %v772, %v773
      %v868 = vunpack.c.l.s4 1983009808
      %v869 = vunpack.c.0.s8 %v868
      %v870 = vlaneseq
      %v871 = vshrl.u32 %v870, 7
      %v872 = vsub.s32 %v869, %v871
      %v873 = vrot.slane %v866, %v872
      %v874 = vcombine.low %v849, %v857
      %v875 = vcombine.high %v849, %v857
      %v877 = vunpack.c.l.s4 1934713408
      %v878 = vunpack.c.0.s8 %v877
      %v879 = vlaneseq
      %v880 = vshrl.u32 %v879, 7
      %v881 = vsub.s32 %v878, %v880
      %v882 = vrot.slane %v874, %v881
      %v884 = vunpack.c.l.s4 1934713408
      %v885 = vunpack.c.0.s8 %v884
      %v886 = vlaneseq
      %v887 = vshrl.u32 %v886, 7
      %v888 = vsub.s32 %v885, %v887
      %v889 = vrot.slane %v875, %v888
      %v890 = vcombine.low %v865, %v873
      %v891 = vcombine.high %v865, %v873
      %v893 = vunpack.c.l.s4 1934713408
      %v894 = vunpack.c.0.s8 %v893
      %v895 = vlaneseq
      %v896 = vshrl.u32 %v895, 7
      %v897 = vsub.s32 %v894, %v896
      %v898 = vrot.slane %v890, %v897
      %v900 = vunpack.c.l.s4 1934713408
      %v901 = vunpack.c.0.s8 %v900
      %v902 = vlaneseq
      %v903 = vshrl.u32 %v902, 7
      %v904 = vsub.s32 %v901, %v903
      %v905 = vrot.slane %v891, %v904
      %v906 = vcombine.low %v882, %v898
      %v907 = vcombine.high %v882, %v898
      %v908 = vcombine.low %v889, %v905
      %v909 = vcombine.high %v889, %v905
      %v910 = vcombine.low %v814, %v821
      %v912 = vunpack.c.l.s4 1983009808
      %v913 = vunpack.c.0.s8 %v912
      %v914 = vlaneseq
      %v915 = vshrl.u32 %v914, 7
      %v916 = vsub.s32 %v913, %v915
      %v917 = vrot.slane %v910, %v916
      %v918 = vcombine.low %v838, %v839
      %v920 = vunpack.c.l.s4 1983009808
      %v921 = vunpack.c.0.s8 %v920
      %v922 = vlaneseq
      %v923 = vshrl.u32 %v922, 7
      %v924 = vsub.s32 %v921, %v923
      %v925 = vrot.slane %v918, %v924
      %v926 = vcombine.low %v830, %v837
      %v928 = vunpack.c.l.s4 1983009808
      %v929 = vunpack.c.0.s8 %v928
      %v930 = vlaneseq
      %v931 = vshrl.u32 %v930, 7
      %v932 = vsub.s32 %v929, %v931
      %v933 = vrot.slane %v926, %v932
      %v934 = vcombine.low %v840, %v841
      %v936 = vunpack.c.l.s4 1983009808
      %v937 = vunpack.c.0.s8 %v936
      %v938 = vlaneseq
      %v939 = vshrl.u32 %v938, 7
      %v940 = vsub.s32 %v937, %v939
      %v941 = vrot.slane %v934, %v940
      %v942 = vcombine.low %v917, %v925
      %v943 = vcombine.high %v917, %v925
      %v945 = vunpack.c.l.s4 1934713408
      %v946 = vunpack.c.0.s8 %v945
      %v947 = vlaneseq
      %v948 = vshrl.u32 %v947, 7
      %v949 = vsub.s32 %v946, %v948
      %v950 = vrot.slane %v942, %v949
      %v952 = vunpack.c.l.s4 1934713408
      %v953 = vunpack.c.0.s8 %v952
      %v954 = vlaneseq
      %v955 = vshrl.u32 %v954, 7
      %v956 = vsub.s32 %v953, %v955
      %v957 = vrot.slane %v943, %v956
      %v958 = vcombine.low %v933, %v941
      %v959 = vcombine.high %v933, %v941
      %v961 = vunpack.c.l.s4 1934713408
      %v962 = vunpack.c.0.s8 %v961
      %v963 = vlaneseq
      %v964 = vshrl.u32 %v963, 7
      %v965 = vsub.s32 %v962, %v964
      %v966 = vrot.slane %v958, %v965
      %v968 = vunpack.c.l.s4 1934713408
      %v969 = vunpack.c.0.s8 %v968
      %v970 = vlaneseq
      %v971 = vshrl.u32 %v970, 7
      %v972 = vsub.s32 %v969, %v971
      %v973 = vrot.slane %v959, %v972
      %v974 = vcombine.low %v950, %v966
      %v975 = vcombine.high %v950, %v966
      %v976 = vcombine.low %v957, %v973
      %v977 = vcombine.high %v957, %v973
      %v978 = vpack.c.bf16 %v906, %v906
      %v979 = vpack.c.bf16 %v907, %v907
      %v980 = vpack.c.bf16 %v908, %v908
      %v981 = vpack.c.bf16 %v909, %v909
      %v982 = vpack.c.bf16 %v974, %v974
      %v983 = vpack.c.bf16 %v975, %v975
      %v984 = vpack.c.bf16 %v976, %v976
      %v985 = vpack.c.bf16 %v977, %v977
      %988 = vrot.lane.b32.xlu0 %v678, 120
      %v989 = vpop.permute.xlu0 %988
      %990 = vrot.lane.b32.xlu0 %v681, 120
      %v991 = vpop.permute.xlu0 %990
      %992 = vrot.lane.b32.xlu0 %v678, 112
      %v993 = vpop.permute.xlu0 %992
      %994 = vrot.lane.b32.xlu0 %v681, 112
      %v995 = vpop.permute.xlu0 %994
      %996 = vrot.lane.b32.xlu0 %v678, 104
      %v997 = vpop.permute.xlu0 %996
      %998 = vrot.lane.b32.xlu0 %v681, 104
      %v999 = vpop.permute.xlu0 %998
      %1000 = vrot.lane.b32.xlu0 %v678, 96
      %v1001 = vpop.permute.xlu0 %1000
      %1002 = vrot.lane.b32.xlu0 %v681, 96
      %v1003 = vpop.permute.xlu0 %1002
      %1004 = vrot.lane.b32.xlu0 %v989, 96
      %v1005 = vpop.permute.xlu0 %1004
      %1006 = vrot.lane.b32.xlu0 %v991, 96
      %v1007 = vpop.permute.xlu0 %1006
      %1008 = vrot.lane.b32.xlu0 %v993, 96
      %v1009 = vpop.permute.xlu0 %1008
      %1010 = vrot.lane.b32.xlu0 %v995, 96
      %v1011 = vpop.permute.xlu0 %1010
      %1012 = vrot.lane.b32.xlu0 %v997, 96
      %v1013 = vpop.permute.xlu0 %1012
      %1014 = vrot.lane.b32.xlu0 %v999, 96
      %v1015 = vpop.permute.xlu0 %1014
      %v1024 = vcombine.low %v1001, %v1009
      %v1025 = vcombine.high %v1001, %v1009
      %v1027 = vunpack.c.l.s4 1983009808
      %v1028 = vunpack.c.0.s8 %v1027
      %v1029 = vlaneseq
      %v1030 = vshrl.u32 %v1029, 7
      %v1031 = vsub.s32 %v1028, %v1030
      %v1032 = vrot.slane %v1024, %v1031
      %v1034 = vunpack.c.l.s4 1983009808
      %v1035 = vunpack.c.0.s8 %v1034
      %v1036 = vlaneseq
      %v1037 = vshrl.u32 %v1036, 7
      %v1038 = vsub.s32 %v1035, %v1037
      %v1039 = vrot.slane %v1025, %v1038
      %v1040 = vcombine.low %v1005, %v1013
      %v1041 = vcombine.high %v1005, %v1013
      %v1043 = vunpack.c.l.s4 1983009808
      %v1044 = vunpack.c.0.s8 %v1043
      %v1045 = vlaneseq
      %v1046 = vshrl.u32 %v1045, 7
      %v1047 = vsub.s32 %v1044, %v1046
      %v1048 = vrot.slane %v1040, %v1047
      %v1050 = vunpack.c.l.s4 1983009808
      %v1051 = vunpack.c.0.s8 %v1050
      %v1052 = vlaneseq
      %v1053 = vshrl.u32 %v1052, 7
      %v1054 = vsub.s32 %v1051, %v1053
      %v1055 = vrot.slane %v1041, %v1054
      %v1056 = vcombine.low %v1032, %v1048
      %v1057 = vcombine.high %v1032, %v1048
      %v1059 = vunpack.c.l.s4 1934713408
      %v1060 = vunpack.c.0.s8 %v1059
      %v1061 = vlaneseq
      %v1062 = vshrl.u32 %v1061, 7
      %v1063 = vsub.s32 %v1060, %v1062
      %v1064 = vrot.slane %v1056, %v1063
      %v1066 = vunpack.c.l.s4 1934713408
      %v1067 = vunpack.c.0.s8 %v1066
      %v1068 = vlaneseq
      %v1069 = vshrl.u32 %v1068, 7
      %v1070 = vsub.s32 %v1067, %v1069
      %v1071 = vrot.slane %v1057, %v1070
      %v1072 = vcombine.low %v1039, %v1055
      %v1073 = vcombine.high %v1039, %v1055
      %v1075 = vunpack.c.l.s4 1934713408
      %v1076 = vunpack.c.0.s8 %v1075
      %v1077 = vlaneseq
      %v1078 = vshrl.u32 %v1077, 7
      %v1079 = vsub.s32 %v1076, %v1078
      %v1080 = vrot.slane %v1072, %v1079
      %v1082 = vunpack.c.l.s4 1934713408
      %v1083 = vunpack.c.0.s8 %v1082
      %v1084 = vlaneseq
      %v1085 = vshrl.u32 %v1084, 7
      %v1086 = vsub.s32 %v1083, %v1085
      %v1087 = vrot.slane %v1073, %v1086
      %v1088 = vcombine.high %v1064, 0.0
      %v1089 = vcombine.high %v1071, 0.0
      %v1090 = vcombine.high %v1080, 0.0
      %v1091 = vcombine.high %v1087, 0.0
      %v1092 = vcombine.low %v1003, %v1011
      %v1093 = vcombine.high %v1003, %v1011
      %v1095 = vunpack.c.l.s4 1983009808
      %v1096 = vunpack.c.0.s8 %v1095
      %v1097 = vlaneseq
      %v1098 = vshrl.u32 %v1097, 7
      %v1099 = vsub.s32 %v1096, %v1098
      %v1100 = vrot.slane %v1092, %v1099
      %v1102 = vunpack.c.l.s4 1983009808
      %v1103 = vunpack.c.0.s8 %v1102
      %v1104 = vlaneseq
      %v1105 = vshrl.u32 %v1104, 7
      %v1106 = vsub.s32 %v1103, %v1105
      %v1107 = vrot.slane %v1093, %v1106
      %v1108 = vcombine.low %v1007, %v1015
      %v1109 = vcombine.high %v1007, %v1015
      %v1111 = vunpack.c.l.s4 1983009808
      %v1112 = vunpack.c.0.s8 %v1111
      %v1113 = vlaneseq
      %v1114 = vshrl.u32 %v1113, 7
      %v1115 = vsub.s32 %v1112, %v1114
      %v1116 = vrot.slane %v1108, %v1115
      %v1118 = vunpack.c.l.s4 1983009808
      %v1119 = vunpack.c.0.s8 %v1118
      %v1120 = vlaneseq
      %v1121 = vshrl.u32 %v1120, 7
      %v1122 = vsub.s32 %v1119, %v1121
      %v1123 = vrot.slane %v1109, %v1122
      %v1124 = vcombine.low %v1100, %v1116
      %v1125 = vcombine.high %v1100, %v1116
      %v1127 = vunpack.c.l.s4 1934713408
      %v1128 = vunpack.c.0.s8 %v1127
      %v1129 = vlaneseq
      %v1130 = vshrl.u32 %v1129, 7
      %v1131 = vsub.s32 %v1128, %v1130
      %v1132 = vrot.slane %v1124, %v1131
      %v1134 = vunpack.c.l.s4 1934713408
      %v1135 = vunpack.c.0.s8 %v1134
      %v1136 = vlaneseq
      %v1137 = vshrl.u32 %v1136, 7
      %v1138 = vsub.s32 %v1135, %v1137
      %v1139 = vrot.slane %v1125, %v1138
      %v1140 = vcombine.low %v1107, %v1123
      %v1141 = vcombine.high %v1107, %v1123
      %v1143 = vunpack.c.l.s4 1934713408
      %v1144 = vunpack.c.0.s8 %v1143
      %v1145 = vlaneseq
      %v1146 = vshrl.u32 %v1145, 7
      %v1147 = vsub.s32 %v1144, %v1146
      %v1148 = vrot.slane %v1140, %v1147
      %v1150 = vunpack.c.l.s4 1934713408
      %v1151 = vunpack.c.0.s8 %v1150
      %v1152 = vlaneseq
      %v1153 = vshrl.u32 %v1152, 7
      %v1154 = vsub.s32 %v1151, %v1153
      %v1155 = vrot.slane %v1141, %v1154
      %v1156 = vcombine.high %v1132, 0.0
      %v1157 = vcombine.high %v1139, 0.0
      %v1158 = vcombine.high %v1148, 0.0
      %v1159 = vcombine.high %v1155, 0.0
      %v1160 = vcombine.low %v1064, %v1071
      %v1162 = vunpack.c.l.s4 1983009808
      %v1163 = vunpack.c.0.s8 %v1162
      %v1164 = vlaneseq
      %v1165 = vshrl.u32 %v1164, 7
      %v1166 = vsub.s32 %v1163, %v1165
      %v1167 = vrot.slane %v1160, %v1166
      %v1168 = vcombine.low %v1088, %v1089
      %v1170 = vunpack.c.l.s4 1983009808
      %v1171 = vunpack.c.0.s8 %v1170
      %v1172 = vlaneseq
      %v1173 = vshrl.u32 %v1172, 7
      %v1174 = vsub.s32 %v1171, %v1173
      %v1175 = vrot.slane %v1168, %v1174
      %v1176 = vcombine.low %v1080, %v1087
      %v1178 = vunpack.c.l.s4 1983009808
      %v1179 = vunpack.c.0.s8 %v1178
      %v1180 = vlaneseq
      %v1181 = vshrl.u32 %v1180, 7
      %v1182 = vsub.s32 %v1179, %v1181
      %v1183 = vrot.slane %v1176, %v1182
      %v1184 = vcombine.low %v1090, %v1091
      %v1186 = vunpack.c.l.s4 1983009808
      %v1187 = vunpack.c.0.s8 %v1186
      %v1188 = vlaneseq
      %v1189 = vshrl.u32 %v1188, 7
      %v1190 = vsub.s32 %v1187, %v1189
      %v1191 = vrot.slane %v1184, %v1190
      %v1192 = vcombine.low %v1167, %v1175
      %v1193 = vcombine.high %v1167, %v1175
      %v1195 = vunpack.c.l.s4 1934713408
      %v1196 = vunpack.c.0.s8 %v1195
      %v1197 = vlaneseq
      %v1198 = vshrl.u32 %v1197, 7
      %v1199 = vsub.s32 %v1196, %v1198
      %v1200 = vrot.slane %v1192, %v1199
      %v1202 = vunpack.c.l.s4 1934713408
      %v1203 = vunpack.c.0.s8 %v1202
      %v1204 = vlaneseq
      %v1205 = vshrl.u32 %v1204, 7
      %v1206 = vsub.s32 %v1203, %v1205
      %v1207 = vrot.slane %v1193, %v1206
      %v1208 = vcombine.low %v1183, %v1191
      %v1209 = vcombine.high %v1183, %v1191
      %v1211 = vunpack.c.l.s4 1934713408
      %v1212 = vunpack.c.0.s8 %v1211
      %v1213 = vlaneseq
      %v1214 = vshrl.u32 %v1213, 7
      %v1215 = vsub.s32 %v1212, %v1214
      %v1216 = vrot.slane %v1208, %v1215
      %v1218 = vunpack.c.l.s4 1934713408
      %v1219 = vunpack.c.0.s8 %v1218
      %v1220 = vlaneseq
      %v1221 = vshrl.u32 %v1220, 7
      %v1222 = vsub.s32 %v1219, %v1221
      %v1223 = vrot.slane %v1209, %v1222
      %v1224 = vcombine.low %v1200, %v1216
      %v1225 = vcombine.high %v1200, %v1216
      %v1226 = vcombine.low %v1207, %v1223
      %v1227 = vcombine.high %v1207, %v1223
      %v1228 = vcombine.low %v1132, %v1139
      %v1230 = vunpack.c.l.s4 1983009808
      %v1231 = vunpack.c.0.s8 %v1230
      %v1232 = vlaneseq
      %v1233 = vshrl.u32 %v1232, 7
      %v1234 = vsub.s32 %v1231, %v1233
      %v1235 = vrot.slane %v1228, %v1234
      %v1236 = vcombine.low %v1156, %v1157
      %v1238 = vunpack.c.l.s4 1983009808
      %v1239 = vunpack.c.0.s8 %v1238
      %v1240 = vlaneseq
      %v1241 = vshrl.u32 %v1240, 7
      %v1242 = vsub.s32 %v1239, %v1241
      %v1243 = vrot.slane %v1236, %v1242
      %v1244 = vcombine.low %v1148, %v1155
      %v1246 = vunpack.c.l.s4 1983009808
      %v1247 = vunpack.c.0.s8 %v1246
      %v1248 = vlaneseq
      %v1249 = vshrl.u32 %v1248, 7
      %v1250 = vsub.s32 %v1247, %v1249
      %v1251 = vrot.slane %v1244, %v1250
      %v1252 = vcombine.low %v1158, %v1159
      %v1254 = vunpack.c.l.s4 1983009808
      %v1255 = vunpack.c.0.s8 %v1254
      %v1256 = vlaneseq
      %v1257 = vshrl.u32 %v1256, 7
      %v1258 = vsub.s32 %v1255, %v1257
      %v1259 = vrot.slane %v1252, %v1258
      %v1260 = vcombine.low %v1235, %v1243
      %v1261 = vcombine.high %v1235, %v1243
      %v1263 = vunpack.c.l.s4 1934713408
      %v1264 = vunpack.c.0.s8 %v1263
      %v1265 = vlaneseq
      %v1266 = vshrl.u32 %v1265, 7
      %v1267 = vsub.s32 %v1264, %v1266
      %v1268 = vrot.slane %v1260, %v1267
      %v1270 = vunpack.c.l.s4 1934713408
      %v1271 = vunpack.c.0.s8 %v1270
      %v1272 = vlaneseq
      %v1273 = vshrl.u32 %v1272, 7
      %v1274 = vsub.s32 %v1271, %v1273
      %v1275 = vrot.slane %v1261, %v1274
      %v1276 = vcombine.low %v1251, %v1259
      %v1277 = vcombine.high %v1251, %v1259
      %v1279 = vunpack.c.l.s4 1934713408
      %v1280 = vunpack.c.0.s8 %v1279
      %v1281 = vlaneseq
      %v1282 = vshrl.u32 %v1281, 7
      %v1283 = vsub.s32 %v1280, %v1282
      %v1284 = vrot.slane %v1276, %v1283
      %v1286 = vunpack.c.l.s4 1934713408
      %v1287 = vunpack.c.0.s8 %v1286
      %v1288 = vlaneseq
      %v1289 = vshrl.u32 %v1288, 7
      %v1290 = vsub.s32 %v1287, %v1289
      %v1291 = vrot.slane %v1277, %v1290
      %v1292 = vcombine.low %v1268, %v1284
      %v1293 = vcombine.high %v1268, %v1284
      %v1294 = vcombine.low %v1275, %v1291
      %v1295 = vcombine.high %v1275, %v1291
      %v1296 = vpack.c.bf16 %v1224, %v1224
      %v1297 = vpack.c.bf16 %v1225, %v1225
      %v1298 = vpack.c.bf16 %v1226, %v1226
      %v1299 = vpack.c.bf16 %v1227, %v1227
      %v1300 = vpack.c.bf16 %v1292, %v1292
      %v1301 = vpack.c.bf16 %v1293, %v1293
      %v1302 = vpack.c.bf16 %v1294, %v1294
      %v1303 = vpack.c.bf16 %v1295, %v1295
      %1304 = vrot.lane.b32.xlu0 %v678, 64
      %v1305 = vpop.permute.xlu0 %1304
      %1306 = vrot.lane.b32.xlu0 %v681, 64
      %v1307 = vpop.permute.xlu0 %1306
      %1308 = vrot.lane.b32.xlu0 %v989, 64
      %v1309 = vpop.permute.xlu0 %1308
      %1310 = vrot.lane.b32.xlu0 %v991, 64
      %v1311 = vpop.permute.xlu0 %1310
      %1312 = vrot.lane.b32.xlu0 %v993, 64
      %v1313 = vpop.permute.xlu0 %1312
      %1314 = vrot.lane.b32.xlu0 %v995, 64
      %v1315 = vpop.permute.xlu0 %1314
      %1316 = vrot.lane.b32.xlu0 %v997, 64
      %v1317 = vpop.permute.xlu0 %1316
      %1318 = vrot.lane.b32.xlu0 %v999, 64
      %v1319 = vpop.permute.xlu0 %1318
      %v1328 = vcombine.low %v1305, %v1313
      %v1329 = vcombine.high %v1305, %v1313
      %v1331 = vunpack.c.l.s4 1983009808
      %v1332 = vunpack.c.0.s8 %v1331
      %v1333 = vlaneseq
      %v1334 = vshrl.u32 %v1333, 7
      %v1335 = vsub.s32 %v1332, %v1334
      %v1336 = vrot.slane %v1328, %v1335
      %v1338 = vunpack.c.l.s4 1983009808
      %v1339 = vunpack.c.0.s8 %v1338
      %v1340 = vlaneseq
      %v1341 = vshrl.u32 %v1340, 7
      %v1342 = vsub.s32 %v1339, %v1341
      %v1343 = vrot.slane %v1329, %v1342
      %v1344 = vcombine.low %v1309, %v1317
      %v1345 = vcombine.high %v1309, %v1317
      %v1347 = vunpack.c.l.s4 1983009808
      %v1348 = vunpack.c.0.s8 %v1347
      %v1349 = vlaneseq
      %v1350 = vshrl.u32 %v1349, 7
      %v1351 = vsub.s32 %v1348, %v1350
      %v1352 = vrot.slane %v1344, %v1351
      %v1354 = vunpack.c.l.s4 1983009808
      %v1355 = vunpack.c.0.s8 %v1354
      %v1356 = vlaneseq
      %v1357 = vshrl.u32 %v1356, 7
      %v1358 = vsub.s32 %v1355, %v1357
      %v1359 = vrot.slane %v1345, %v1358
      %v1360 = vcombine.low %v1336, %v1352
      %v1361 = vcombine.high %v1336, %v1352
      %v1363 = vunpack.c.l.s4 1934713408
      %v1364 = vunpack.c.0.s8 %v1363
      %v1365 = vlaneseq
      %v1366 = vshrl.u32 %v1365, 7
      %v1367 = vsub.s32 %v1364, %v1366
      %v1368 = vrot.slane %v1360, %v1367
      %v1370 = vunpack.c.l.s4 1934713408
      %v1371 = vunpack.c.0.s8 %v1370
      %v1372 = vlaneseq
      %v1373 = vshrl.u32 %v1372, 7
      %v1374 = vsub.s32 %v1371, %v1373
      %v1375 = vrot.slane %v1361, %v1374
      %v1376 = vcombine.low %v1343, %v1359
      %v1377 = vcombine.high %v1343, %v1359
      %v1379 = vunpack.c.l.s4 1934713408
      %v1380 = vunpack.c.0.s8 %v1379
      %v1381 = vlaneseq
      %v1382 = vshrl.u32 %v1381, 7
      %v1383 = vsub.s32 %v1380, %v1382
      %v1384 = vrot.slane %v1376, %v1383
      %v1386 = vunpack.c.l.s4 1934713408
      %v1387 = vunpack.c.0.s8 %v1386
      %v1388 = vlaneseq
      %v1389 = vshrl.u32 %v1388, 7
      %v1390 = vsub.s32 %v1387, %v1389
      %v1391 = vrot.slane %v1377, %v1390
      %v1392 = vcombine.high %v1368, 0.0
      %v1393 = vcombine.high %v1375, 0.0
      %v1394 = vcombine.high %v1384, 0.0
      %v1395 = vcombine.high %v1391, 0.0
      %v1396 = vcombine.low %v1307, %v1315
      %v1397 = vcombine.high %v1307, %v1315
      %v1399 = vunpack.c.l.s4 1983009808
      %v1400 = vunpack.c.0.s8 %v1399
      %v1401 = vlaneseq
      %v1402 = vshrl.u32 %v1401, 7
      %v1403 = vsub.s32 %v1400, %v1402
      %v1404 = vrot.slane %v1396, %v1403
      %v1406 = vunpack.c.l.s4 1983009808
      %v1407 = vunpack.c.0.s8 %v1406
      %v1408 = vlaneseq
      %v1409 = vshrl.u32 %v1408, 7
      %v1410 = vsub.s32 %v1407, %v1409
      %v1411 = vrot.slane %v1397, %v1410
      %v1412 = vcombine.low %v1311, %v1319
      %v1413 = vcombine.high %v1311, %v1319
      %v1415 = vunpack.c.l.s4 1983009808
      %v1416 = vunpack.c.0.s8 %v1415
      %v1417 = vlaneseq
      %v1418 = vshrl.u32 %v1417, 7
      %v1419 = vsub.s32 %v1416, %v1418
      %v1420 = vrot.slane %v1412, %v1419
      %v1422 = vunpack.c.l.s4 1983009808
      %v1423 = vunpack.c.0.s8 %v1422
      %v1424 = vlaneseq
      %v1425 = vshrl.u32 %v1424, 7
      %v1426 = vsub.s32 %v1423, %v1425
      %v1427 = vrot.slane %v1413, %v1426
      %v1428 = vcombine.low %v1404, %v1420
      %v1429 = vcombine.high %v1404, %v1420
      %v1431 = vunpack.c.l.s4 1934713408
      %v1432 = vunpack.c.0.s8 %v1431
      %v1433 = vlaneseq
      %v1434 = vshrl.u32 %v1433, 7
      %v1435 = vsub.s32 %v1432, %v1434
      %v1436 = vrot.slane %v1428, %v1435
      %v1438 = vunpack.c.l.s4 1934713408
      %v1439 = vunpack.c.0.s8 %v1438
      %v1440 = vlaneseq
      %v1441 = vshrl.u32 %v1440, 7
      %v1442 = vsub.s32 %v1439, %v1441
      %v1443 = vrot.slane %v1429, %v1442
      %v1444 = vcombine.low %v1411, %v1427
      %v1445 = vcombine.high %v1411, %v1427
      %v1447 = vunpack.c.l.s4 1934713408
      %v1448 = vunpack.c.0.s8 %v1447
      %v1449 = vlaneseq
      %v1450 = vshrl.u32 %v1449, 7
      %v1451 = vsub.s32 %v1448, %v1450
      %v1452 = vrot.slane %v1444, %v1451
      %v1454 = vunpack.c.l.s4 1934713408
      %v1455 = vunpack.c.0.s8 %v1454
      %v1456 = vlaneseq
      %v1457 = vshrl.u32 %v1456, 7
      %v1458 = vsub.s32 %v1455, %v1457
      %v1459 = vrot.slane %v1445, %v1458
      %v1460 = vcombine.high %v1436, 0.0
      %v1461 = vcombine.high %v1443, 0.0
      %v1462 = vcombine.high %v1452, 0.0
      %v1463 = vcombine.high %v1459, 0.0
      %v1464 = vcombine.low %v1368, %v1375
      %v1466 = vunpack.c.l.s4 1983009808
      %v1467 = vunpack.c.0.s8 %v1466
      %v1468 = vlaneseq
      %v1469 = vshrl.u32 %v1468, 7
      %v1470 = vsub.s32 %v1467, %v1469
      %v1471 = vrot.slane %v1464, %v1470
      %v1472 = vcombine.low %v1392, %v1393
      %v1474 = vunpack.c.l.s4 1983009808
      %v1475 = vunpack.c.0.s8 %v1474
      %v1476 = vlaneseq
      %v1477 = vshrl.u32 %v1476, 7
      %v1478 = vsub.s32 %v1475, %v1477
      %v1479 = vrot.slane %v1472, %v1478
      %v1480 = vcombine.low %v1384, %v1391
      %v1482 = vunpack.c.l.s4 1983009808
      %v1483 = vunpack.c.0.s8 %v1482
      %v1484 = vlaneseq
      %v1485 = vshrl.u32 %v1484, 7
      %v1486 = vsub.s32 %v1483, %v1485
      %v1487 = vrot.slane %v1480, %v1486
      %v1488 = vcombine.low %v1394, %v1395
      %v1490 = vunpack.c.l.s4 1983009808
      %v1491 = vunpack.c.0.s8 %v1490
      %v1492 = vlaneseq
      %v1493 = vshrl.u32 %v1492, 7
      %v1494 = vsub.s32 %v1491, %v1493
      %v1495 = vrot.slane %v1488, %v1494
      %v1496 = vcombine.low %v1471, %v1479
      %v1497 = vcombine.high %v1471, %v1479
      %v1499 = vunpack.c.l.s4 1934713408
      %v1500 = vunpack.c.0.s8 %v1499
      %v1501 = vlaneseq
      %v1502 = vshrl.u32 %v1501, 7
      %v1503 = vsub.s32 %v1500, %v1502
      %v1504 = vrot.slane %v1496, %v1503
      %v1506 = vunpack.c.l.s4 1934713408
      %v1507 = vunpack.c.0.s8 %v1506
      %v1508 = vlaneseq
      %v1509 = vshrl.u32 %v1508, 7
      %v1510 = vsub.s32 %v1507, %v1509
      %v1511 = vrot.slane %v1497, %v1510
      %v1512 = vcombine.low %v1487, %v1495
      %v1513 = vcombine.high %v1487, %v1495
      %v1515 = vunpack.c.l.s4 1934713408
      %v1516 = vunpack.c.0.s8 %v1515
      %v1517 = vlaneseq
      %v1518 = vshrl.u32 %v1517, 7
      %v1519 = vsub.s32 %v1516, %v1518
      %v1520 = vrot.slane %v1512, %v1519
      %v1522 = vunpack.c.l.s4 1934713408
      %v1523 = vunpack.c.0.s8 %v1522
      %v1524 = vlaneseq
      %v1525 = vshrl.u32 %v1524, 7
      %v1526 = vsub.s32 %v1523, %v1525
      %v1527 = vrot.slane %v1513, %v1526
      %v1528 = vcombine.low %v1504, %v1520
      %v1529 = vcombine.high %v1504, %v1520
      %v1530 = vcombine.low %v1511, %v1527
      %v1531 = vcombine.high %v1511, %v1527
      %v1532 = vcombine.low %v1436, %v1443
      %v1534 = vunpack.c.l.s4 1983009808
      %v1535 = vunpack.c.0.s8 %v1534
      %v1536 = vlaneseq
      %v1537 = vshrl.u32 %v1536, 7
      %v1538 = vsub.s32 %v1535, %v1537
      %v1539 = vrot.slane %v1532, %v1538
      %v1540 = vcombine.low %v1460, %v1461
      %v1542 = vunpack.c.l.s4 1983009808
      %v1543 = vunpack.c.0.s8 %v1542
      %v1544 = vlaneseq
      %v1545 = vshrl.u32 %v1544, 7
      %v1546 = vsub.s32 %v1543, %v1545
      %v1547 = vrot.slane %v1540, %v1546
      %v1548 = vcombine.low %v1452, %v1459
      %v1550 = vunpack.c.l.s4 1983009808
      %v1551 = vunpack.c.0.s8 %v1550
      %v1552 = vlaneseq
      %v1553 = vshrl.u32 %v1552, 7
      %v1554 = vsub.s32 %v1551, %v1553
      %v1555 = vrot.slane %v1548, %v1554
      %v1556 = vcombine.low %v1462, %v1463
      %v1558 = vunpack.c.l.s4 1983009808
      %v1559 = vunpack.c.0.s8 %v1558
      %v1560 = vlaneseq
      %v1561 = vshrl.u32 %v1560, 7
      %v1562 = vsub.s32 %v1559, %v1561
      %v1563 = vrot.slane %v1556, %v1562
      %v1564 = vcombine.low %v1539, %v1547
      %v1565 = vcombine.high %v1539, %v1547
      %v1567 = vunpack.c.l.s4 1934713408
      %v1568 = vunpack.c.0.s8 %v1567
      %v1569 = vlaneseq
      %v1570 = vshrl.u32 %v1569, 7
      %v1571 = vsub.s32 %v1568, %v1570
      %v1572 = vrot.slane %v1564, %v1571
      %v1574 = vunpack.c.l.s4 1934713408
      %v1575 = vunpack.c.0.s8 %v1574
      %v1576 = vlaneseq
      %v1577 = vshrl.u32 %v1576, 7
      %v1578 = vsub.s32 %v1575, %v1577
      %v1579 = vrot.slane %v1565, %v1578
      %v1580 = vcombine.low %v1555, %v1563
      %v1581 = vcombine.high %v1555, %v1563
      %v1583 = vunpack.c.l.s4 1934713408
      %v1584 = vunpack.c.0.s8 %v1583
      %v1585 = vlaneseq
      %v1586 = vshrl.u32 %v1585, 7
      %v1587 = vsub.s32 %v1584, %v1586
      %v1588 = vrot.slane %v1580, %v1587
      %v1590 = vunpack.c.l.s4 1934713408
      %v1591 = vunpack.c.0.s8 %v1590
      %v1592 = vlaneseq
      %v1593 = vshrl.u32 %v1592, 7
      %v1594 = vsub.s32 %v1591, %v1593
      %v1595 = vrot.slane %v1581, %v1594
      %v1596 = vcombine.low %v1572, %v1588
      %v1597 = vcombine.high %v1572, %v1588
      %v1598 = vcombine.low %v1579, %v1595
      %v1599 = vcombine.high %v1579, %v1595
      %v1600 = vpack.c.bf16 %v1528, %v1528
      %v1601 = vpack.c.bf16 %v1529, %v1529
      %v1602 = vpack.c.bf16 %v1530, %v1530
      %v1603 = vpack.c.bf16 %v1531, %v1531
      %v1604 = vpack.c.bf16 %v1596, %v1596
      %v1605 = vpack.c.bf16 %v1597, %v1597
      %v1606 = vpack.c.bf16 %v1598, %v1598
      %v1607 = vpack.c.bf16 %v1599, %v1599
      %v1608 = vld [vmem:[#allocation2] sm:$0xff]
      %vm1609 = vcmask 64512
      %v1611 = vsel %vm1609, %v978, 0
      %v1614 = vsel %vm1609, %v1296, 0
      %1616 = vmatprep.subr.bf16.mxu0 0
      %1617 = vmatpush1.bf16.xpose.msra.mxu0 0
      %1618 = vmatprep.subr.bf16.mxu0 0
      %1619 = vmatpush1.bf16.xpose.msra.mxu0 0
      %1620 = vmatprep.subr.bf16.mxu0 0
      %1621 = vmatpush1.bf16.xpose.msra.mxu0 0
      %1622 = vmatprep.subr.bf16.mxu0 0
      %1623 = vmatpush1.bf16.xpose.msra.mxu0 0
      %1624 = vmatprep.subr.bf16.mxu0 0
      %1625 = vmatpush1.bf16.xpose.msra.mxu0 0
      %1626 = vmatprep.subr.bf16.mxu0 0
      %1627 = vmatpush1.bf16.xpose.msra.mxu0 0
      %1628 = vmatprep.subr.bf16.mxu0 0
      %1629 = vmatpush1.bf16.xpose.msra.mxu0 0
      %1630 = vmatprep.subr.bf16.mxu0 0
      %1631 = vmatpush1.bf16.xpose.msra.mxu0 %v1614
      %1632 = vmatprep.subr.bf16.mxu0 0
      %1633 = vmatpush2.bf16.xpose.msra.mxu0 0
      %1634 = vmatprep.subr.bf16.mxu0 0
      %1635 = vmatpush2.bf16.xpose.msra.mxu0 0
      %1636 = vmatprep.subr.bf16.mxu0 0
      %1637 = vmatpush2.bf16.xpose.msra.mxu0 0
      %1638 = vmatprep.subr.bf16.mxu0 0
      %1639 = vmatpush2.bf16.xpose.msra.mxu0 0
      %1640 = vmatprep.subr.bf16.mxu0 0
      %1641 = vmatpush2.bf16.xpose.msra.mxu0 0
      %1642 = vmatprep.subr.bf16.mxu0 0
      %1643 = vmatpush2.bf16.xpose.msra.mxu0 0
      %1644 = vmatprep.subr.bf16.mxu0 0
      %1645 = vmatpush2.bf16.xpose.msra.mxu0 0
      %1646 = vmatprep.subr.bf16.mxu0 0
      %1647 = vmatpush2.bf16.xpose.msra.mxu0 0
      %1648 = vmatprep.mubr.bf16.mxu0 0
      %1649 = vmatmul.mubr.bf16.gmra.mxu0 %v1611
      %v1650 = vpop.f32.mrf.mxu0
      %v1651 = vadd.f32 %v1608, %v1650
      %v1652 = vpop.f32.mrf.mxu0
      %v1653 = vpop.f32.mrf.mxu0
      %v1654 = vpop.f32.mrf.mxu0
      %1655 = vdwg.mxu0
      %v1657 = vsel %vm1609, %v979, 0
      %v1660 = vsel %vm1609, %v1297, 0
      %1662 = vmatprep.subr.bf16.mxu0 0
      %1663 = vmatpush1.bf16.xpose.msra.mxu0 0
      %1664 = vmatprep.subr.bf16.mxu0 0
      %1665 = vmatpush1.bf16.xpose.msra.mxu0 0
      %1666 = vmatprep.subr.bf16.mxu0 0
      %1667 = vmatpush1.bf16.xpose.msra.mxu0 0
      %1668 = vmatprep.subr.bf16.mxu0 0
      %1669 = vmatpush1.bf16.xpose.msra.mxu0 0
      %1670 = vmatprep.subr.bf16.mxu0 0
      %1671 = vmatpush1.bf16.xpose.msra.mxu0 0
      %1672 = vmatprep.subr.bf16.mxu0 0
      %1673 = vmatpush1.bf16.xpose.msra.mxu0 0
      %1674 = vmatprep.subr.bf16.mxu0 0
      %1675 = vmatpush1.bf16.xpose.msra.mxu0 0
      %1676 = vmatprep.subr.bf16.mxu0 0
      %1677 = vmatpush1.bf16.xpose.msra.mxu0 %v1660
      %1678 = vmatprep.subr.bf16.mxu0 0
      %1679 = vmatpush2.bf16.xpose.msra.mxu0 0
      %1680 = vmatprep.subr.bf16.mxu0 0
      %1681 = vmatpush2.bf16.xpose.msra.mxu0 0
      %1682 = vmatprep.subr.bf16.mxu0 0
      %1683 = vmatpush2.bf16.xpose.msra.mxu0 0
      %1684 = vmatprep.subr.bf16.mxu0 0
      %1685 = vmatpush2.bf16.xpose.msra.mxu0 0
      %1686 = vmatprep.subr.bf16.mxu0 0
      %1687 = vmatpush2.bf16.xpose.msra.mxu0 0
      %1688 = vmatprep.subr.bf16.mxu0 0
      %1689 = vmatpush2.bf16.xpose.msra.mxu0 0
      %1690 = vmatprep.subr.bf16.mxu0 0
      %1691 = vmatpush2.bf16.xpose.msra.mxu0 0
      %1692 = vmatprep.subr.bf16.mxu0 0
      %1693 = vmatpush2.bf16.xpose.msra.mxu0 0
      %1694 = vmatprep.mubr.bf16.mxu0 0
      %1695 = vmatmul.mubr.bf16.gmra.mxu0 %v1657
      %v1696 = vpop.f32.mrf.mxu0
      %v1697 = vadd.f32 %v1608, %v1696
      %v1698 = vpop.f32.mrf.mxu0
      %v1699 = vpop.f32.mrf.mxu0
      %v1700 = vpop.f32.mrf.mxu0
      %1701 = vdwg.mxu0
      %v1703 = vsel %vm1609, %v980, 0
      %v1706 = vsel %vm1609, %v1298, 0
      %1708 = vmatprep.subr.bf16.mxu0 0
      %1709 = vmatpush1.bf16.xpose.msra.mxu0 0
      %1710 = vmatprep.subr.bf16.mxu0 0
      %1711 = vmatpush1.bf16.xpose.msra.mxu0 0
      %1712 = vmatprep.subr.bf16.mxu0 0
      %1713 = vmatpush1.bf16.xpose.msra.mxu0 0
      %1714 = vmatprep.subr.bf16.mxu0 0
      %1715 = vmatpush1.bf16.xpose.msra.mxu0 0
      %1716 = vmatprep.subr.bf16.mxu0 0
      %1717 = vmatpush1.bf16.xpose.msra.mxu0 0
      %1718 = vmatprep.subr.bf16.mxu0 0
      %1719 = vmatpush1.bf16.xpose.msra.mxu0 0
      %1720 = vmatprep.subr.bf16.mxu0 0
      %1721 = vmatpush1.bf16.xpose.msra.mxu0 0
      %1722 = vmatprep.subr.bf16.mxu0 0
      %1723 = vmatpush1.bf16.xpose.msra.mxu0 %v1706
      %1724 = vmatprep.subr.bf16.mxu0 0
      %1725 = vmatpush2.bf16.xpose.msra.mxu0 0
      %1726 = vmatprep.subr.bf16.mxu0 0
      %1727 = vmatpush2.bf16.xpose.msra.mxu0 0
      %1728 = vmatprep.subr.bf16.mxu0 0
      %1729 = vmatpush2.bf16.xpose.msra.mxu0 0
      %1730 = vmatprep.subr.bf16.mxu0 0
      %1731 = vmatpush2.bf16.xpose.msra.mxu0 0
      %1732 = vmatprep.subr.bf16.mxu0 0
      %1733 = vmatpush2.bf16.xpose.msra.mxu0 0
      %1734 = vmatprep.subr.bf16.mxu0 0
      %1735 = vmatpush2.bf16.xpose.msra.mxu0 0
      %1736 = vmatprep.subr.bf16.mxu0 0
      %1737 = vmatpush2.bf16.xpose.msra.mxu0 0
      %1738 = vmatprep.subr.bf16.mxu0 0
      %1739 = vmatpush2.bf16.xpose.msra.mxu0 0
      %1740 = vmatprep.mubr.bf16.mxu0 0
      %1741 = vmatmul.mubr.bf16.gmra.mxu0 %v1703
      %v1742 = vpop.f32.mrf.mxu0
      %v1743 = vadd.f32 %v1608, %v1742
      %v1744 = vpop.f32.mrf.mxu0
      %v1745 = vpop.f32.mrf.mxu0
      %v1746 = vpop.f32.mrf.mxu0
      %1747 = vdwg.mxu0
      %v1749 = vsel %vm1609, %v981, 0
      %v1752 = vsel %vm1609, %v1299, 0
      %1754 = vmatprep.subr.bf16.mxu0 0
      %1755 = vmatpush1.bf16.xpose.msra.mxu0 0
      %1756 = vmatprep.subr.bf16.mxu0 0
      %1757 = vmatpush1.bf16.xpose.msra.mxu0 0
      %1758 = vmatprep.subr.bf16.mxu0 0
      %1759 = vmatpush1.bf16.xpose.msra.mxu0 0
      %1760 = vmatprep.subr.bf16.mxu0 0
      %1761 = vmatpush1.bf16.xpose.msra.mxu0 0
      %1762 = vmatprep.subr.bf16.mxu0 0
      %1763 = vmatpush1.bf16.xpose.msra.mxu0 0
      %1764 = vmatprep.subr.bf16.mxu0 0
      %1765 = vmatpush1.bf16.xpose.msra.mxu0 0
      %1766 = vmatprep.subr.bf16.mxu0 0
      %1767 = vmatpush1.bf16.xpose.msra.mxu0 0
      %1768 = vmatprep.subr.bf16.mxu0 0
      %1769 = vmatpush1.bf16.xpose.msra.mxu0 %v1752
      %1770 = vmatprep.subr.bf16.mxu0 0
      %1771 = vmatpush2.bf16.xpose.msra.mxu0 0
      %1772 = vmatprep.subr.bf16.mxu0 0
      %1773 = vmatpush2.bf16.xpose.msra.mxu0 0
      %1774 = vmatprep.subr.bf16.mxu0 0
      %1775 = vmatpush2.bf16.xpose.msra.mxu0 0
      %1776 = vmatprep.subr.bf16.mxu0 0
      %1777 = vmatpush2.bf16.xpose.msra.mxu0 0
      %1778 = vmatprep.subr.bf16.mxu0 0
      %1779 = vmatpush2.bf16.xpose.msra.mxu0 0
      %1780 = vmatprep.subr.bf16.mxu0 0
      %1781 = vmatpush2.bf16.xpose.msra.mxu0 0
      %1782 = vmatprep.subr.bf16.mxu0 0
      %1783 = vmatpush2.bf16.xpose.msra.mxu0 0
      %1784 = vmatprep.subr.bf16.mxu0 0
      %1785 = vmatpush2.bf16.xpose.msra.mxu0 0
      %1786 = vmatprep.mubr.bf16.mxu0 0
      %1787 = vmatmul.mubr.bf16.gmra.mxu0 %v1749
      %v1788 = vpop.f32.mrf.mxu0
      %v1789 = vadd.f32 %v1608, %v1788
      %v1790 = vpop.f32.mrf.mxu0
      %v1791 = vpop.f32.mrf.mxu0
      %v1792 = vpop.f32.mrf.mxu0
      %1793 = vdwg.mxu0
      %v1795 = vsel %vm1609, %v982, 0
      %v1798 = vsel %vm1609, %v1300, 0
      %1800 = vmatprep.subr.bf16.mxu0 0
      %1801 = vmatpush1.bf16.xpose.msra.mxu0 0
      %1802 = vmatprep.subr.bf16.mxu0 0
      %1803 = vmatpush1.bf16.xpose.msra.mxu0 0
      %1804 = vmatprep.subr.bf16.mxu0 0
      %1805 = vmatpush1.bf16.xpose.msra.mxu0 0
      %1806 = vmatprep.subr.bf16.mxu0 0
      %1807 = vmatpush1.bf16.xpose.msra.mxu0 0
      %1808 = vmatprep.subr.bf16.mxu0 0
      %1809 = vmatpush1.bf16.xpose.msra.mxu0 0
      %1810 = vmatprep.subr.bf16.mxu0 0
      %1811 = vmatpush1.bf16.xpose.msra.mxu0 0
      %1812 = vmatprep.subr.bf16.mxu0 0
      %1813 = vmatpush1.bf16.xpose.msra.mxu0 0
      %1814 = vmatprep.subr.bf16.mxu0 0
      %1815 = vmatpush1.bf16.xpose.msra.mxu0 %v1798
      %1816 = vmatprep.subr.bf16.mxu0 0
      %1817 = vmatpush2.bf16.xpose.msra.mxu0 0
      %1818 = vmatprep.subr.bf16.mxu0 0
      %1819 = vmatpush2.bf16.xpose.msra.mxu0 0
      %1820 = vmatprep.subr.bf16.mxu0 0
      %1821 = vmatpush2.bf16.xpose.msra.mxu0 0
      %1822 = vmatprep.subr.bf16.mxu0 0
      %1823 = vmatpush2.bf16.xpose.msra.mxu0 0
      %1824 = vmatprep.subr.bf16.mxu0 0
      %1825 = vmatpush2.bf16.xpose.msra.mxu0 0
      %1826 = vmatprep.subr.bf16.mxu0 0
      %1827 = vmatpush2.bf16.xpose.msra.mxu0 0
      %1828 = vmatprep.subr.bf16.mxu0 0
      %1829 = vmatpush2.bf16.xpose.msra.mxu0 0
      %1830 = vmatprep.subr.bf16.mxu0 0
      %1831 = vmatpush2.bf16.xpose.msra.mxu0 0
      %1832 = vmatprep.mubr.bf16.mxu0 0
      %1833 = vmatmul.mubr.bf16.gmra.mxu0 %v1795
      %v1834 = vpop.f32.mrf.mxu0
      %v1835 = vadd.f32 %v1608, %v1834
      %v1836 = vpop.f32.mrf.mxu0
      %v1837 = vpop.f32.mrf.mxu0
      %v1838 = vpop.f32.mrf.mxu0
      %1839 = vdwg.mxu0
      %v1841 = vsel %vm1609, %v983, 0
      %v1844 = vsel %vm1609, %v1301, 0
      %1846 = vmatprep.subr.bf16.mxu0 0
      %1847 = vmatpush1.bf16.xpose.msra.mxu0 0
      %1848 = vmatprep.subr.bf16.mxu0 0
      %1849 = vmatpush1.bf16.xpose.msra.mxu0 0
      %1850 = vmatprep.subr.bf16.mxu0 0
      %1851 = vmatpush1.bf16.xpose.msra.mxu0 0
      %1852 = vmatprep.subr.bf16.mxu0 0
      %1853 = vmatpush1.bf16.xpose.msra.mxu0 0
      %1854 = vmatprep.subr.bf16.mxu0 0
      %1855 = vmatpush1.bf16.xpose.msra.mxu0 0
      %1856 = vmatprep.subr.bf16.mxu0 0
      %1857 = vmatpush1.bf16.xpose.msra.mxu0 0
      %1858 = vmatprep.subr.bf16.mxu0 0
      %1859 = vmatpush1.bf16.xpose.msra.mxu0 0
      %1860 = vmatprep.subr.bf16.mxu0 0
      %1861 = vmatpush1.bf16.xpose.msra.mxu0 %v1844
      %1862 = vmatprep.subr.bf16.mxu0 0
      %1863 = vmatpush2.bf16.xpose.msra.mxu0 0
      %1864 = vmatprep.subr.bf16.mxu0 0
      %1865 = vmatpush2.bf16.xpose.msra.mxu0 0
      %1866 = vmatprep.subr.bf16.mxu0 0
      %1867 = vmatpush2.bf16.xpose.msra.mxu0 0
      %1868 = vmatprep.subr.bf16.mxu0 0
      %1869 = vmatpush2.bf16.xpose.msra.mxu0 0
      %1870 = vmatprep.subr.bf16.mxu0 0
      %1871 = vmatpush2.bf16.xpose.msra.mxu0 0
      %1872 = vmatprep.subr.bf16.mxu0 0
      %1873 = vmatpush2.bf16.xpose.msra.mxu0 0
      %1874 = vmatprep.subr.bf16.mxu0 0
      %1875 = vmatpush2.bf16.xpose.msra.mxu0 0
      %1876 = vmatprep.subr.bf16.mxu0 0
      %1877 = vmatpush2.bf16.xpose.msra.mxu0 0
      %1878 = vmatprep.mubr.bf16.mxu0 0
      %1879 = vmatmul.mubr.bf16.gmra.mxu0 %v1841
      %v1880 = vpop.f32.mrf.mxu0
      %v1881 = vadd.f32 %v1608, %v1880
      %v1882 = vpop.f32.mrf.mxu0
      %v1883 = vpop.f32.mrf.mxu0
      %v1884 = vpop.f32.mrf.mxu0
      %1885 = vdwg.mxu0
      %v1887 = vsel %vm1609, %v984, 0
      %v1890 = vsel %vm1609, %v1302, 0
      %1892 = vmatprep.subr.bf16.mxu0 0
      %1893 = vmatpush1.bf16.xpose.msra.mxu0 0
      %1894 = vmatprep.subr.bf16.mxu0 0
      %1895 = vmatpush1.bf16.xpose.msra.mxu0 0
      %1896 = vmatprep.subr.bf16.mxu0 0
      %1897 = vmatpush1.bf16.xpose.msra.mxu0 0
      %1898 = vmatprep.subr.bf16.mxu0 0
      %1899 = vmatpush1.bf16.xpose.msra.mxu0 0
      %1900 = vmatprep.subr.bf16.mxu0 0
      %1901 = vmatpush1.bf16.xpose.msra.mxu0 0
      %1902 = vmatprep.subr.bf16.mxu0 0
      %1903 = vmatpush1.bf16.xpose.msra.mxu0 0
      %1904 = vmatprep.subr.bf16.mxu0 0
      %1905 = vmatpush1.bf16.xpose.msra.mxu0 0
      %1906 = vmatprep.subr.bf16.mxu0 0
      %1907 = vmatpush1.bf16.xpose.msra.mxu0 %v1890
      %1908 = vmatprep.subr.bf16.mxu0 0
      %1909 = vmatpush2.bf16.xpose.msra.mxu0 0
      %1910 = vmatprep.subr.bf16.mxu0 0
      %1911 = vmatpush2.bf16.xpose.msra.mxu0 0
      %1912 = vmatprep.subr.bf16.mxu0 0
      %1913 = vmatpush2.bf16.xpose.msra.mxu0 0
      %1914 = vmatprep.subr.bf16.mxu0 0
      %1915 = vmatpush2.bf16.xpose.msra.mxu0 0
      %1916 = vmatprep.subr.bf16.mxu0 0
      %1917 = vmatpush2.bf16.xpose.msra.mxu0 0
      %1918 = vmatprep.subr.bf16.mxu0 0
      %1919 = vmatpush2.bf16.xpose.msra.mxu0 0
      %1920 = vmatprep.subr.bf16.mxu0 0
      %1921 = vmatpush2.bf16.xpose.msra.mxu0 0
      %1922 = vmatprep.subr.bf16.mxu0 0
      %1923 = vmatpush2.bf16.xpose.msra.mxu0 0
      %1924 = vmatprep.mubr.bf16.mxu0 0
      %1925 = vmatmul.mubr.bf16.gmra.mxu0 %v1887
      %v1926 = vpop.f32.mrf.mxu0
      %v1927 = vadd.f32 %v1608, %v1926
      %v1928 = vpop.f32.mrf.mxu0
      %v1929 = vpop.f32.mrf.mxu0
      %v1930 = vpop.f32.mrf.mxu0
      %1931 = vdwg.mxu0
      %v1933 = vsel %vm1609, %v985, 0
      %v1936 = vsel %vm1609, %v1303, 0
      %1938 = vmatprep.subr.bf16.mxu0 0
      %1939 = vmatpush1.bf16.xpose.msra.mxu0 0
      %1940 = vmatprep.subr.bf16.mxu0 0
      %1941 = vmatpush1.bf16.xpose.msra.mxu0 0
      %1942 = vmatprep.subr.bf16.mxu0 0
      %1943 = vmatpush1.bf16.xpose.msra.mxu0 0
      %1944 = vmatprep.subr.bf16.mxu0 0
      %1945 = vmatpush1.bf16.xpose.msra.mxu0 0
      %1946 = vmatprep.subr.bf16.mxu0 0
      %1947 = vmatpush1.bf16.xpose.msra.mxu0 0
      %1948 = vmatprep.subr.bf16.mxu0 0
      %1949 = vmatpush1.bf16.xpose.msra.mxu0 0
      %1950 = vmatprep.subr.bf16.mxu0 0
      %1951 = vmatpush1.bf16.xpose.msra.mxu0 0
      %1952 = vmatprep.subr.bf16.mxu0 0
      %1953 = vmatpush1.bf16.xpose.msra.mxu0 %v1936
      %1954 = vmatprep.subr.bf16.mxu0 0
      %1955 = vmatpush2.bf16.xpose.msra.mxu0 0
      %1956 = vmatprep.subr.bf16.mxu0 0
      %1957 = vmatpush2.bf16.xpose.msra.mxu0 0
      %1958 = vmatprep.subr.bf16.mxu0 0
      %1959 = vmatpush2.bf16.xpose.msra.mxu0 0
      %1960 = vmatprep.subr.bf16.mxu0 0
      %1961 = vmatpush2.bf16.xpose.msra.mxu0 0
      %1962 = vmatprep.subr.bf16.mxu0 0
      %1963 = vmatpush2.bf16.xpose.msra.mxu0 0
      %1964 = vmatprep.subr.bf16.mxu0 0
      %1965 = vmatpush2.bf16.xpose.msra.mxu0 0
      %1966 = vmatprep.subr.bf16.mxu0 0
      %1967 = vmatpush2.bf16.xpose.msra.mxu0 0
      %1968 = vmatprep.subr.bf16.mxu0 0
      %1969 = vmatpush2.bf16.xpose.msra.mxu0 0
      %1970 = vmatprep.mubr.bf16.mxu0 0
      %1971 = vmatmul.mubr.bf16.gmra.mxu0 %v1933
      %v1972 = vpop.f32.mrf.mxu0
      %v1973 = vadd.f32 %v1608, %v1972
      %v1974 = vpop.f32.mrf.mxu0
      %v1975 = vpop.f32.mrf.mxu0
      %v1976 = vpop.f32.mrf.mxu0
      %1977 = vdwg.mxu0
      %v1978 = vsel %vm1609, %v1651, -inf
      %1979 = vmax.xlane.f32.xlu0 %v1978
      %v1980 = vpop.xlane.xlu0 %1979
      %v1981 = vsel %vm1609, %v1697, -inf
      %1982 = vmax.xlane.f32.xlu0 %v1981
      %v1983 = vpop.xlane.xlu0 %1982
      %v1984 = vsel %vm1609, %v1743, -inf
      %1985 = vmax.xlane.f32.xlu0 %v1984
      %v1986 = vpop.xlane.xlu0 %1985
      %v1987 = vsel %vm1609, %v1789, -inf
      %1988 = vmax.xlane.f32.xlu0 %v1987
      %v1989 = vpop.xlane.xlu0 %1988
      %v1990 = vsel %vm1609, %v1835, -inf
      %1991 = vmax.xlane.f32.xlu0 %v1990
      %v1992 = vpop.xlane.xlu0 %1991
      %v1993 = vsel %vm1609, %v1881, -inf
      %1994 = vmax.xlane.f32.xlu0 %v1993
      %v1995 = vpop.xlane.xlu0 %1994
      %v1996 = vsel %vm1609, %v1927, -inf
      %1997 = vmax.xlane.f32.xlu0 %v1996
      %v1998 = vpop.xlane.xlu0 %1997
      %v1999 = vsel %vm1609, %v1973, -inf
      %2000 = vmax.xlane.f32.xlu0 %v1999
      %v2001 = vpop.xlane.xlu0 %2000
      %v2002 = vsub.f32 %v1651, %v1980
      %v2003 = vsub.f32 %v1697, %v1983
      %v2004 = vsub.f32 %v1743, %v1986
      %v2005 = vsub.f32 %v1789, %v1989
      %v2006 = vsub.f32 %v1835, %v1992
      %v2007 = vsub.f32 %v1881, %v1995
      %v2008 = vsub.f32 %v1927, %v1998
      %v2009 = vsub.f32 %v1973, %v2001
      %v2010 = vmul.f32 %v2002, 1.442695
      %v2011 = vpow.pop %v2010
      %v2012 = vmul.f32 %v2003, 1.442695
      %v2013 = vpow.pop %v2012
      %v2014 = vmul.f32 %v2004, 1.442695
      %v2015 = vpow.pop %v2014
      %v2016 = vmul.f32 %v2005, 1.442695
      %v2017 = vpow.pop %v2016
      %v2018 = vmul.f32 %v2006, 1.442695
      %v2019 = vpow.pop %v2018
      %v2020 = vmul.f32 %v2007, 1.442695
      %v2021 = vpow.pop %v2020
      %v2022 = vmul.f32 %v2008, 1.442695
      %v2023 = vpow.pop %v2022
      %v2024 = vmul.f32 %v2009, 1.442695
      %v2025 = vpow.pop %v2024
      %v2026 = vsel %vm1609, %v2011, 0.0
      %2027 = vadd.xlane.f32.xlu0 %v2026
      %v2028 = vpop.xlane.xlu0 %2027
      %v2029 = vsel %vm1609, %v2013, 0.0
      %2030 = vadd.xlane.f32.xlu0 %v2029
      %v2031 = vpop.xlane.xlu0 %2030
      %v2032 = vsel %vm1609, %v2015, 0.0
      %2033 = vadd.xlane.f32.xlu0 %v2032
      %v2034 = vpop.xlane.xlu0 %2033
      %v2035 = vsel %vm1609, %v2017, 0.0
      %2036 = vadd.xlane.f32.xlu0 %v2035
      %v2037 = vpop.xlane.xlu0 %2036
      %v2038 = vsel %vm1609, %v2019, 0.0
      %2039 = vadd.xlane.f32.xlu0 %v2038
      %v2040 = vpop.xlane.xlu0 %2039
      %v2041 = vsel %vm1609, %v2021, 0.0
      %2042 = vadd.xlane.f32.xlu0 %v2041
      %v2043 = vpop.xlane.xlu0 %2042
      %v2044 = vsel %vm1609, %v2023, 0.0
      %2045 = vadd.xlane.f32.xlu0 %v2044
      %v2046 = vpop.xlane.xlu0 %2045
      %v2047 = vsel %vm1609, %v2025, 0.0
      %2048 = vadd.xlane.f32.xlu0 %v2047
      %v2049 = vpop.xlane.xlu0 %2048
      %v2050 = vrcp.pop %v2028
      %v2051 = vrcp.pop %v2031
      %v2052 = vrcp.pop %v2034
      %v2053 = vrcp.pop %v2037
      %v2054 = vrcp.pop %v2040
      %v2055 = vrcp.pop %v2043
      %v2056 = vrcp.pop %v2046
      %v2057 = vrcp.pop %v2049
      %v2058 = vmul.f32 %v2011, %v2050
      %v2059 = vmul.f32 %v2013, %v2051
      %v2060 = vmul.f32 %v2015, %v2052
      %v2061 = vmul.f32 %v2017, %v2053
      %v2062 = vmul.f32 %v2019, %v2054
      %v2063 = vmul.f32 %v2021, %v2055
      %v2064 = vmul.f32 %v2023, %v2056
      %v2065 = vmul.f32 %v2025, %v2057
      %v2066 = vpack.c.bf16 %v2058, %v2058
      %v2067 = vpack.c.bf16 %v2059, %v2059
      %v2068 = vpack.c.bf16 %v2060, %v2060
      %v2069 = vpack.c.bf16 %v2061, %v2061
      %v2070 = vpack.c.bf16 %v2062, %v2062
      %v2071 = vpack.c.bf16 %v2063, %v2063
      %v2072 = vpack.c.bf16 %v2064, %v2064
      %v2073 = vpack.c.bf16 %v2065, %v2065
      %v2075 = vsel %vm1609, %v2066, 0
      %vm2077 = vcmask 1043456
      %v2079 = vsel %vm2077, %v1600, 0
      %2081 = vmatprep.subr.bf16.mxu0 0
      %2082 = vmatpush1.bf16.msra.mxu0 0
      %2083 = vmatprep.subr.bf16.mxu0 0
      %2084 = vmatpush1.bf16.msra.mxu0 0
      %2085 = vmatprep.subr.bf16.mxu0 0
      %2086 = vmatpush1.bf16.msra.mxu0 0
      %2087 = vmatprep.subr.bf16.mxu0 0
      %2088 = vmatpush1.bf16.msra.mxu0 0
      %2089 = vmatprep.subr.bf16.mxu0 0
      %2090 = vmatpush1.bf16.msra.mxu0 0
      %2091 = vmatprep.subr.bf16.mxu0 0
      %2092 = vmatpush1.bf16.msra.mxu0 0
      %2093 = vmatprep.subr.bf16.mxu0 0
      %2094 = vmatpush1.bf16.msra.mxu0 0
      %2095 = vmatprep.subr.bf16.mxu0 0
      %2096 = vmatpush1.bf16.msra.mxu0 %v2079
      %2097 = vmatprep.subr.bf16.mxu0 0
      %2098 = vmatpush2.bf16.msra.mxu0 0
      %2099 = vmatprep.subr.bf16.mxu0 0
      %2100 = vmatpush2.bf16.msra.mxu0 0
      %2101 = vmatprep.subr.bf16.mxu0 0
      %2102 = vmatpush2.bf16.msra.mxu0 0
      %2103 = vmatprep.subr.bf16.mxu0 0
      %2104 = vmatpush2.bf16.msra.mxu0 0
      %2105 = vmatprep.subr.bf16.mxu0 0
      %2106 = vmatpush2.bf16.msra.mxu0 0
      %2107 = vmatprep.subr.bf16.mxu0 0
      %2108 = vmatpush2.bf16.msra.mxu0 0
      %2109 = vmatprep.subr.bf16.mxu0 0
      %2110 = vmatpush2.bf16.msra.mxu0 0
      %2111 = vmatprep.subr.bf16.mxu0 0
      %2112 = vmatpush2.bf16.msra.mxu0 0
      %2113 = vmatprep.mubr.bf16.mxu0 0
      %2114 = vmatmul.mubr.bf16.gmra.mxu0 %v2075
      %v2115 = vpop.f32.mrf.mxu0
      %v2116 = vadd.f32 0.0, %v2115
      %v2117 = vpop.f32.mrf.mxu0
      %v2118 = vpop.f32.mrf.mxu0
      %v2119 = vpop.f32.mrf.mxu0
      %2120 = vdwg.mxu0
      %v2122 = vsel %vm1609, %v2067, 0
      %v2125 = vsel %vm2077, %v1601, 0
      %2127 = vmatprep.subr.bf16.mxu0 0
      %2128 = vmatpush1.bf16.msra.mxu0 0
      %2129 = vmatprep.subr.bf16.mxu0 0
      %2130 = vmatpush1.bf16.msra.mxu0 0
      %2131 = vmatprep.subr.bf16.mxu0 0
      %2132 = vmatpush1.bf16.msra.mxu0 0
      %2133 = vmatprep.subr.bf16.mxu0 0
      %2134 = vmatpush1.bf16.msra.mxu0 0
      %2135 = vmatprep.subr.bf16.mxu0 0
      %2136 = vmatpush1.bf16.msra.mxu0 0
      %2137 = vmatprep.subr.bf16.mxu0 0
      %2138 = vmatpush1.bf16.msra.mxu0 0
      %2139 = vmatprep.subr.bf16.mxu0 0
      %2140 = vmatpush1.bf16.msra.mxu0 0
      %2141 = vmatprep.subr.bf16.mxu0 0
      %2142 = vmatpush1.bf16.msra.mxu0 %v2125
      %2143 = vmatprep.subr.bf16.mxu0 0
      %2144 = vmatpush2.bf16.msra.mxu0 0
      %2145 = vmatprep.subr.bf16.mxu0 0
      %2146 = vmatpush2.bf16.msra.mxu0 0
      %2147 = vmatprep.subr.bf16.mxu0 0
      %2148 = vmatpush2.bf16.msra.mxu0 0
      %2149 = vmatprep.subr.bf16.mxu0 0
      %2150 = vmatpush2.bf16.msra.mxu0 0
      %2151 = vmatprep.subr.bf16.mxu0 0
      %2152 = vmatpush2.bf16.msra.mxu0 0
      %2153 = vmatprep.subr.bf16.mxu0 0
      %2154 = vmatpush2.bf16.msra.mxu0 0
      %2155 = vmatprep.subr.bf16.mxu0 0
      %2156 = vmatpush2.bf16.msra.mxu0 0
      %2157 = vmatprep.subr.bf16.mxu0 0
      %2158 = vmatpush2.bf16.msra.mxu0 0
      %2159 = vmatprep.mubr.bf16.mxu0 0
      %2160 = vmatmul.mubr.bf16.gmra.mxu0 %v2122
      %v2161 = vpop.f32.mrf.mxu0
      %v2162 = vadd.f32 0.0, %v2161
      %v2163 = vpop.f32.mrf.mxu0
      %v2164 = vpop.f32.mrf.mxu0
      %v2165 = vpop.f32.mrf.mxu0
      %2166 = vdwg.mxu0
      %v2168 = vsel %vm1609, %v2068, 0
      %v2171 = vsel %vm2077, %v1602, 0
      %2173 = vmatprep.subr.bf16.mxu0 0
      %2174 = vmatpush1.bf16.msra.mxu0 0
      %2175 = vmatprep.subr.bf16.mxu0 0
      %2176 = vmatpush1.bf16.msra.mxu0 0
      %2177 = vmatprep.subr.bf16.mxu0 0
      %2178 = vmatpush1.bf16.msra.mxu0 0
      %2179 = vmatprep.subr.bf16.mxu0 0
      %2180 = vmatpush1.bf16.msra.mxu0 0
      %2181 = vmatprep.subr.bf16.mxu0 0
      %2182 = vmatpush1.bf16.msra.mxu0 0
      %2183 = vmatprep.subr.bf16.mxu0 0
      %2184 = vmatpush1.bf16.msra.mxu0 0
      %2185 = vmatprep.subr.bf16.mxu0 0
      %2186 = vmatpush1.bf16.msra.mxu0 0
      %2187 = vmatprep.subr.bf16.mxu0 0
      %2188 = vmatpush1.bf16.msra.mxu0 %v2171
      %2189 = vmatprep.subr.bf16.mxu0 0
      %2190 = vmatpush2.bf16.msra.mxu0 0
      %2191 = vmatprep.subr.bf16.mxu0 0
      %2192 = vmatpush2.bf16.msra.mxu0 0
      %2193 = vmatprep.subr.bf16.mxu0 0
      %2194 = vmatpush2.bf16.msra.mxu0 0
      %2195 = vmatprep.subr.bf16.mxu0 0
      %2196 = vmatpush2.bf16.msra.mxu0 0
      %2197 = vmatprep.subr.bf16.mxu0 0
      %2198 = vmatpush2.bf16.msra.mxu0 0
      %2199 = vmatprep.subr.bf16.mxu0 0
      %2200 = vmatpush2.bf16.msra.mxu0 0
      %2201 = vmatprep.subr.bf16.mxu0 0
      %2202 = vmatpush2.bf16.msra.mxu0 0
      %2203 = vmatprep.subr.bf16.mxu0 0
      %2204 = vmatpush2.bf16.msra.mxu0 0
      %2205 = vmatprep.mubr.bf16.mxu0 0
      %2206 = vmatmul.mubr.bf16.gmra.mxu0 %v2168
      %v2207 = vpop.f32.mrf.mxu0
      %v2208 = vadd.f32 0.0, %v2207
      %v2209 = vpop.f32.mrf.mxu0
      %v2210 = vpop.f32.mrf.mxu0
      %v2211 = vpop.f32.mrf.mxu0
      %2212 = vdwg.mxu0
      %v2214 = vsel %vm1609, %v2069, 0
      %v2217 = vsel %vm2077, %v1603, 0
      %2219 = vmatprep.subr.bf16.mxu0 0
      %2220 = vmatpush1.bf16.msra.mxu0 0
      %2221 = vmatprep.subr.bf16.mxu0 0
      %2222 = vmatpush1.bf16.msra.mxu0 0
      %2223 = vmatprep.subr.bf16.mxu0 0
      %2224 = vmatpush1.bf16.msra.mxu0 0
      %2225 = vmatprep.subr.bf16.mxu0 0
      %2226 = vmatpush1.bf16.msra.mxu0 0
      %2227 = vmatprep.subr.bf16.mxu0 0
      %2228 = vmatpush1.bf16.msra.mxu0 0
      %2229 = vmatprep.subr.bf16.mxu0 0
      %2230 = vmatpush1.bf16.msra.mxu0 0
      %2231 = vmatprep.subr.bf16.mxu0 0
      %2232 = vmatpush1.bf16.msra.mxu0 0
      %2233 = vmatprep.subr.bf16.mxu0 0
      %2234 = vmatpush1.bf16.msra.mxu0 %v2217
      %2235 = vmatprep.subr.bf16.mxu0 0
      %2236 = vmatpush2.bf16.msra.mxu0 0
      %2237 = vmatprep.subr.bf16.mxu0 0
      %2238 = vmatpush2.bf16.msra.mxu0 0
      %2239 = vmatprep.subr.bf16.mxu0 0
      %2240 = vmatpush2.bf16.msra.mxu0 0
      %2241 = vmatprep.subr.bf16.mxu0 0
      %2242 = vmatpush2.bf16.msra.mxu0 0
      %2243 = vmatprep.subr.bf16.mxu0 0
      %2244 = vmatpush2.bf16.msra.mxu0 0
      %2245 = vmatprep.subr.bf16.mxu0 0
      %2246 = vmatpush2.bf16.msra.mxu0 0
      %2247 = vmatprep.subr.bf16.mxu0 0
      %2248 = vmatpush2.bf16.msra.mxu0 0
      %2249 = vmatprep.subr.bf16.mxu0 0
      %2250 = vmatpush2.bf16.msra.mxu0 0
      %2251 = vmatprep.mubr.bf16.mxu0 0
      %2252 = vmatmul.mubr.bf16.gmra.mxu0 %v2214
      %v2253 = vpop.f32.mrf.mxu0
      %v2254 = vadd.f32 0.0, %v2253
      %v2255 = vpop.f32.mrf.mxu0
      %v2256 = vpop.f32.mrf.mxu0
      %v2257 = vpop.f32.mrf.mxu0
      %2258 = vdwg.mxu0
      %v2260 = vsel %vm1609, %v2070, 0
      %v2263 = vsel %vm2077, %v1604, 0
      %2265 = vmatprep.subr.bf16.mxu0 0
      %2266 = vmatpush1.bf16.msra.mxu0 0
      %2267 = vmatprep.subr.bf16.mxu0 0
      %2268 = vmatpush1.bf16.msra.mxu0 0
      %2269 = vmatprep.subr.bf16.mxu0 0
      %2270 = vmatpush1.bf16.msra.mxu0 0
      %2271 = vmatprep.subr.bf16.mxu0 0
      %2272 = vmatpush1.bf16.msra.mxu0 0
      %2273 = vmatprep.subr.bf16.mxu0 0
      %2274 = vmatpush1.bf16.msra.mxu0 0
      %2275 = vmatprep.subr.bf16.mxu0 0
      %2276 = vmatpush1.bf16.msra.mxu0 0
      %2277 = vmatprep.subr.bf16.mxu0 0
      %2278 = vmatpush1.bf16.msra.mxu0 0
      %2279 = vmatprep.subr.bf16.mxu0 0
      %2280 = vmatpush1.bf16.msra.mxu0 %v2263
      %2281 = vmatprep.subr.bf16.mxu0 0
      %2282 = vmatpush2.bf16.msra.mxu0 0
      %2283 = vmatprep.subr.bf16.mxu0 0
      %2284 = vmatpush2.bf16.msra.mxu0 0
      %2285 = vmatprep.subr.bf16.mxu0 0
      %2286 = vmatpush2.bf16.msra.mxu0 0
      %2287 = vmatprep.subr.bf16.mxu0 0
      %2288 = vmatpush2.bf16.msra.mxu0 0
      %2289 = vmatprep.subr.bf16.mxu0 0
      %2290 = vmatpush2.bf16.msra.mxu0 0
      %2291 = vmatprep.subr.bf16.mxu0 0
      %2292 = vmatpush2.bf16.msra.mxu0 0
      %2293 = vmatprep.subr.bf16.mxu0 0
      %2294 = vmatpush2.bf16.msra.mxu0 0
      %2295 = vmatprep.subr.bf16.mxu0 0
      %2296 = vmatpush2.bf16.msra.mxu0 0
      %2297 = vmatprep.mubr.bf16.mxu0 0
      %2298 = vmatmul.mubr.bf16.gmra.mxu0 %v2260
      %v2299 = vpop.f32.mrf.mxu0
      %v2300 = vadd.f32 0.0, %v2299
      %v2301 = vpop.f32.mrf.mxu0
      %v2302 = vpop.f32.mrf.mxu0
      %v2303 = vpop.f32.mrf.mxu0
      %2304 = vdwg.mxu0
      %v2306 = vsel %vm1609, %v2071, 0
      %v2309 = vsel %vm2077, %v1605, 0
      %2311 = vmatprep.subr.bf16.mxu0 0
      %2312 = vmatpush1.bf16.msra.mxu0 0
      %2313 = vmatprep.subr.bf16.mxu0 0
      %2314 = vmatpush1.bf16.msra.mxu0 0
      %2315 = vmatprep.subr.bf16.mxu0 0
      %2316 = vmatpush1.bf16.msra.mxu0 0
      %2317 = vmatprep.subr.bf16.mxu0 0
      %2318 = vmatpush1.bf16.msra.mxu0 0
      %2319 = vmatprep.subr.bf16.mxu0 0
      %2320 = vmatpush1.bf16.msra.mxu0 0
      %2321 = vmatprep.subr.bf16.mxu0 0
      %2322 = vmatpush1.bf16.msra.mxu0 0
      %2323 = vmatprep.subr.bf16.mxu0 0
      %2324 = vmatpush1.bf16.msra.mxu0 0
      %2325 = vmatprep.subr.bf16.mxu0 0
      %2326 = vmatpush1.bf16.msra.mxu0 %v2309
      %2327 = vmatprep.subr.bf16.mxu0 0
      %2328 = vmatpush2.bf16.msra.mxu0 0
      %2329 = vmatprep.subr.bf16.mxu0 0
      %2330 = vmatpush2.bf16.msra.mxu0 0
      %2331 = vmatprep.subr.bf16.mxu0 0
      %2332 = vmatpush2.bf16.msra.mxu0 0
      %2333 = vmatprep.subr.bf16.mxu0 0
      %2334 = vmatpush2.bf16.msra.mxu0 0
      %2335 = vmatprep.subr.bf16.mxu0 0
      %2336 = vmatpush2.bf16.msra.mxu0 0
      %2337 = vmatprep.subr.bf16.mxu0 0
      %2338 = vmatpush2.bf16.msra.mxu0 0
      %2339 = vmatprep.subr.bf16.mxu0 0
      %2340 = vmatpush2.bf16.msra.mxu0 0
      %2341 = vmatprep.subr.bf16.mxu0 0
      %2342 = vmatpush2.bf16.msra.mxu0 0
      %2343 = vmatprep.mubr.bf16.mxu0 0
      %2344 = vmatmul.mubr.bf16.gmra.mxu0 %v2306
      %v2345 = vpop.f32.mrf.mxu0
      %v2346 = vadd.f32 0.0, %v2345
      %v2347 = vpop.f32.mrf.mxu0
      %v2348 = vpop.f32.mrf.mxu0
      %v2349 = vpop.f32.mrf.mxu0
      %2350 = vdwg.mxu0
      %v2352 = vsel %vm1609, %v2072, 0
      %v2355 = vsel %vm2077, %v1606, 0
      %2357 = vmatprep.subr.bf16.mxu0 0
      %2358 = vmatpush1.bf16.msra.mxu0 0
      %2359 = vmatprep.subr.bf16.mxu0 0
      %2360 = vmatpush1.bf16.msra.mxu0 0
      %2361 = vmatprep.subr.bf16.mxu0 0
      %2362 = vmatpush1.bf16.msra.mxu0 0
      %2363 = vmatprep.subr.bf16.mxu0 0
      %2364 = vmatpush1.bf16.msra.mxu0 0
      %2365 = vmatprep.subr.bf16.mxu0 0
      %2366 = vmatpush1.bf16.msra.mxu0 0
      %2367 = vmatprep.subr.bf16.mxu0 0
      %2368 = vmatpush1.bf16.msra.mxu0 0
      %2369 = vmatprep.subr.bf16.mxu0 0
      %2370 = vmatpush1.bf16.msra.mxu0 0
      %2371 = vmatprep.subr.bf16.mxu0 0
      %2372 = vmatpush1.bf16.msra.mxu0 %v2355
      %2373 = vmatprep.subr.bf16.mxu0 0
      %2374 = vmatpush2.bf16.msra.mxu0 0
      %2375 = vmatprep.subr.bf16.mxu0 0
      %2376 = vmatpush2.bf16.msra.mxu0 0
      %2377 = vmatprep.subr.bf16.mxu0 0
      %2378 = vmatpush2.bf16.msra.mxu0 0
      %2379 = vmatprep.subr.bf16.mxu0 0
      %2380 = vmatpush2.bf16.msra.mxu0 0
      %2381 = vmatprep.subr.bf16.mxu0 0
      %2382 = vmatpush2.bf16.msra.mxu0 0
      %2383 = vmatprep.subr.bf16.mxu0 0
      %2384 = vmatpush2.bf16.msra.mxu0 0
      %2385 = vmatprep.subr.bf16.mxu0 0
      %2386 = vmatpush2.bf16.msra.mxu0 0
      %2387 = vmatprep.subr.bf16.mxu0 0
      %2388 = vmatpush2.bf16.msra.mxu0 0
      %2389 = vmatprep.mubr.bf16.mxu0 0
      %2390 = vmatmul.mubr.bf16.gmra.mxu0 %v2352
      %v2391 = vpop.f32.mrf.mxu0
      %v2392 = vadd.f32 0.0, %v2391
      %v2393 = vpop.f32.mrf.mxu0
      %v2394 = vpop.f32.mrf.mxu0
      %v2395 = vpop.f32.mrf.mxu0
      %2396 = vdwg.mxu0
      %v2398 = vsel %vm1609, %v2073, 0
      %v2401 = vsel %vm2077, %v1607, 0
      %2403 = vmatprep.subr.bf16.mxu0 0
      %2404 = vmatpush1.bf16.msra.mxu0 0
      %2405 = vmatprep.subr.bf16.mxu0 0
      %2406 = vmatpush1.bf16.msra.mxu0 0
      %2407 = vmatprep.subr.bf16.mxu0 0
      %2408 = vmatpush1.bf16.msra.mxu0 0
      %2409 = vmatprep.subr.bf16.mxu0 0
      %2410 = vmatpush1.bf16.msra.mxu0 0
      %2411 = vmatprep.subr.bf16.mxu0 0
      %2412 = vmatpush1.bf16.msra.mxu0 0
      %2413 = vmatprep.subr.bf16.mxu0 0
      %2414 = vmatpush1.bf16.msra.mxu0 0
      %2415 = vmatprep.subr.bf16.mxu0 0
      %2416 = vmatpush1.bf16.msra.mxu0 0
      %2417 = vmatprep.subr.bf16.mxu0 0
      %2418 = vmatpush1.bf16.msra.mxu0 %v2401
      %2419 = vmatprep.subr.bf16.mxu0 0
      %2420 = vmatpush2.bf16.msra.mxu0 0
      %2421 = vmatprep.subr.bf16.mxu0 0
      %2422 = vmatpush2.bf16.msra.mxu0 0
      %2423 = vmatprep.subr.bf16.mxu0 0
      %2424 = vmatpush2.bf16.msra.mxu0 0
      %2425 = vmatprep.subr.bf16.mxu0 0
      %2426 = vmatpush2.bf16.msra.mxu0 0
      %2427 = vmatprep.subr.bf16.mxu0 0
      %2428 = vmatpush2.bf16.msra.mxu0 0
      %2429 = vmatprep.subr.bf16.mxu0 0
      %2430 = vmatpush2.bf16.msra.mxu0 0
      %2431 = vmatprep.subr.bf16.mxu0 0
      %2432 = vmatpush2.bf16.msra.mxu0 0
      %2433 = vmatprep.subr.bf16.mxu0 0
      %2434 = vmatpush2.bf16.msra.mxu0 0
      %2435 = vmatprep.mubr.bf16.mxu0 0
      %2436 = vmatmul.mubr.bf16.gmra.mxu0 %v2398
      %v2437 = vpop.f32.mrf.mxu0
      %v2438 = vadd.f32 0.0, %v2437
      %v2439 = vpop.f32.mrf.mxu0
      %v2440 = vpop.f32.mrf.mxu0
      %v2441 = vpop.f32.mrf.mxu0
      %2442 = vdwg.mxu0
      %v2443 = vcombine.low %v2116, %v2208
      %v2444 = vcombine.high %v2116, %v2208
      %v2446 = vunpack.c.l.s4 1983009808
      %v2447 = vunpack.c.0.s8 %v2446
      %v2448 = vlaneseq
      %v2449 = vshrl.u32 %v2448, 7
      %v2450 = vsub.s32 %v2447, %v2449
      %v2451 = vrot.slane %v2443, %v2450
      %v2453 = vunpack.c.l.s4 1983009808
      %v2454 = vunpack.c.0.s8 %v2453
      %v2455 = vlaneseq
      %v2456 = vshrl.u32 %v2455, 7
      %v2457 = vsub.s32 %v2454, %v2456
      %v2458 = vrot.slane %v2444, %v2457
      %v2459 = vcombine.low %v2162, %v2254
      %v2460 = vcombine.high %v2162, %v2254
      %v2462 = vunpack.c.l.s4 1983009808
      %v2463 = vunpack.c.0.s8 %v2462
      %v2464 = vlaneseq
      %v2465 = vshrl.u32 %v2464, 7
      %v2466 = vsub.s32 %v2463, %v2465
      %v2467 = vrot.slane %v2459, %v2466
      %v2469 = vunpack.c.l.s4 1983009808
      %v2470 = vunpack.c.0.s8 %v2469
      %v2471 = vlaneseq
      %v2472 = vshrl.u32 %v2471, 7
      %v2473 = vsub.s32 %v2470, %v2472
      %v2474 = vrot.slane %v2460, %v2473
      %v2475 = vcombine.low %v2451, %v2467
      %v2476 = vcombine.high %v2451, %v2467
      %v2478 = vunpack.c.l.s4 1934713408
      %v2479 = vunpack.c.0.s8 %v2478
      %v2480 = vlaneseq
      %v2481 = vshrl.u32 %v2480, 7
      %v2482 = vsub.s32 %v2479, %v2481
      %v2483 = vrot.slane %v2475, %v2482
      %v2485 = vunpack.c.l.s4 1934713408
      %v2486 = vunpack.c.0.s8 %v2485
      %v2487 = vlaneseq
      %v2488 = vshrl.u32 %v2487, 7
      %v2489 = vsub.s32 %v2486, %v2488
      %v2490 = vrot.slane %v2476, %v2489
      %v2491 = vcombine.low %v2458, %v2474
      %v2492 = vcombine.high %v2458, %v2474
      %v2494 = vunpack.c.l.s4 1934713408
      %v2495 = vunpack.c.0.s8 %v2494
      %v2496 = vlaneseq
      %v2497 = vshrl.u32 %v2496, 7
      %v2498 = vsub.s32 %v2495, %v2497
      %v2499 = vrot.slane %v2491, %v2498
      %v2501 = vunpack.c.l.s4 1934713408
      %v2502 = vunpack.c.0.s8 %v2501
      %v2503 = vlaneseq
      %v2504 = vshrl.u32 %v2503, 7
      %v2505 = vsub.s32 %v2502, %v2504
      %v2506 = vrot.slane %v2492, %v2505
      %v2507 = vcombine.high %v2483, 0.0
      %v2508 = vcombine.high %v2490, 0.0
      %v2509 = vcombine.high %v2499, 0.0
      %v2510 = vcombine.high %v2506, 0.0
      %v2511 = vcombine.low %v2300, %v2392
      %v2512 = vcombine.high %v2300, %v2392
      %v2514 = vunpack.c.l.s4 1983009808
      %v2515 = vunpack.c.0.s8 %v2514
      %v2516 = vlaneseq
      %v2517 = vshrl.u32 %v2516, 7
      %v2518 = vsub.s32 %v2515, %v2517
      %v2519 = vrot.slane %v2511, %v2518
      %v2521 = vunpack.c.l.s4 1983009808
      %v2522 = vunpack.c.0.s8 %v2521
      %v2523 = vlaneseq
      %v2524 = vshrl.u32 %v2523, 7
      %v2525 = vsub.s32 %v2522, %v2524
      %v2526 = vrot.slane %v2512, %v2525
      %v2527 = vcombine.low %v2346, %v2438
      %v2528 = vcombine.high %v2346, %v2438
      %v2530 = vunpack.c.l.s4 1983009808
      %v2531 = vunpack.c.0.s8 %v2530
      %v2532 = vlaneseq
      %v2533 = vshrl.u32 %v2532, 7
      %v2534 = vsub.s32 %v2531, %v2533
      %v2535 = vrot.slane %v2527, %v2534
      %v2537 = vunpack.c.l.s4 1983009808
      %v2538 = vunpack.c.0.s8 %v2537
      %v2539 = vlaneseq
      %v2540 = vshrl.u32 %v2539, 7
      %v2541 = vsub.s32 %v2538, %v2540
      %v2542 = vrot.slane %v2528, %v2541
      %v2543 = vcombine.low %v2519, %v2535
      %v2544 = vcombine.high %v2519, %v2535
      %v2546 = vunpack.c.l.s4 1934713408
      %v2547 = vunpack.c.0.s8 %v2546
      %v2548 = vlaneseq
      %v2549 = vshrl.u32 %v2548, 7
      %v2550 = vsub.s32 %v2547, %v2549
      %v2551 = vrot.slane %v2543, %v2550
      %v2553 = vunpack.c.l.s4 1934713408
      %v2554 = vunpack.c.0.s8 %v2553
      %v2555 = vlaneseq
      %v2556 = vshrl.u32 %v2555, 7
      %v2557 = vsub.s32 %v2554, %v2556
      %v2558 = vrot.slane %v2544, %v2557
      %v2559 = vcombine.low %v2526, %v2542
      %v2560 = vcombine.high %v2526, %v2542
      %v2562 = vunpack.c.l.s4 1934713408
      %v2563 = vunpack.c.0.s8 %v2562
      %v2564 = vlaneseq
      %v2565 = vshrl.u32 %v2564, 7
      %v2566 = vsub.s32 %v2563, %v2565
      %v2567 = vrot.slane %v2559, %v2566
      %v2569 = vunpack.c.l.s4 1934713408
      %v2570 = vunpack.c.0.s8 %v2569
      %v2571 = vlaneseq
      %v2572 = vshrl.u32 %v2571, 7
      %v2573 = vsub.s32 %v2570, %v2572
      %v2574 = vrot.slane %v2560, %v2573
      %v2575 = vcombine.high %v2551, 0.0
      %v2576 = vcombine.high %v2558, 0.0
      %v2577 = vcombine.high %v2567, 0.0
      %v2578 = vcombine.high %v2574, 0.0
      %v2579 = vcombine.low %v2483, %v2490
      %v2581 = vunpack.c.l.s4 1983009808
      %v2582 = vunpack.c.0.s8 %v2581
      %v2583 = vlaneseq
      %v2584 = vshrl.u32 %v2583, 7
      %v2585 = vsub.s32 %v2582, %v2584
      %v2586 = vrot.slane %v2579, %v2585
      %v2587 = vcombine.low %v2507, %v2508
      %v2589 = vunpack.c.l.s4 1983009808
      %v2590 = vunpack.c.0.s8 %v2589
      %v2591 = vlaneseq
      %v2592 = vshrl.u32 %v2591, 7
      %v2593 = vsub.s32 %v2590, %v2592
      %v2594 = vrot.slane %v2587, %v2593
      %v2595 = vcombine.low %v2499, %v2506
      %v2597 = vunpack.c.l.s4 1983009808
      %v2598 = vunpack.c.0.s8 %v2597
      %v2599 = vlaneseq
      %v2600 = vshrl.u32 %v2599, 7
      %v2601 = vsub.s32 %v2598, %v2600
      %v2602 = vrot.slane %v2595, %v2601
      %v2603 = vcombine.low %v2509, %v2510
      %v2605 = vunpack.c.l.s4 1983009808
      %v2606 = vunpack.c.0.s8 %v2605
      %v2607 = vlaneseq
      %v2608 = vshrl.u32 %v2607, 7
      %v2609 = vsub.s32 %v2606, %v2608
      %v2610 = vrot.slane %v2603, %v2609
      %v2611 = vcombine.low %v2586, %v2594
      %v2612 = vcombine.high %v2586, %v2594
      %v2614 = vunpack.c.l.s4 1934713408
      %v2615 = vunpack.c.0.s8 %v2614
      %v2616 = vlaneseq
      %v2617 = vshrl.u32 %v2616, 7
      %v2618 = vsub.s32 %v2615, %v2617
      %v2619 = vrot.slane %v2611, %v2618
      %v2621 = vunpack.c.l.s4 1934713408
      %v2622 = vunpack.c.0.s8 %v2621
      %v2623 = vlaneseq
      %v2624 = vshrl.u32 %v2623, 7
      %v2625 = vsub.s32 %v2622, %v2624
      %v2626 = vrot.slane %v2612, %v2625
      %v2627 = vcombine.low %v2602, %v2610
      %v2628 = vcombine.high %v2602, %v2610
      %v2630 = vunpack.c.l.s4 1934713408
      %v2631 = vunpack.c.0.s8 %v2630
      %v2632 = vlaneseq
      %v2633 = vshrl.u32 %v2632, 7
      %v2634 = vsub.s32 %v2631, %v2633
      %v2635 = vrot.slane %v2627, %v2634
      %v2637 = vunpack.c.l.s4 1934713408
      %v2638 = vunpack.c.0.s8 %v2637
      %v2639 = vlaneseq
      %v2640 = vshrl.u32 %v2639, 7
      %v2641 = vsub.s32 %v2638, %v2640
      %v2642 = vrot.slane %v2628, %v2641
      %v2643 = vcombine.low %v2619, %v2635
      %v2644 = vcombine.high %v2619, %v2635
      %v2645 = vcombine.low %v2626, %v2642
      %v2646 = vcombine.high %v2626, %v2642
      %v2647 = vcombine.low %v2551, %v2558
      %v2649 = vunpack.c.l.s4 1983009808
      %v2650 = vunpack.c.0.s8 %v2649
      %v2651 = vlaneseq
      %v2652 = vshrl.u32 %v2651, 7
      %v2653 = vsub.s32 %v2650, %v2652
      %v2654 = vrot.slane %v2647, %v2653
      %v2655 = vcombine.low %v2575, %v2576
      %v2657 = vunpack.c.l.s4 1983009808
      %v2658 = vunpack.c.0.s8 %v2657
      %v2659 = vlaneseq
      %v2660 = vshrl.u32 %v2659, 7
      %v2661 = vsub.s32 %v2658, %v2660
      %v2662 = vrot.slane %v2655, %v2661
      %v2663 = vcombine.low %v2567, %v2574
      %v2665 = vunpack.c.l.s4 1983009808
      %v2666 = vunpack.c.0.s8 %v2665
      %v2667 = vlaneseq
      %v2668 = vshrl.u32 %v2667, 7
      %v2669 = vsub.s32 %v2666, %v2668
      %v2670 = vrot.slane %v2663, %v2669
      %v2671 = vcombine.low %v2577, %v2578
      %v2673 = vunpack.c.l.s4 1983009808
      %v2674 = vunpack.c.0.s8 %v2673
      %v2675 = vlaneseq
      %v2676 = vshrl.u32 %v2675, 7
      %v2677 = vsub.s32 %v2674, %v2676
      %v2678 = vrot.slane %v2671, %v2677
      %v2679 = vcombine.low %v2654, %v2662
      %v2680 = vcombine.high %v2654, %v2662
      %v2682 = vunpack.c.l.s4 1934713408
      %v2683 = vunpack.c.0.s8 %v2682
      %v2684 = vlaneseq
      %v2685 = vshrl.u32 %v2684, 7
      %v2686 = vsub.s32 %v2683, %v2685
      %v2687 = vrot.slane %v2679, %v2686
      %v2689 = vunpack.c.l.s4 1934713408
      %v2690 = vunpack.c.0.s8 %v2689
      %v2691 = vlaneseq
      %v2692 = vshrl.u32 %v2691, 7
      %v2693 = vsub.s32 %v2690, %v2692
      %v2694 = vrot.slane %v2680, %v2693
      %v2695 = vcombine.low %v2670, %v2678
      %v2696 = vcombine.high %v2670, %v2678
      %v2698 = vunpack.c.l.s4 1934713408
      %v2699 = vunpack.c.0.s8 %v2698
      %v2700 = vlaneseq
      %v2701 = vshrl.u32 %v2700, 7
      %v2702 = vsub.s32 %v2699, %v2701
      %v2703 = vrot.slane %v2695, %v2702
      %v2705 = vunpack.c.l.s4 1934713408
      %v2706 = vunpack.c.0.s8 %v2705
      %v2707 = vlaneseq
      %v2708 = vshrl.u32 %v2707, 7
      %v2709 = vsub.s32 %v2706, %v2708
      %v2710 = vrot.slane %v2696, %v2709
      %v2711 = vcombine.low %v2687, %v2703
      %v2712 = vcombine.high %v2687, %v2703
      %v2713 = vcombine.low %v2694, %v2710
      %v2714 = vcombine.high %v2694, %v2710
      %2717 = vrot.lane.b32.xlu0 %v2644, 8
      %v2718 = vpop.permute.xlu0 %2717
      %2719 = vrot.lane.b32.xlu0 %v2712, 8
      %v2720 = vpop.permute.xlu0 %2719
      %2725 = vrot.lane.b32.xlu0 %v2645, 16
      %v2726 = vpop.permute.xlu0 %2725
      %2727 = vrot.lane.b32.xlu0 %v2713, 16
      %v2728 = vpop.permute.xlu0 %2727
      %2733 = vrot.lane.b32.xlu0 %v2646, 24
      %v2734 = vpop.permute.xlu0 %2733
      %2735 = vrot.lane.b32.xlu0 %v2714, 24
      %v2736 = vpop.permute.xlu0 %2735
      %v2739 = vsel %vm1609, %v2643, %v2718
      %v2740 = vsel %vm1609, %v2711, %v2720
      %vm2741 = vcmask 130048
      %v2742 = vsel %vm2741, %v2739, %v2726
      %v2743 = vsel %vm2741, %v2740, %v2728
      %vm2744 = vcmask 195584
      %v2745 = vsel %vm2744, %v2742, %v2734
      %v2746 = vsel %vm2744, %v2743, %v2736
      %v2747 = vpack.c.bf16 %v2746, %v2745
      %v2748 = vld [vmem:[%s525] sm:$0xf]
      %v2749 = vld [vmem:[%s525 + $0x4] sm:$0xf]
      %v2750 = vld [vmem:[%s525 + $0x8] sm:$0xf]
      %v2751 = vld [vmem:[%s525 + $0xc] sm:$0xf]
      %v2752 = vld [vmem:[%s528] sm:$0x1]
      %v2754 = vlaneseq
      %v2755 = vshrl.u32 %v2754, 7
      %v2756 = vsub.s32 0, %v2755
      %v2757 = vrot.slane %v2752, %v2756
      %v2763 = vunpack.c.l.b16 %v2748
      %v2764 = vunpack.c.l.b16 %v2749
      %v2765 = vunpack.c.l.b16 %v2750
      %v2766 = vunpack.c.l.b16 %v2751
      %v2767 = vpack.c.b16 %v2764, %v2763
      %v2768 = vpack.c.b16 %v2766, %v2765
      %v2772 = vsel %vm579, %v2747, 0
      %2774 = vmatprep.subr.bf16.mxu0 0
      %2775 = vmatpush1.bf16.msra.mxu0 0
      %2776 = vmatprep.subr.bf16.mxu0 0
      %2777 = vmatpush1.bf16.msra.mxu0 0
      %2778 = vmatprep.subr.bf16.mxu0 0
      %2779 = vmatpush1.bf16.msra.mxu0 0
      %2780 = vmatprep.subr.bf16.mxu0 0
      %2781 = vmatpush1.bf16.msra.mxu0 0
      %2782 = vmatprep.subr.bf16.mxu0 0
      %2783 = vmatpush1.bf16.msra.mxu0 0
      %2784 = vmatprep.subr.bf16.mxu0 0
      %2785 = vmatpush1.bf16.msra.mxu0 0
      %2786 = vmatprep.subr.bf16.mxu0 0
      %2787 = vmatpush1.bf16.msra.mxu0 %v2768
      %2788 = vmatprep.subr.bf16.mxu0 0
      %2789 = vmatpush1.bf16.msra.mxu0 %v2767
      %2790 = vmatprep.subr.bf16.mxu0 0
      %2791 = vmatpush2.bf16.msra.mxu0 0
      %2792 = vmatprep.subr.bf16.mxu0 0
      %2793 = vmatpush2.bf16.msra.mxu0 0
      %2794 = vmatprep.subr.bf16.mxu0 0
      %2795 = vmatpush2.bf16.msra.mxu0 0
      %2796 = vmatprep.subr.bf16.mxu0 0
      %2797 = vmatpush2.bf16.msra.mxu0 0
      %2798 = vmatprep.subr.bf16.mxu0 0
      %2799 = vmatpush2.bf16.msra.mxu0 0
      %2800 = vmatprep.subr.bf16.mxu0 0
      %2801 = vmatpush2.bf16.msra.mxu0 0
      %2802 = vmatprep.subr.bf16.mxu0 0
      %2803 = vmatpush2.bf16.msra.mxu0 0
      %2804 = vmatprep.subr.bf16.mxu0 0
      %2805 = vmatpush2.bf16.msra.mxu0 0
      %2806 = vmatprep.mubr.bf16.mxu0 0
      %2807 = vmatmul.mubr.bf16.gmra.mxu0 %v2772
      %v2808 = vpop.f32.mrf.mxu0
      %v2809 = vadd.f32 %v2757, %v2808
      %v2810 = vpop.f32.mrf.mxu0
      %v2811 = vpop.f32.mrf.mxu0
      %v2812 = vadd.f32 %v2757, %v2811
      %v2813 = vpop.f32.mrf.mxu0
      %2814 = vdwg.mxu0
      %v2815 = vadd.f32 %v575, %v2809
      %v2816 = vadd.f32 %v576, %v2812
      %v2817 = vld [vmem:[%s537] sm:$0x1]
      %v2818 = vld [vmem:[%s540] sm:$0x1]
      %v2819 = vsel %vm579, %v2815, 0.0
      %2820 = vadd.xlane.f32.xlu0 %v2819
      %v2821 = vpop.xlane.xlu0 %2820
      %v2822 = vsel %vm579, %v2816, 0.0
      %2823 = vadd.xlane.f32.xlu0 %v2822
      %v2824 = vpop.xlane.xlu0 %2823
      %v2825 = vmul.f32 %v2821, %v586
      %v2826 = vmul.f32 %v2824, %v586
      %v2827 = vsub.f32 %v2815, %v2825
      %v2828 = vsub.f32 %v2816, %v2826
      %v2829 = vmul.f32 %v2827, %v2827
      %v2830 = vmul.f32 %v2828, %v2828
      %v2831 = vsel %vm579, %v2829, 0.0
      %2832 = vadd.xlane.f32.xlu0 %v2831
      %v2833 = vpop.xlane.xlu0 %2832
      %v2834 = vsel %vm579, %v2830, 0.0
      %2835 = vadd.xlane.f32.xlu0 %v2834
      %v2836 = vpop.xlane.xlu0 %2835
      %v2837 = vmul.f32 %v2833, %v586
      %v2838 = vmul.f32 %v2836, %v586
      %v2839 = vadd.f32 %v2837, 1e-05
      %v2840 = vadd.f32 %v2838, 1e-05
      %v2841 = vrsqrt.pop %v2839
      %v2842 = vrsqrt.pop %v2840
      %v2843 = vmul.f32 %v2827, %v2841
      %v2844 = vmul.f32 %v2828, %v2842
      %v2846 = vlaneseq
      %v2847 = vshrl.u32 %v2846, 7
      %v2848 = vsub.s32 0, %v2847
      %v2849 = vrot.slane %v2817, %v2848
      %v2851 = vmul.f32 %v2849, %v2843
      %v2852 = vmul.f32 %v2849, %v2844
      %v2854 = vlaneseq
      %v2855 = vshrl.u32 %v2854, 7
      %v2856 = vsub.s32 0, %v2855
      %v2857 = vrot.slane %v2818, %v2856
      %v2859 = vadd.f32 %v2851, %v2857
      %v2860 = vadd.f32 %v2852, %v2857
      %v2861 = vpack.c.bf16 %v2860, %v2859
      %v2862 = vld [vmem:[%s545] sm:$0xf]
      %v2863 = vld [vmem:[%s545 + $0x4] sm:$0xf]
      %v2864 = vld [vmem:[%s545 + $0x8] sm:$0xf]
      %v2865 = vld [vmem:[%s545 + $0xc] sm:$0xf]
      %v2866 = vld [vmem:[%s548] sm:$0x1]
      %v2868 = vlaneseq
      %v2869 = vshrl.u32 %v2868, 7
      %v2870 = vsub.s32 0, %v2869
      %v2871 = vrot.slane %v2866, %v2870
      %v2877 = vunpack.c.l.b16 %v2862
      %v2878 = vunpack.c.l.b16 %v2863
      %v2879 = vunpack.c.l.b16 %v2864
      %v2880 = vunpack.c.l.b16 %v2865
      %v2881 = vpack.c.b16 %v2878, %v2877
      %v2882 = vpack.c.b16 %v2880, %v2879
      %v2886 = vsel %vm579, %v2861, 0
      %2888 = vmatprep.subr.bf16.mxu0 0
      %2889 = vmatpush1.bf16.msra.mxu0 0
      %2890 = vmatprep.subr.bf16.mxu0 0
      %2891 = vmatpush1.bf16.msra.mxu0 0
      %2892 = vmatprep.subr.bf16.mxu0 0
      %2893 = vmatpush1.bf16.msra.mxu0 0
      %2894 = vmatprep.subr.bf16.mxu0 0
      %2895 = vmatpush1.bf16.msra.mxu0 0
      %2896 = vmatprep.subr.bf16.mxu0 0
      %2897 = vmatpush1.bf16.msra.mxu0 0
      %2898 = vmatprep.subr.bf16.mxu0 0
      %2899 = vmatpush1.bf16.msra.mxu0 0
      %2900 = vmatprep.subr.bf16.mxu0 0
      %2901 = vmatpush1.bf16.msra.mxu0 %v2882
      %2902 = vmatprep.subr.bf16.mxu0 0
      %2903 = vmatpush1.bf16.msra.mxu0 %v2881
      %2904 = vmatprep.subr.bf16.mxu0 0
      %2905 = vmatpush2.bf16.msra.mxu0 0
      %2906 = vmatprep.subr.bf16.mxu0 0
      %2907 = vmatpush2.bf16.msra.mxu0 0
      %2908 = vmatprep.subr.bf16.mxu0 0
      %2909 = vmatpush2.bf16.msra.mxu0 0
      %2910 = vmatprep.subr.bf16.mxu0 0
      %2911 = vmatpush2.bf16.msra.mxu0 0
      %2912 = vmatprep.subr.bf16.mxu0 0
      %2913 = vmatpush2.bf16.msra.mxu0 0
      %2914 = vmatprep.subr.bf16.mxu0 0
      %2915 = vmatpush2.bf16.msra.mxu0 0
      %2916 = vmatprep.subr.bf16.mxu0 0
      %2917 = vmatpush2.bf16.msra.mxu0 0
      %2918 = vmatprep.subr.bf16.mxu0 0
      %2919 = vmatpush2.bf16.msra.mxu0 0
      %2920 = vmatprep.mubr.bf16.mxu0 0
      %2921 = vmatmul.mubr.bf16.gmra.mxu0 %v2886
      %v2922 = vpop.f32.mrf.mxu0
      %v2923 = vadd.f32 %v2871, %v2922
      %v2924 = vpop.f32.mrf.mxu0
      %v2925 = vpop.f32.mrf.mxu0
      %v2926 = vadd.f32 %v2871, %v2925
      %v2927 = vpop.f32.mrf.mxu0
      %2928 = vdwg.mxu0
      %v2929 = vmul.f32 %v2923, 0.5
      %v2930 = vmul.f32 %v2926, 0.5
      %v2931 = vmul.f32 %v2923, %v2923
      %v2932 = vmul.f32 %v2926, %v2926
      %v2933 = vmul.f32 %v2923, %v2931
      %v2934 = vmul.f32 %v2926, %v2932
      %v2935 = vmul.f32 %v2933, 0.044715
      %v2936 = vmul.f32 %v2934, 0.044715
      %v2937 = vadd.f32 %v2923, %v2935
      %v2938 = vadd.f32 %v2926, %v2936
      %v2939 = vmul.f32 %v2937, 0.7978845
      %v2940 = vmul.f32 %v2938, 0.7978845
      %v2941 = vtanh.pop %v2939
      %v2942 = vtanh.pop %v2940
      %v2943 = vadd.f32 %v2941, 1.0
      %v2944 = vadd.f32 %v2942, 1.0
      %v2945 = vmul.f32 %v2929, %v2943
      %v2946 = vmul.f32 %v2930, %v2944
      %v2947 = vpack.c.bf16 %v2946, %v2945
      %v2948 = vld [vmem:[%s553] sm:$0xf]
      %v2949 = vld [vmem:[%s553 + $0x4] sm:$0xf]
      %v2950 = vld [vmem:[%s553 + $0x8] sm:$0xf]
      %v2951 = vld [vmem:[%s553 + $0xc] sm:$0xf]
      %v2952 = vld [vmem:[%s553 + $0x10] sm:$0xf]
      %v2953 = vld [vmem:[%s553 + $0x14] sm:$0xf]
      %v2954 = vld [vmem:[%s553 + $0x18] sm:$0xf]
      %v2955 = vld [vmem:[%s553 + $0x1c] sm:$0xf]
      %v2956 = vld [vmem:[%s553 + $0x20] sm:$0xf]
      %v2957 = vld [vmem:[%s553 + $0x24] sm:$0xf]
      %v2958 = vld [vmem:[%s553 + $0x28] sm:$0xf]
      %v2959 = vld [vmem:[%s553 + $0x2c] sm:$0xf]
      %v2960 = vld [vmem:[%s553 + $0x30] sm:$0xf]
      %v2961 = vld [vmem:[%s553 + $0x34] sm:$0xf]
      %v2962 = vld [vmem:[%s553 + $0x38] sm:$0xf]
      %v2963 = vld [vmem:[%s553 + $0x3c] sm:$0xf]
      %v2964 = vld [vmem:[%s556] sm:$0x1]
      %v2966 = vlaneseq
      %v2967 = vshrl.u32 %v2966, 7
      %v2968 = vsub.s32 0, %v2967
      %v2969 = vrot.slane %v2964, %v2968
      %v2987 = vunpack.c.l.b16 %v2948
      %v2988 = vunpack.c.l.b16 %v2949
      %v2989 = vunpack.c.l.b16 %v2950
      %v2990 = vunpack.c.l.b16 %v2951
      %v2991 = vunpack.c.l.b16 %v2952
      %v2992 = vunpack.c.l.b16 %v2953
      %v2993 = vunpack.c.l.b16 %v2954
      %v2994 = vunpack.c.l.b16 %v2955
      %v2995 = vunpack.c.l.b16 %v2956
      %v2996 = vunpack.c.l.b16 %v2957
      %v2997 = vunpack.c.l.b16 %v2958
      %v2998 = vunpack.c.l.b16 %v2959
      %v2999 = vunpack.c.l.b16 %v2960
      %v3000 = vunpack.c.l.b16 %v2961
      %v3001 = vunpack.c.l.b16 %v2962
      %v3002 = vunpack.c.l.b16 %v2963
      %v3003 = vpack.c.b16 %v2988, %v2987
      %v3004 = vpack.c.b16 %v2990, %v2989
      %v3005 = vpack.c.b16 %v2992, %v2991
      %v3006 = vpack.c.b16 %v2994, %v2993
      %v3007 = vpack.c.b16 %v2996, %v2995
      %v3008 = vpack.c.b16 %v2998, %v2997
      %v3009 = vpack.c.b16 %v3000, %v2999
      %v3010 = vpack.c.b16 %v3002, %v3001
      %3019 = vmatprep.subr.bf16.mxu0 0
      %3020 = vmatpush1.bf16.msra.mxu0 %v3010
      %3021 = vmatprep.subr.bf16.mxu0 0
      %3022 = vmatpush1.bf16.msra.mxu0 %v3009
      %3023 = vmatprep.subr.bf16.mxu0 0
      %3024 = vmatpush1.bf16.msra.mxu0 %v3008
      %3025 = vmatprep.subr.bf16.mxu0 0
      %3026 = vmatpush1.bf16.msra.mxu0 %v3007
      %3027 = vmatprep.subr.bf16.mxu0 0
      %3028 = vmatpush1.bf16.msra.mxu0 %v3006
      %3029 = vmatprep.subr.bf16.mxu0 0
      %3030 = vmatpush1.bf16.msra.mxu0 %v3005
      %3031 = vmatprep.subr.bf16.mxu0 0
      %3032 = vmatpush1.bf16.msra.mxu0 %v3004
      %3033 = vmatprep.subr.bf16.mxu0 0
      %3034 = vmatpush1.bf16.msra.mxu0 %v3003
      %3035 = vmatprep.subr.bf16.mxu0 0
      %3036 = vmatpush2.bf16.msra.mxu0 0
      %3037 = vmatprep.subr.bf16.mxu0 0
      %3038 = vmatpush2.bf16.msra.mxu0 0
      %3039 = vmatprep.subr.bf16.mxu0 0
      %3040 = vmatpush2.bf16.msra.mxu0 0
      %3041 = vmatprep.subr.bf16.mxu0 0
      %3042 = vmatpush2.bf16.msra.mxu0 0
      %3043 = vmatprep.subr.bf16.mxu0 0
      %3044 = vmatpush2.bf16.msra.mxu0 0
      %3045 = vmatprep.subr.bf16.mxu0 0
      %3046 = vmatpush2.bf16.msra.mxu0 0
      %3047 = vmatprep.subr.bf16.mxu0 0
      %3048 = vmatpush2.bf16.msra.mxu0 0
      %3049 = vmatprep.subr.bf16.mxu0 0
      %3050 = vmatpush2.bf16.msra.mxu0 0
      %3051 = vmatprep.mubr.bf16.mxu0 0
      %3052 = vmatmul.mubr.bf16.gmra.mxu0 %v2947
      %v3053 = vpop.f32.mrf.mxu0
      %v3054 = vadd.f32 %v2969, %v3053
      %v3055 = vpop.f32.mrf.mxu0
      %v3056 = vpop.f32.mrf.mxu0
      %v3057 = vadd.f32 %v2969, %v3056
      %v3058 = vpop.f32.mrf.mxu0
      %3059 = vdwg.mxu0
      %v3060 = vadd.f32 %v2815, %v3054
      %v3061 = vadd.f32 %v2816, %v3057
      %3062 = vst.msk [vmem:[%s12] sm:$0xff] %vm579, %v3060
      %3063 = vst.msk [vmem:[%s12 + $0x8] sm:$0xff] %vm579, %v3061
      // Predicated region
      $region73: #{_lambda_.2} parent=67 // pred_check
        %p3064 = pneg %p343
      $region74: #{_lambda_.2} parent=67 // pred_check_branch
        %3066 = sbr.rel (%p3064) target = $region76
      $region75: #{_lambda_.2} parent=67 // pred_region
        _
      $region76: #{_lambda_.2} parent=67 // pred_fallthru
        _
      // Predicated region
      $region77: #{_lambda_.2} parent=67 // pred_check
        %p3067 = pneg %p343
      $region78: #{_lambda_.2} parent=67 // pred_check_branch
        %3069 = sbr.rel (%p3067) target = $region80
      $region79: #{_lambda_.2} parent=67 // pred_region
        _
      $region80: #{_lambda_.2} parent=67 // pred_fallthru
        _
    $region68: #{_lambda_.2} parent=5 // pred_fallthru
      _
    %p3070 = scmp.le.s32.totalorder 2, %s18
    // Predicated region
    $region81: #{_lambda_.2} parent=5 // pred_check
      %p3071 = pneg %p3070
    $region82: #{_lambda_.2} parent=5 // pred_check_branch
      %3073 = sbr.rel (%p3071) target = $region84
    $region83: #{_lambda_.2} parent=5 // pred_region
      %s3074 = ssub.s32 %s18, 2
    $region84: #{_lambda_.2} parent=5 // pred_fallthru
      _
  $region6: #{_lambda_.2} parent=0 // loop_footer
    %s22 = sadd.s32 1, %s18
  $region7: #{_lambda_.2} parent=0 // loop_footer_branch
    %17 = sbr.rel target = $region3
  $region8: #{_lambda_.2} parent=0 // loop_exit
    _

</llo_original>
